<compile_context>
chip_gen: v7x
topology: tpu7x:2x2x1
jax: 0.10.0
libtpu: 0.0.40
codegen_flags: <defaults>
</compile_context>

<pallas_src>
import jax
import jax.numpy as jnp
import numpy as np
from jax.experimental import pallas as pl
from jax.experimental.pallas import tpu as pltpu

# Small, lane-friendly model dimensions (every feature axis a multiple of 128).
HIDDEN = 128       # hidden_size
OUTPUT = 128       # output_size (vocab)
MAX_LENGTH = 128   # max_length (encoder sequence length)
T_STEPS = 8        # number of fused decode steps (teacher-forced token stream)


def fused_decoder_kernel(
    onehot_ref,                       # (T, V)   bf16  one-hot token rows
    emb_tab_ref,                      # (V, H)   bf16  embedding table
    hid0_ref,                         # (1, H)   f32   initial hidden
    enc_ref,                          # (L, H)   bf16  encoder outputs
    w_emb_ref,                        # (H, L+H) bf16  [w_attn_e | w_comb_e]
    b_emb_ref,                        # (1, L+H) f32   [b_attn   | b_comb  ]
    w_hid_ref,                        # (H, L+3H) bf16 [w_attn_h | w_hr | w_hz | w_hn]
    w_comb_a_ref,                     # (H, H)   bf16
    w_x_ref,                          # (H, 3H)  bf16  [w_ir | w_iz | w_in]
    b_rz_ref,                         # (1, 2H)  f32   [b_ir+b_hr | b_iz+b_hz]
    b_in_ref,                         # (1, H)   f32
    b_hn_ref,                         # (1, H)   f32
    w_out_ref,                        # (H, V)   bf16
    b_out_ref,                        # (1, V)   f32
    logp_ref,                         # (T, V)   f32   out
    hid_ref,                          # (1, H)   f32   out
    attnw_ref,                        # (T, L)   f32   out
    h_sc,                             # (T, H)   f32   VMEM scratch (hidden rows)
):
    H, L = HIDDEN, MAX_LENGTH
    T = onehot_ref.shape[0]
    bf16, f32 = jnp.bfloat16, jnp.float32

    # ---- prologue: token-dependent, hidden-independent work, batched over T ----
    # Embedding gather as a one-hot matmul (exactly selects bf16 table rows).
    # TODO(synk): nn.Dropout(p=0.1) omitted (inference / eval semantics => identity).
    E = jnp.dot(onehot_ref[...], emb_tab_ref[...],
                preferred_element_type=f32)                                       # (T, H)
    # emb @ [w_attn_e | w_comb_e] with both biases folded in: one (T,H)x(H,L+H).
    emb_pre = (jnp.dot(E.astype(bf16), w_emb_ref[...], preferred_element_type=f32)
               + b_emb_ref[...])                                                  # (T, L+H)

    enc = enc_ref[...]
    w_hid = w_hid_ref[...]
    w_comb_a = w_comb_a_ref[...]
    w_x = w_x_ref[...]
    b_rz = b_rz_ref[...]
    b_in = b_in_ref[...]
    b_hn = b_hn_ref[...]

    # ---- T-step recurrence, fully unrolled (T is small and static) ----
    h = hid0_ref[...]                                                             # (1, H) f32
    for t in range(T):
        # hid @ [w_attn_h | w_hr | w_hz | w_hn]: one matmul, 128-lane-aligned slices.
        hid_pre = jnp.dot(h.astype(bf16), w_hid, preferred_element_type=f32)      # (1, L+3H)

        # attention softmax (exact divide: the result feeds the recurrent state).
        attn_logits = emb_pre[t:t + 1, :L] + hid_pre[:, :L]                       # (1, L)
        m = jnp.max(attn_logits, axis=1, keepdims=True)
        e = jnp.exp(attn_logits - m)
        attn_w = e / jnp.sum(e, axis=1, keepdims=True)
        attnw_ref[pl.ds(t, 1), :] = attn_w

        attn_applied = jnp.dot(attn_w.astype(bf16), enc,
                               preferred_element_type=f32)                        # (1, H)

        # attn_combine + ReLU (emb-side term precomputed in emb_pre[:, L:]).
        x = emb_pre[t:t + 1, L:] + jnp.dot(attn_applied.astype(bf16), w_comb_a,
                                           preferred_element_type=f32)
        x = jnp.maximum(x, 0.0)                                                   # (1, H)

        # Single-step GRU: fused input-gate matmul, one sigmoid over [r|z] slab.
        x_pre = jnp.dot(x.astype(bf16), w_x, preferred_element_type=f32)          # (1, 3H)
        rz = jax.nn.sigmoid(x_pre[:, :2 * H] + hid_pre[:, L:L + 2 * H] + b_rz)    # (1, 2H)
        r, z = rz[:, :H], rz[:, H:]
        n = jnp.tanh(x_pre[:, 2 * H:] + b_in + r * (hid_pre[:, L + 2 * H:] + b_hn))
        h = (1.0 - z) * n + z * h                                                 # (1, H)
        h_sc[pl.ds(t, 1), :] = h

    hid_ref[...] = h

    # ---- epilogue: output projection + log_softmax for all T rows at once ----
    h_all = h_sc[...]                                                             # (T, H)
    logits = (jnp.dot(h_all.astype(bf16), w_out_ref[...], preferred_element_type=f32)
              + b_out_ref[...])                                                   # (T, V)
    mo = jnp.max(logits, axis=1, keepdims=True)
    lse = jnp.log(jnp.sum(jnp.exp(logits - mo), axis=1, keepdims=True)) + mo
    logp_ref[...] = logits - lse


def attn_decoder_decode(params, tokens, hidden0, encoder_outputs):
    """Runs T teacher-forced decode steps of AttnDecoderRNN2.forward (eval mode).

    tokens:          (T,) int32 token ids
    hidden0:         (1, 1, H) float32 initial GRU hidden
    encoder_outputs: (MAX_LENGTH, H) float32
    returns (log_probs (T, OUTPUT), final hidden (1, 1, H), attn_weights (T, MAX_LENGTH))
    """
    H, L, V = HIDDEN, MAX_LENGTH, OUTPUT
    T = int(tokens.shape[0])
    f32, bf16 = jnp.float32, jnp.bfloat16

    onehot = jax.nn.one_hot(tokens, V, dtype=bf16)                    # (T, V)
    emb_tab = params["embedding"].astype(bf16)                        # (V, H)
    hid0 = hidden0.reshape(1, H).astype(f32)
    enc = encoder_outputs.astype(bf16)                                # (L, H)

    # Split the concatenated weights and re-fuse along the output (lane) axis.
    w_attn_e, w_attn_h = params["w_attn"][:H], params["w_attn"][H:]
    w_comb_e, w_comb_a = params["w_comb"][:H], params["w_comb"][H:]
    w_ih, w_hh = params["w_ih"], params["w_hh"]                       # (H, 3H) each
    b_ih, b_hh = params["b_ih"], params["b_hh"]                       # (1, 3H) each

    w_emb = jnp.concatenate([w_attn_e, w_comb_e], axis=1).astype(bf16)          # (H, L+H)
    b_emb = jnp.concatenate([params["b_attn"], params["b_comb"]], axis=1).astype(f32)
    w_hid = jnp.concatenate([w_attn_h, w_hh], axis=1).astype(bf16)              # (H, L+3H)
    w_comb_a_b = w_comb_a.astype(bf16)                                          # (H, H)
    w_x = w_ih.astype(bf16)                                                     # (H, 3H)
    b_rz = (b_ih[:, :2 * H] + b_hh[:, :2 * H]).astype(f32)                      # (1, 2H)
    b_in = b_ih[:, 2 * H:].astype(f32)
    b_hn = b_hh[:, 2 * H:].astype(f32)
    w_out = params["w_out"].astype(bf16)
    b_out = params["b_out"].astype(f32)

    vmem = pl.BlockSpec(memory_space=pltpu.MemorySpace.VMEM)

    # No grid: every operand is DMA'd HBM->VMEM exactly once and the T-step
    # recurrence runs entirely on-chip.
    # TODO(synk): for batch/beam > 1, add a leading "parallel" grid axis (or a
    # core_map over the 2-TC mesh) so v7x's second TensorCore gets work.
    logp, hid_final, attn_w = pl.pallas_call(
        fused_decoder_kernel,
        out_shape=(
            jax.ShapeDtypeStruct((T, V), f32),
            jax.ShapeDtypeStruct((1, H), f32),
            jax.ShapeDtypeStruct((T, L), f32),
        ),
        in_specs=[vmem] * 14,
        out_specs=(vmem, vmem, vmem),
        scratch_shapes=[pltpu.VMEM((T, H), jnp.float32)],
    )(onehot, emb_tab, hid0, enc,
      w_emb, b_emb, w_hid, w_comb_a_b, w_x,
      b_rz, b_in, b_hn, w_out, b_out)

    return logp, hid_final.reshape(1, 1, H), attn_w


# ----------------------------- pure-JAX reference -----------------------------
# The reference follows the PyTorch concatenation-based formulation (different
# structure from the kernel), but mirrors the kernel's precision policy
# (bf16-stored weights, bf16 matmul inputs, f32 accumulation / elementwise) so
# the comparison only sees accumulation-order / transcendental differences.

def reference_decode(params, tokens, hidden0, enc):
    H = HIDDEN
    bf = lambda a: a.astype(jnp.bfloat16).astype(jnp.float32)

    emb_tab = bf(params["embedding"])
    enc_b = bf(enc)
    w_attn, b_attn = bf(params["w_attn"]), params["b_attn"]
    w_comb, b_comb = bf(params["w_comb"]), params["b_comb"]
    w_ih, b_ih = bf(params["w_ih"]), params["b_ih"]
    w_hh, b_hh = bf(params["w_hh"]), params["b_hh"]
    w_out, b_out = bf(params["w_out"]), params["b_out"]

    hid = hidden0.reshape(1, H).astype(jnp.float32)
    logps, attws = [], []
    for t in range(int(tokens.shape[0])):
        tok = int(tokens[t])
        emb = emb_tab[tok].reshape(1, H)
        cat1 = bf(jnp.concatenate([emb, hid], axis=1))
        attn_w = jax.nn.softmax(cat1 @ w_attn + b_attn, axis=1)
        attn_applied = bf(attn_w) @ enc_b
        cat2 = bf(jnp.concatenate([emb, attn_applied], axis=1))
        x = jnp.maximum(cat2 @ w_comb + b_comb, 0.0)
        gi = bf(x) @ w_ih + b_ih
        gh = bf(hid) @ w_hh + b_hh
        i_r, i_z, i_n = gi[:, :H], gi[:, H:2 * H], gi[:, 2 * H:]
        h_r, h_z, h_n = gh[:, :H], gh[:, H:2 * H], gh[:, 2 * H:]
        r = jax.nn.sigmoid(i_r + h_r)
        z = jax.nn.sigmoid(i_z + h_z)
        n = jnp.tanh(i_n + r * h_n)
        hid = (1.0 - z) * n + z * hid
        logits = bf(hid) @ w_out + b_out
        logps.append(jax.nn.log_softmax(logits, axis=1))
        attws.append(attn_w)
    return (jnp.concatenate(logps, axis=0),
            hid.reshape(1, 1, H),
            jnp.concatenate(attws, axis=0))


def init_params(key):
    H = HIDDEN
    ks = jax.random.split(key, 6)

    def lin(k, fan_in, fan_out):
        bound = 1.0 / np.sqrt(fan_in)
        kw, kb = jax.random.split(k)
        w = jax.random.uniform(kw, (fan_in, fan_out), jnp.float32, -bound, bound)
        b = jax.random.uniform(kb, (1, fan_out), jnp.float32, -bound, bound)
        return w, b

    params = {}
    params["embedding"] = jax.random.normal(ks[0], (OUTPUT, H), jnp.float32)
    params["w_attn"], params["b_attn"] = lin(ks[1], 2 * H, MAX_LENGTH)
    params["w_comb"], params["b_comb"] = lin(ks[2], 2 * H, H)
    params["w_ih"], params["b_ih"] = lin(ks[3], H, 3 * H)
    params["w_hh"], params["b_hh"] = lin(ks[4], H, 3 * H)
    params["w_out"], params["b_out"] = lin(ks[5], H, OUTPUT)
    return params


if __name__ == "__main__":
    key = jax.random.PRNGKey(0)
    k_params, k_hid, k_enc, k_tok = jax.random.split(key, 4)

    params = init_params(k_params)
    tokens = jax.random.randint(k_tok, (T_STEPS,), 0, OUTPUT, dtype=jnp.int32)
    hidden0 = jax.random.normal(k_hid, (1, 1, HIDDEN), jnp.float32)
    encoder_outputs = jax.random.normal(k_enc, (MAX_LENGTH, HIDDEN), jnp.float32)

    logp, hid_f, attn_w = attn_decoder_decode(params, tokens, hidden0, encoder_outputs)
    jax.block_until_ready((logp, hid_f, attn_w))

    logp_r, hid_r, attn_r = reference_decode(params, tokens, hidden0, encoder_outputs)
    np.testing.assert_allclose(np.asarray(logp), np.asarray(logp_r), rtol=2e-3, atol=2e-3)
    np.testing.assert_allclose(np.asarray(hid_f), np.asarray(hid_r), rtol=2e-3, atol=2e-3)
    np.testing.assert_allclose(np.asarray(attn_w), np.asarray(attn_r), rtol=2e-3, atol=2e-3)

    print("KERNEL_OK")
</pallas_src>

<mosaic_0001>
module attributes {stable_mosaic.version = 11 : i64} {
  func.func @fused_decoder_kernel(%arg0: memref<8x128xbf16, #tpu.memory_space<vmem>>, %arg1: memref<128x128xbf16, #tpu.memory_space<vmem>>, %arg2: memref<1x128xf32, #tpu.memory_space<vmem>>, %arg3: memref<128x128xbf16, #tpu.memory_space<vmem>>, %arg4: memref<128x256xbf16, #tpu.memory_space<vmem>>, %arg5: memref<1x256xf32, #tpu.memory_space<vmem>>, %arg6: memref<128x512xbf16, #tpu.memory_space<vmem>>, %arg7: memref<128x128xbf16, #tpu.memory_space<vmem>>, %arg8: memref<128x384xbf16, #tpu.memory_space<vmem>>, %arg9: memref<1x256xf32, #tpu.memory_space<vmem>>, %arg10: memref<1x128xf32, #tpu.memory_space<vmem>>, %arg11: memref<1x128xf32, #tpu.memory_space<vmem>>, %arg12: memref<128x128xbf16, #tpu.memory_space<vmem>>, %arg13: memref<1x128xf32, #tpu.memory_space<vmem>>, %arg14: memref<8x128xf32, #tpu.memory_space<vmem>>, %arg15: memref<1x128xf32, #tpu.memory_space<vmem>>, %arg16: memref<8x128xf32, #tpu.memory_space<vmem>>, %arg17: memref<8x128xf32, #tpu.memory_space<vmem>>) attributes {dimension_semantics = [], scalar_prefetch = 0 : i64, scratch_operands = 1 : i64, tpu.core_type = #tpu.core_type<tc>} {
    %c0 = arith.constant 0 : index
    %c0_0 = arith.constant 0 : index
    %0 = vector.load %arg0[%c0, %c0_0] : memref<8x128xbf16, #tpu.memory_space<vmem>>, vector<8x128xbf16>
    %c0_1 = arith.constant 0 : index
    %c0_2 = arith.constant 0 : index
    %1 = vector.load %arg1[%c0_1, %c0_2] : memref<128x128xbf16, #tpu.memory_space<vmem>>, vector<128x128xbf16>
    %cst = arith.constant dense<0.000000e+00> : vector<8x128xf32>
    %2 = tpu.matmul %0, %1, %cst {dimension_numbers = #tpu.dot_dimension_numbers<[1], [0], [0], [1], [0, 0, 1, 1], [], []>} : vector<8x128xbf16>, vector<128x128xbf16>, vector<8x128xf32> -> vector<8x128xf32>
    %3 = arith.truncf %2 : vector<8x128xf32> to vector<8x128xbf16>
    %c0_3 = arith.constant 0 : index
    %c0_4 = arith.constant 0 : index
    %4 = vector.load %arg4[%c0_3, %c0_4] : memref<128x256xbf16, #tpu.memory_space<vmem>>, vector<128x256xbf16>
    %cst_5 = arith.constant dense<0.000000e+00> : vector<8x256xf32>
    %5 = tpu.matmul %3, %4, %cst_5 {dimension_numbers = #tpu.dot_dimension_numbers<[1], [0], [0], [1], [0, 0, 1, 1], [], []>} : vector<8x128xbf16>, vector<128x256xbf16>, vector<8x256xf32> -> vector<8x256xf32>
    %c0_6 = arith.constant 0 : index
    %c0_7 = arith.constant 0 : index
    %6 = vector.load %arg5[%c0_6, %c0_7] : memref<1x256xf32, #tpu.memory_space<vmem>>, vector<1x256xf32>
    %7 = vector.broadcast %6 : vector<1x256xf32> to vector<8x256xf32>
    %8 = arith.addf %5, %7 : vector<8x256xf32>
    %c0_8 = arith.constant 0 : index
    %c0_9 = arith.constant 0 : index
    %9 = vector.load %arg3[%c0_8, %c0_9] : memref<128x128xbf16, #tpu.memory_space<vmem>>, vector<128x128xbf16>
    %c0_10 = arith.constant 0 : index
    %c0_11 = arith.constant 0 : index
    %10 = vector.load %arg6[%c0_10, %c0_11] : memref<128x512xbf16, #tpu.memory_space<vmem>>, vector<128x512xbf16>
    %c0_12 = arith.constant 0 : index
    %c0_13 = arith.constant 0 : index
    %11 = vector.load %arg7[%c0_12, %c0_13] : memref<128x128xbf16, #tpu.memory_space<vmem>>, vector<128x128xbf16>
    %c0_14 = arith.constant 0 : index
    %c0_15 = arith.constant 0 : index
    %12 = vector.load %arg8[%c0_14, %c0_15] : memref<128x384xbf16, #tpu.memory_space<vmem>>, vector<128x384xbf16>
    %c0_16 = arith.constant 0 : index
    %c0_17 = arith.constant 0 : index
    %13 = vector.load %arg9[%c0_16, %c0_17] : memref<1x256xf32, #tpu.memory_space<vmem>>, vector<1x256xf32>
    %c0_18 = arith.constant 0 : index
    %c0_19 = arith.constant 0 : index
    %14 = vector.load %arg10[%c0_18, %c0_19] : memref<1x128xf32, #tpu.memory_space<vmem>>, vector<1x128xf32>
    %c0_20 = arith.constant 0 : index
    %c0_21 = arith.constant 0 : index
    %15 = vector.load %arg11[%c0_20, %c0_21] : memref<1x128xf32, #tpu.memory_space<vmem>>, vector<1x128xf32>
    %c0_22 = arith.constant 0 : index
    %c0_23 = arith.constant 0 : index
    %16 = vector.load %arg2[%c0_22, %c0_23] : memref<1x128xf32, #tpu.memory_space<vmem>>, vector<1x128xf32>
    %17 = arith.truncf %16 : vector<1x128xf32> to vector<1x128xbf16>
    %cst_24 = arith.constant dense<0.000000e+00> : vector<1x512xf32>
    %18 = tpu.matmul %17, %10, %cst_24 {dimension_numbers = #tpu.dot_dimension_numbers<[1], [0], [0], [1], [0, 0, 1, 1], [], []>} : vector<1x128xbf16>, vector<128x512xbf16>, vector<1x512xf32> -> vector<1x512xf32>
    %19 = vector.extract_strided_slice %8 {offsets = [0, 0], sizes = [1, 128], strides = [1, 1]} : vector<8x256xf32> to vector<1x128xf32>
    %20 = vector.extract_strided_slice %18 {offsets = [0, 0], sizes = [1, 128], strides = [1, 1]} : vector<1x512xf32> to vector<1x128xf32>
    %21 = arith.addf %19, %20 : vector<1x128xf32>
    %cst_25 = arith.constant dense<0xFF800000> : vector<1xf32>
    %22 = vector.multi_reduction <maximumf>, %21, %cst_25 [1] : vector<1x128xf32> to vector<1xf32>
    %23 = vector.shape_cast %22 : vector<1xf32> to vector<1x1xf32>
    %24 = vector.broadcast %23 : vector<1x1xf32> to vector<1x128xf32>
    %25 = arith.subf %21, %24 : vector<1x128xf32>
    %26 = math.exp %25 : vector<1x128xf32>
    %cst_26 = arith.constant dense<0.000000e+00> : vector<1xf32>
    %27 = vector.multi_reduction <add>, %26, %cst_26 [1] : vector<1x128xf32> to vector<1xf32>
    %28 = vector.shape_cast %27 : vector<1xf32> to vector<1x1xf32>
    %29 = vector.broadcast %28 : vector<1x1xf32> to vector<1x128xf32>
    %30 = arith.divf %26, %29 : vector<1x128xf32>
    %c0_27 = arith.constant 0 : index
    %c0_28 = arith.constant 0 : index
    %31 = vector.load %arg16[%c0_27, %c0_28] : memref<8x128xf32, #tpu.memory_space<vmem>>, vector<1x128xf32>
    tpu.vector_store %arg16[%c0_27, %c0_28], %30 {strides = array<i32>} : memref<8x128xf32, #tpu.memory_space<vmem>>, vector<1x128xf32>,
    %32 = arith.truncf %30 : vector<1x128xf32> to vector<1x128xbf16>
    %cst_29 = arith.constant dense<0.000000e+00> : vector<1x128xf32>
    %33 = tpu.matmul %32, %9, %cst_29 {dimension_numbers = #tpu.dot_dimension_numbers<[1], [0], [0], [1], [0, 0, 1, 1], [], []>} : vector<1x128xbf16>, vector<128x128xbf16>, vector<1x128xf32> -> vector<1x128xf32>
    %34 = vector.extract_strided_slice %8 {offsets = [0, 128], sizes = [1, 128], strides = [1, 1]} : vector<8x256xf32> to vector<1x128xf32>
    %35 = arith.truncf %33 : vector<1x128xf32> to vector<1x128xbf16>
    %cst_30 = arith.constant dense<0.000000e+00> : vector<1x128xf32>
    %36 = tpu.matmul %35, %11, %cst_30 {dimension_numbers = #tpu.dot_dimension_numbers<[1], [0], [0], [1], [0, 0, 1, 1], [], []>} : vector<1x128xbf16>, vector<128x128xbf16>, vector<1x128xf32> -> vector<1x128xf32>
    %37 = arith.addf %34, %36 : vector<1x128xf32>
    %cst_31 = arith.constant 0.000000e+00 : f32
    %38 = vector.broadcast %cst_31 : f32 to vector<1x128xf32>
    %39 = arith.maximumf %37, %38 : vector<1x128xf32>
    %40 = arith.truncf %39 : vector<1x128xf32> to vector<1x128xbf16>
    %cst_32 = arith.constant dense<0.000000e+00> : vector<1x384xf32>
    %41 = tpu.matmul %40, %12, %cst_32 {dimension_numbers = #tpu.dot_dimension_numbers<[1], [0], [0], [1], [0, 0, 1, 1], [], []>} : vector<1x128xbf16>, vector<128x384xbf16>, vector<1x384xf32> -> vector<1x384xf32>
    %42 = vector.extract_strided_slice %41 {offsets = [0, 0], sizes = [1, 256], strides = [1, 1]} : vector<1x384xf32> to vector<1x256xf32>
    %43 = vector.extract_strided_slice %18 {offsets = [0, 128], sizes = [1, 256], strides = [1, 1]} : vector<1x512xf32> to vector<1x256xf32>
    %44 = arith.addf %42, %43 : vector<1x256xf32>
    %45 = arith.addf %44, %13 : vector<1x256xf32>
    %46 = arith.negf %45 : vector<1x256xf32>
    %47 = math.exp %46 : vector<1x256xf32>
    %cst_33 = arith.constant 1.000000e+00 : f32
    %48 = vector.broadcast %cst_33 : f32 to vector<1x256xf32>
    %49 = arith.addf %48, %47 : vector<1x256xf32>
    %50 = arith.divf %48, %49 : vector<1x256xf32>
    %51 = vector.extract_strided_slice %50 {offsets = [0, 0], sizes = [1, 128], strides = [1, 1]} : vector<1x256xf32> to vector<1x128xf32>
    %52 = vector.extract_strided_slice %50 {offsets = [0, 128], sizes = [1, 128], strides = [1, 1]} : vector<1x256xf32> to vector<1x128xf32>
    %53 = vector.extract_strided_slice %41 {offsets = [0, 256], sizes = [1, 128], strides = [1, 1]} : vector<1x384xf32> to vector<1x128xf32>
    %54 = arith.addf %53, %14 : vector<1x128xf32>
    %55 = vector.extract_strided_slice %18 {offsets = [0, 384], sizes = [1, 128], strides = [1, 1]} : vector<1x512xf32> to vector<1x128xf32>
    %56 = arith.addf %55, %15 : vector<1x128xf32>
    %57 = arith.mulf %51, %56 : vector<1x128xf32>
    %58 = arith.addf %54, %57 : vector<1x128xf32>
    %59 = math.tanh %58 : vector<1x128xf32>
    %cst_34 = arith.constant 1.000000e+00 : f32
    %60 = vector.broadcast %cst_34 : f32 to vector<1x128xf32>
    %61 = arith.subf %60, %52 : vector<1x128xf32>
    %62 = arith.mulf %61, %59 : vector<1x128xf32>
    %63 = arith.mulf %52, %16 : vector<1x128xf32>
    %64 = arith.addf %62, %63 : vector<1x128xf32>
    %c0_35 = arith.constant 0 : index
    %c0_36 = arith.constant 0 : index
    %65 = vector.load %arg17[%c0_35, %c0_36] : memref<8x128xf32, #tpu.memory_space<vmem>>, vector<1x128xf32>
    tpu.vector_store %arg17[%c0_35, %c0_36], %64 {strides = array<i32>} : memref<8x128xf32, #tpu.memory_space<vmem>>, vector<1x128xf32>,
    %66 = arith.truncf %64 : vector<1x128xf32> to vector<1x128xbf16>
    %cst_37 = arith.constant dense<0.000000e+00> : vector<1x512xf32>
    %67 = tpu.matmul %66, %10, %cst_37 {dimension_numbers = #tpu.dot_dimension_numbers<[1], [0], [0], [1], [0, 0, 1, 1], [], []>} : vector<1x128xbf16>, vector<128x512xbf16>, vector<1x512xf32> -> vector<1x512xf32>
    %68 = vector.extract_strided_slice %8 {offsets = [1, 0], sizes = [1, 128], strides = [1, 1]} : vector<8x256xf32> to vector<1x128xf32>
    %69 = vector.extract_strided_slice %67 {offsets = [0, 0], sizes = [1, 128], strides = [1, 1]} : vector<1x512xf32> to vector<1x128xf32>
    %70 = arith.addf %68, %69 : vector<1x128xf32>
    %cst_38 = arith.constant dense<0xFF800000> : vector<1xf32>
    %71 = vector.multi_reduction <maximumf>, %70, %cst_38 [1] : vector<1x128xf32> to vector<1xf32>
    %72 = vector.shape_cast %71 : vector<1xf32> to vector<1x1xf32>
    %73 = vector.broadcast %72 : vector<1x1xf32> to vector<1x128xf32>
    %74 = arith.subf %70, %73 : vector<1x128xf32>
    %75 = math.exp %74 : vector<1x128xf32>
    %cst_39 = arith.constant dense<0.000000e+00> : vector<1xf32>
    %76 = vector.multi_reduction <add>, %75, %cst_39 [1] : vector<1x128xf32> to vector<1xf32>
    %77 = vector.shape_cast %76 : vector<1xf32> to vector<1x1xf32>
    %78 = vector.broadcast %77 : vector<1x1xf32> to vector<1x128xf32>
    %79 = arith.divf %75, %78 : vector<1x128xf32>
    %c1 = arith.constant 1 : index
    %c0_40 = arith.constant 0 : index
    %80 = vector.load %arg16[%c1, %c0_40] : memref<8x128xf32, #tpu.memory_space<vmem>>, vector<1x128xf32>
    tpu.vector_store %arg16[%c1, %c0_40], %79 {strides = array<i32>} : memref<8x128xf32, #tpu.memory_space<vmem>>, vector<1x128xf32>,
    %81 = arith.truncf %79 : vector<1x128xf32> to vector<1x128xbf16>
    %cst_41 = arith.constant dense<0.000000e+00> : vector<1x128xf32>
    %82 = tpu.matmul %81, %9, %cst_41 {dimension_numbers = #tpu.dot_dimension_numbers<[1], [0], [0], [1], [0, 0, 1, 1], [], []>} : vector<1x128xbf16>, vector<128x128xbf16>, vector<1x128xf32> -> vector<1x128xf32>
    %83 = vector.extract_strided_slice %8 {offsets = [1, 128], sizes = [1, 128], strides = [1, 1]} : vector<8x256xf32> to vector<1x128xf32>
    %84 = arith.truncf %82 : vector<1x128xf32> to vector<1x128xbf16>
    %cst_42 = arith.constant dense<0.000000e+00> : vector<1x128xf32>
    %85 = tpu.matmul %84, %11, %cst_42 {dimension_numbers = #tpu.dot_dimension_numbers<[1], [0], [0], [1], [0, 0, 1, 1], [], []>} : vector<1x128xbf16>, vector<128x128xbf16>, vector<1x128xf32> -> vector<1x128xf32>
    %86 = arith.addf %83, %85 : vector<1x128xf32>
    %cst_43 = arith.constant 0.000000e+00 : f32
    %87 = vector.broadcast %cst_43 : f32 to vector<1x128xf32>
    %88 = arith.maximumf %86, %87 : vector<1x128xf32>
    %89 = arith.truncf %88 : vector<1x128xf32> to vector<1x128xbf16>
    %cst_44 = arith.constant dense<0.000000e+00> : vector<1x384xf32>
    %90 = tpu.matmul %89, %12, %cst_44 {dimension_numbers = #tpu.dot_dimension_numbers<[1], [0], [0], [1], [0, 0, 1, 1], [], []>} : vector<1x128xbf16>, vector<128x384xbf16>, vector<1x384xf32> -> vector<1x384xf32>
    %91 = vector.extract_strided_slice %90 {offsets = [0, 0], sizes = [1, 256], strides = [1, 1]} : vector<1x384xf32> to vector<1x256xf32>
    %92 = vector.extract_strided_slice %67 {offsets = [0, 128], sizes = [1, 256], strides = [1, 1]} : vector<1x512xf32> to vector<1x256xf32>
    %93 = arith.addf %91, %92 : vector<1x256xf32>
    %94 = arith.addf %93, %13 : vector<1x256xf32>
    %95 = arith.negf %94 : vector<1x256xf32>
    %96 = math.exp %95 : vector<1x256xf32>
    %cst_45 = arith.constant 1.000000e+00 : f32
    %97 = vector.broadcast %cst_45 : f32 to vector<1x256xf32>
    %98 = arith.addf %97, %96 : vector<1x256xf32>
    %99 = arith.divf %97, %98 : vector<1x256xf32>
    %100 = vector.extract_strided_slice %99 {offsets = [0, 0], sizes = [1, 128], strides = [1, 1]} : vector<1x256xf32> to vector<1x128xf32>
    %101 = vector.extract_strided_slice %99 {offsets = [0, 128], sizes = [1, 128], strides = [1, 1]} : vector<1x256xf32> to vector<1x128xf32>
    %102 = vector.extract_strided_slice %90 {offsets = [0, 256], sizes = [1, 128], strides = [1, 1]} : vector<1x384xf32> to vector<1x128xf32>
    %103 = arith.addf %102, %14 : vector<1x128xf32>
    %104 = vector.extract_strided_slice %67 {offsets = [0, 384], sizes = [1, 128], strides = [1, 1]} : vector<1x512xf32> to vector<1x128xf32>
    %105 = arith.addf %104, %15 : vector<1x128xf32>
    %106 = arith.mulf %100, %105 : vector<1x128xf32>
    %107 = arith.addf %103, %106 : vector<1x128xf32>
    %108 = math.tanh %107 : vector<1x128xf32>
    %cst_46 = arith.constant 1.000000e+00 : f32
    %109 = vector.broadcast %cst_46 : f32 to vector<1x128xf32>
    %110 = arith.subf %109, %101 : vector<1x128xf32>
    %111 = arith.mulf %110, %108 : vector<1x128xf32>
    %112 = arith.mulf %101, %64 : vector<1x128xf32>
    %113 = arith.addf %111, %112 : vector<1x128xf32>
    %c1_47 = arith.constant 1 : index
    %c0_48 = arith.constant 0 : index
    %114 = vector.load %arg17[%c1_47, %c0_48] : memref<8x128xf32, #tpu.memory_space<vmem>>, vector<1x128xf32>
    tpu.vector_store %arg17[%c1_47, %c0_48], %113 {strides = array<i32>} : memref<8x128xf32, #tpu.memory_space<vmem>>, vector<1x128xf32>,
    %115 = arith.truncf %113 : vector<1x128xf32> to vector<1x128xbf16>
    %cst_49 = arith.constant dense<0.000000e+00> : vector<1x512xf32>
    %116 = tpu.matmul %115, %10, %cst_49 {dimension_numbers = #tpu.dot_dimension_numbers<[1], [0], [0], [1], [0, 0, 1, 1], [], []>} : vector<1x128xbf16>, vector<128x512xbf16>, vector<1x512xf32> -> vector<1x512xf32>
    %117 = vector.extract_strided_slice %8 {offsets = [2, 0], sizes = [1, 128], strides = [1, 1]} : vector<8x256xf32> to vector<1x128xf32>
    %118 = vector.extract_strided_slice %116 {offsets = [0, 0], sizes = [1, 128], strides = [1, 1]} : vector<1x512xf32> to vector<1x128xf32>
    %119 = arith.addf %117, %118 : vector<1x128xf32>
    %cst_50 = arith.constant dense<0xFF800000> : vector<1xf32>
    %120 = vector.multi_reduction <maximumf>, %119, %cst_50 [1] : vector<1x128xf32> to vector<1xf32>
    %121 = vector.shape_cast %120 : vector<1xf32> to vector<1x1xf32>
    %122 = vector.broadcast %121 : vector<1x1xf32> to vector<1x128xf32>
    %123 = arith.subf %119, %122 : vector<1x128xf32>
    %124 = math.exp %123 : vector<1x128xf32>
    %cst_51 = arith.constant dense<0.000000e+00> : vector<1xf32>
    %125 = vector.multi_reduction <add>, %124, %cst_51 [1] : vector<1x128xf32> to vector<1xf32>
    %126 = vector.shape_cast %125 : vector<1xf32> to vector<1x1xf32>
    %127 = vector.broadcast %126 : vector<1x1xf32> to vector<1x128xf32>
    %128 = arith.divf %124, %127 : vector<1x128xf32>
    %c2 = arith.constant 2 : index
    %c0_52 = arith.constant 0 : index
    %129 = vector.load %arg16[%c2, %c0_52] : memref<8x128xf32, #tpu.memory_space<vmem>>, vector<1x128xf32>
    tpu.vector_store %arg16[%c2, %c0_52], %128 {strides = array<i32>} : memref<8x128xf32, #tpu.memory_space<vmem>>, vector<1x128xf32>,
    %130 = arith.truncf %128 : vector<1x128xf32> to vector<1x128xbf16>
    %cst_53 = arith.constant dense<0.000000e+00> : vector<1x128xf32>
    %131 = tpu.matmul %130, %9, %cst_53 {dimension_numbers = #tpu.dot_dimension_numbers<[1], [0], [0], [1], [0, 0, 1, 1], [], []>} : vector<1x128xbf16>, vector<128x128xbf16>, vector<1x128xf32> -> vector<1x128xf32>
    %132 = vector.extract_strided_slice %8 {offsets = [2, 128], sizes = [1, 128], strides = [1, 1]} : vector<8x256xf32> to vector<1x128xf32>
    %133 = arith.truncf %131 : vector<1x128xf32> to vector<1x128xbf16>
    %cst_54 = arith.constant dense<0.000000e+00> : vector<1x128xf32>
    %134 = tpu.matmul %133, %11, %cst_54 {dimension_numbers = #tpu.dot_dimension_numbers<[1], [0], [0], [1], [0, 0, 1, 1], [], []>} : vector<1x128xbf16>, vector<128x128xbf16>, vector<1x128xf32> -> vector<1x128xf32>
    %135 = arith.addf %132, %134 : vector<1x128xf32>
    %cst_55 = arith.constant 0.000000e+00 : f32
    %136 = vector.broadcast %cst_55 : f32 to vector<1x128xf32>
    %137 = arith.maximumf %135, %136 : vector<1x128xf32>
    %138 = arith.truncf %137 : vector<1x128xf32> to vector<1x128xbf16>
    %cst_56 = arith.constant dense<0.000000e+00> : vector<1x384xf32>
    %139 = tpu.matmul %138, %12, %cst_56 {dimension_numbers = #tpu.dot_dimension_numbers<[1], [0], [0], [1], [0, 0, 1, 1], [], []>} : vector<1x128xbf16>, vector<128x384xbf16>, vector<1x384xf32> -> vector<1x384xf32>
    %140 = vector.extract_strided_slice %139 {offsets = [0, 0], sizes = [1, 256], strides = [1, 1]} : vector<1x384xf32> to vector<1x256xf32>
    %141 = vector.extract_strided_slice %116 {offsets = [0, 128], sizes = [1, 256], strides = [1, 1]} : vector<1x512xf32> to vector<1x256xf32>
    %142 = arith.addf %140, %141 : vector<1x256xf32>
    %143 = arith.addf %142, %13 : vector<1x256xf32>
    %144 = arith.negf %143 : vector<1x256xf32>
    %145 = math.exp %144 : vector<1x256xf32>
    %cst_57 = arith.constant 1.000000e+00 : f32
    %146 = vector.broadcast %cst_57 : f32 to vector<1x256xf32>
    %147 = arith.addf %146, %145 : vector<1x256xf32>
    %148 = arith.divf %146, %147 : vector<1x256xf32>
    %149 = vector.extract_strided_slice %148 {offsets = [0, 0], sizes = [1, 128], strides = [1, 1]} : vector<1x256xf32> to vector<1x128xf32>
    %150 = vector.extract_strided_slice %148 {offsets = [0, 128], sizes = [1, 128], strides = [1, 1]} : vector<1x256xf32> to vector<1x128xf32>
    %151 = vector.extract_strided_slice %139 {offsets = [0, 256], sizes = [1, 128], strides = [1, 1]} : vector<1x384xf32> to vector<1x128xf32>
    %152 = arith.addf %151, %14 : vector<1x128xf32>
    %153 = vector.extract_strided_slice %116 {offsets = [0, 384], sizes = [1, 128], strides = [1, 1]} : vector<1x512xf32> to vector<1x128xf32>
    %154 = arith.addf %153, %15 : vector<1x128xf32>
    %155 = arith.mulf %149, %154 : vector<1x128xf32>
    %156 = arith.addf %152, %155 : vector<1x128xf32>
    %157 = math.tanh %156 : vector<1x128xf32>
    %cst_58 = arith.constant 1.000000e+00 : f32
    %158 = vector.broadcast %cst_58 : f32 to vector<1x128xf32>
    %159 = arith.subf %158, %150 : vector<1x128xf32>
    %160 = arith.mulf %159, %157 : vector<1x128xf32>
    %161 = arith.mulf %150, %113 : vector<1x128xf32>
    %162 = arith.addf %160, %161 : vector<1x128xf32>
    %c2_59 = arith.constant 2 : index
    %c0_60 = arith.constant 0 : index
    %163 = vector.load %arg17[%c2_59, %c0_60] : memref<8x128xf32, #tpu.memory_space<vmem>>, vector<1x128xf32>
    tpu.vector_store %arg17[%c2_59, %c0_60], %162 {strides = array<i32>} : memref<8x128xf32, #tpu.memory_space<vmem>>, vector<1x128xf32>,
    %164 = arith.truncf %162 : vector<1x128xf32> to vector<1x128xbf16>
    %cst_61 = arith.constant dense<0.000000e+00> : vector<1x512xf32>
    %165 = tpu.matmul %164, %10, %cst_61 {dimension_numbers = #tpu.dot_dimension_numbers<[1], [0], [0], [1], [0, 0, 1, 1], [], []>} : vector<1x128xbf16>, vector<128x512xbf16>, vector<1x512xf32> -> vector<1x512xf32>
    %166 = vector.extract_strided_slice %8 {offsets = [3, 0], sizes = [1, 128], strides = [1, 1]} : vector<8x256xf32> to vector<1x128xf32>
    %167 = vector.extract_strided_slice %165 {offsets = [0, 0], sizes = [1, 128], strides = [1, 1]} : vector<1x512xf32> to vector<1x128xf32>
    %168 = arith.addf %166, %167 : vector<1x128xf32>
    %cst_62 = arith.constant dense<0xFF800000> : vector<1xf32>
    %169 = vector.multi_reduction <maximumf>, %168, %cst_62 [1] : vector<1x128xf32> to vector<1xf32>
    %170 = vector.shape_cast %169 : vector<1xf32> to vector<1x1xf32>
    %171 = vector.broadcast %170 : vector<1x1xf32> to vector<1x128xf32>
    %172 = arith.subf %168, %171 : vector<1x128xf32>
    %173 = math.exp %172 : vector<1x128xf32>
    %cst_63 = arith.constant dense<0.000000e+00> : vector<1xf32>
    %174 = vector.multi_reduction <add>, %173, %cst_63 [1] : vector<1x128xf32> to vector<1xf32>
    %175 = vector.shape_cast %174 : vector<1xf32> to vector<1x1xf32>
    %176 = vector.broadcast %175 : vector<1x1xf32> to vector<1x128xf32>
    %177 = arith.divf %173, %176 : vector<1x128xf32>
    %c3 = arith.constant 3 : index
    %c0_64 = arith.constant 0 : index
    %178 = vector.load %arg16[%c3, %c0_64] : memref<8x128xf32, #tpu.memory_space<vmem>>, vector<1x128xf32>
    tpu.vector_store %arg16[%c3, %c0_64], %177 {strides = array<i32>} : memref<8x128xf32, #tpu.memory_space<vmem>>, vector<1x128xf32>,
    %179 = arith.truncf %177 : vector<1x128xf32> to vector<1x128xbf16>
    %cst_65 = arith.constant dense<0.000000e+00> : vector<1x128xf32>
    %180 = tpu.matmul %179, %9, %cst_65 {dimension_numbers = #tpu.dot_dimension_numbers<[1], [0], [0], [1], [0, 0, 1, 1], [], []>} : vector<1x128xbf16>, vector<128x128xbf16>, vector<1x128xf32> -> vector<1x128xf32>
    %181 = vector.extract_strided_slice %8 {offsets = [3, 128], sizes = [1, 128], strides = [1, 1]} : vector<8x256xf32> to vector<1x128xf32>
    %182 = arith.truncf %180 : vector<1x128xf32> to vector<1x128xbf16>
    %cst_66 = arith.constant dense<0.000000e+00> : vector<1x128xf32>
    %183 = tpu.matmul %182, %11, %cst_66 {dimension_numbers = #tpu.dot_dimension_numbers<[1], [0], [0], [1], [0, 0, 1, 1], [], []>} : vector<1x128xbf16>, vector<128x128xbf16>, vector<1x128xf32> -> vector<1x128xf32>
    %184 = arith.addf %181, %183 : vector<1x128xf32>
    %cst_67 = arith.constant 0.000000e+00 : f32
    %185 = vector.broadcast %cst_67 : f32 to vector<1x128xf32>
    %186 = arith.maximumf %184, %185 : vector<1x128xf32>
    %187 = arith.truncf %186 : vector<1x128xf32> to vector<1x128xbf16>
    %cst_68 = arith.constant dense<0.000000e+00> : vector<1x384xf32>
    %188 = tpu.matmul %187, %12, %cst_68 {dimension_numbers = #tpu.dot_dimension_numbers<[1], [0], [0], [1], [0, 0, 1, 1], [], []>} : vector<1x128xbf16>, vector<128x384xbf16>, vector<1x384xf32> -> vector<1x384xf32>
    %189 = vector.extract_strided_slice %188 {offsets = [0, 0], sizes = [1, 256], strides = [1, 1]} : vector<1x384xf32> to vector<1x256xf32>
    %190 = vector.extract_strided_slice %165 {offsets = [0, 128], sizes = [1, 256], strides = [1, 1]} : vector<1x512xf32> to vector<1x256xf32>
    %191 = arith.addf %189, %190 : vector<1x256xf32>
    %192 = arith.addf %191, %13 : vector<1x256xf32>
    %193 = arith.negf %192 : vector<1x256xf32>
    %194 = math.exp %193 : vector<1x256xf32>
    %cst_69 = arith.constant 1.000000e+00 : f32
    %195 = vector.broadcast %cst_69 : f32 to vector<1x256xf32>
    %196 = arith.addf %195, %194 : vector<1x256xf32>
    %197 = arith.divf %195, %196 : vector<1x256xf32>
    %198 = vector.extract_strided_slice %197 {offsets = [0, 0], sizes = [1, 128], strides = [1, 1]} : vector<1x256xf32> to vector<1x128xf32>
    %199 = vector.extract_strided_slice %197 {offsets = [0, 128], sizes = [1, 128], strides = [1, 1]} : vector<1x256xf32> to vector<1x128xf32>
    %200 = vector.extract_strided_slice %188 {offsets = [0, 256], sizes = [1, 128], strides = [1, 1]} : vector<1x384xf32> to vector<1x128xf32>
    %201 = arith.addf %200, %14 : vector<1x128xf32>
    %202 = vector.extract_strided_slice %165 {offsets = [0, 384], sizes = [1, 128], strides = [1, 1]} : vector<1x512xf32> to vector<1x128xf32>
    %203 = arith.addf %202, %15 : vector<1x128xf32>
    %204 = arith.mulf %198, %203 : vector<1x128xf32>
    %205 = arith.addf %201, %204 : vector<1x128xf32>
    %206 = math.tanh %205 : vector<1x128xf32>
    %cst_70 = arith.constant 1.000000e+00 : f32
    %207 = vector.broadcast %cst_70 : f32 to vector<1x128xf32>
    %208 = arith.subf %207, %199 : vector<1x128xf32>
    %209 = arith.mulf %208, %206 : vector<1x128xf32>
    %210 = arith.mulf %199, %162 : vector<1x128xf32>
    %211 = arith.addf %209, %210 : vector<1x128xf32>
    %c3_71 = arith.constant 3 : index
    %c0_72 = arith.constant 0 : index
    %212 = vector.load %arg17[%c3_71, %c0_72] : memref<8x128xf32, #tpu.memory_space<vmem>>, vector<1x128xf32>
    tpu.vector_store %arg17[%c3_71, %c0_72], %211 {strides = array<i32>} : memref<8x128xf32, #tpu.memory_space<vmem>>, vector<1x128xf32>,
    %213 = arith.truncf %211 : vector<1x128xf32> to vector<1x128xbf16>
    %cst_73 = arith.constant dense<0.000000e+00> : vector<1x512xf32>
    %214 = tpu.matmul %213, %10, %cst_73 {dimension_numbers = #tpu.dot_dimension_numbers<[1], [0], [0], [1], [0, 0, 1, 1], [], []>} : vector<1x128xbf16>, vector<128x512xbf16>, vector<1x512xf32> -> vector<1x512xf32>
    %215 = vector.extract_strided_slice %8 {offsets = [4, 0], sizes = [1, 128], strides = [1, 1]} : vector<8x256xf32> to vector<1x128xf32>
    %216 = vector.extract_strided_slice %214 {offsets = [0, 0], sizes = [1, 128], strides = [1, 1]} : vector<1x512xf32> to vector<1x128xf32>
    %217 = arith.addf %215, %216 : vector<1x128xf32>
    %cst_74 = arith.constant dense<0xFF800000> : vector<1xf32>
    %218 = vector.multi_reduction <maximumf>, %217, %cst_74 [1] : vector<1x128xf32> to vector<1xf32>
    %219 = vector.shape_cast %218 : vector<1xf32> to vector<1x1xf32>
    %220 = vector.broadcast %219 : vector<1x1xf32> to vector<1x128xf32>
    %221 = arith.subf %217, %220 : vector<1x128xf32>
    %222 = math.exp %221 : vector<1x128xf32>
    %cst_75 = arith.constant dense<0.000000e+00> : vector<1xf32>
    %223 = vector.multi_reduction <add>, %222, %cst_75 [1] : vector<1x128xf32> to vector<1xf32>
    %224 = vector.shape_cast %223 : vector<1xf32> to vector<1x1xf32>
    %225 = vector.broadcast %224 : vector<1x1xf32> to vector<1x128xf32>
    %226 = arith.divf %222, %225 : vector<1x128xf32>
    %c4 = arith.constant 4 : index
    %c0_76 = arith.constant 0 : index
    %227 = vector.load %arg16[%c4, %c0_76] : memref<8x128xf32, #tpu.memory_space<vmem>>, vector<1x128xf32>
    tpu.vector_store %arg16[%c4, %c0_76], %226 {strides = array<i32>} : memref<8x128xf32, #tpu.memory_space<vmem>>, vector<1x128xf32>,
    %228 = arith.truncf %226 : vector<1x128xf32> to vector<1x128xbf16>
    %cst_77 = arith.constant dense<0.000000e+00> : vector<1x128xf32>
    %229 = tpu.matmul %228, %9, %cst_77 {dimension_numbers = #tpu.dot_dimension_numbers<[1], [0], [0], [1], [0, 0, 1, 1], [], []>} : vector<1x128xbf16>, vector<128x128xbf16>, vector<1x128xf32> -> vector<1x128xf32>
    %230 = vector.extract_strided_slice %8 {offsets = [4, 128], sizes = [1, 128], strides = [1, 1]} : vector<8x256xf32> to vector<1x128xf32>
    %231 = arith.truncf %229 : vector<1x128xf32> to vector<1x128xbf16>
    %cst_78 = arith.constant dense<0.000000e+00> : vector<1x128xf32>
    %232 = tpu.matmul %231, %11, %cst_78 {dimension_numbers = #tpu.dot_dimension_numbers<[1], [0], [0], [1], [0, 0, 1, 1], [], []>} : vector<1x128xbf16>, vector<128x128xbf16>, vector<1x128xf32> -> vector<1x128xf32>
    %233 = arith.addf %230, %232 : vector<1x128xf32>
    %cst_79 = arith.constant 0.000000e+00 : f32
    %234 = vector.broadcast %cst_79 : f32 to vector<1x128xf32>
    %235 = arith.maximumf %233, %234 : vector<1x128xf32>
    %236 = arith.truncf %235 : vector<1x128xf32> to vector<1x128xbf16>
    %cst_80 = arith.constant dense<0.000000e+00> : vector<1x384xf32>
    %237 = tpu.matmul %236, %12, %cst_80 {dimension_numbers = #tpu.dot_dimension_numbers<[1], [0], [0], [1], [0, 0, 1, 1], [], []>} : vector<1x128xbf16>, vector<128x384xbf16>, vector<1x384xf32> -> vector<1x384xf32>
    %238 = vector.extract_strided_slice %237 {offsets = [0, 0], sizes = [1, 256], strides = [1, 1]} : vector<1x384xf32> to vector<1x256xf32>
    %239 = vector.extract_strided_slice %214 {offsets = [0, 128], sizes = [1, 256], strides = [1, 1]} : vector<1x512xf32> to vector<1x256xf32>
    %240 = arith.addf %238, %239 : vector<1x256xf32>
    %241 = arith.addf %240, %13 : vector<1x256xf32>
    %242 = arith.negf %241 : vector<1x256xf32>
    %243 = math.exp %242 : vector<1x256xf32>
    %cst_81 = arith.constant 1.000000e+00 : f32
    %244 = vector.broadcast %cst_81 : f32 to vector<1x256xf32>
    %245 = arith.addf %244, %243 : vector<1x256xf32>
    %246 = arith.divf %244, %245 : vector<1x256xf32>
    %247 = vector.extract_strided_slice %246 {offsets = [0, 0], sizes = [1, 128], strides = [1, 1]} : vector<1x256xf32> to vector<1x128xf32>
    %248 = vector.extract_strided_slice %246 {offsets = [0, 128], sizes = [1, 128], strides = [1, 1]} : vector<1x256xf32> to vector<1x128xf32>
    %249 = vector.extract_strided_slice %237 {offsets = [0, 256], sizes = [1, 128], strides = [1, 1]} : vector<1x384xf32> to vector<1x128xf32>
    %250 = arith.addf %249, %14 : vector<1x128xf32>
    %251 = vector.extract_strided_slice %214 {offsets = [0, 384], sizes = [1, 128], strides = [1, 1]} : vector<1x512xf32> to vector<1x128xf32>
    %252 = arith.addf %251, %15 : vector<1x128xf32>
    %253 = arith.mulf %247, %252 : vector<1x128xf32>
    %254 = arith.addf %250, %253 : vector<1x128xf32>
    %255 = math.tanh %254 : vector<1x128xf32>
    %cst_82 = arith.constant 1.000000e+00 : f32
    %256 = vector.broadcast %cst_82 : f32 to vector<1x128xf32>
    %257 = arith.subf %256, %248 : vector<1x128xf32>
    %258 = arith.mulf %257, %255 : vector<1x128xf32>
    %259 = arith.mulf %248, %211 : vector<1x128xf32>
    %260 = arith.addf %258, %259 : vector<1x128xf32>
    %c4_83 = arith.constant 4 : index
    %c0_84 = arith.constant 0 : index
    %261 = vector.load %arg17[%c4_83, %c0_84] : memref<8x128xf32, #tpu.memory_space<vmem>>, vector<1x128xf32>
    tpu.vector_store %arg17[%c4_83, %c0_84], %260 {strides = array<i32>} : memref<8x128xf32, #tpu.memory_space<vmem>>, vector<1x128xf32>,
    %262 = arith.truncf %260 : vector<1x128xf32> to vector<1x128xbf16>
    %cst_85 = arith.constant dense<0.000000e+00> : vector<1x512xf32>
    %263 = tpu.matmul %262, %10, %cst_85 {dimension_numbers = #tpu.dot_dimension_numbers<[1], [0], [0], [1], [0, 0, 1, 1], [], []>} : vector<1x128xbf16>, vector<128x512xbf16>, vector<1x512xf32> -> vector<1x512xf32>
    %264 = vector.extract_strided_slice %8 {offsets = [5, 0], sizes = [1, 128], strides = [1, 1]} : vector<8x256xf32> to vector<1x128xf32>
    %265 = vector.extract_strided_slice %263 {offsets = [0, 0], sizes = [1, 128], strides = [1, 1]} : vector<1x512xf32> to vector<1x128xf32>
    %266 = arith.addf %264, %265 : vector<1x128xf32>
    %cst_86 = arith.constant dense<0xFF800000> : vector<1xf32>
    %267 = vector.multi_reduction <maximumf>, %266, %cst_86 [1] : vector<1x128xf32> to vector<1xf32>
    %268 = vector.shape_cast %267 : vector<1xf32> to vector<1x1xf32>
    %269 = vector.broadcast %268 : vector<1x1xf32> to vector<1x128xf32>
    %270 = arith.subf %266, %269 : vector<1x128xf32>
    %271 = math.exp %270 : vector<1x128xf32>
    %cst_87 = arith.constant dense<0.000000e+00> : vector<1xf32>
    %272 = vector.multi_reduction <add>, %271, %cst_87 [1] : vector<1x128xf32> to vector<1xf32>
    %273 = vector.shape_cast %272 : vector<1xf32> to vector<1x1xf32>
    %274 = vector.broadcast %273 : vector<1x1xf32> to vector<1x128xf32>
    %275 = arith.divf %271, %274 : vector<1x128xf32>
    %c5 = arith.constant 5 : index
    %c0_88 = arith.constant 0 : index
    %276 = vector.load %arg16[%c5, %c0_88] : memref<8x128xf32, #tpu.memory_space<vmem>>, vector<1x128xf32>
    tpu.vector_store %arg16[%c5, %c0_88], %275 {strides = array<i32>} : memref<8x128xf32, #tpu.memory_space<vmem>>, vector<1x128xf32>,
    %277 = arith.truncf %275 : vector<1x128xf32> to vector<1x128xbf16>
    %cst_89 = arith.constant dense<0.000000e+00> : vector<1x128xf32>
    %278 = tpu.matmul %277, %9, %cst_89 {dimension_numbers = #tpu.dot_dimension_numbers<[1], [0], [0], [1], [0, 0, 1, 1], [], []>} : vector<1x128xbf16>, vector<128x128xbf16>, vector<1x128xf32> -> vector<1x128xf32>
    %279 = vector.extract_strided_slice %8 {offsets = [5, 128], sizes = [1, 128], strides = [1, 1]} : vector<8x256xf32> to vector<1x128xf32>
    %280 = arith.truncf %278 : vector<1x128xf32> to vector<1x128xbf16>
    %cst_90 = arith.constant dense<0.000000e+00> : vector<1x128xf32>
    %281 = tpu.matmul %280, %11, %cst_90 {dimension_numbers = #tpu.dot_dimension_numbers<[1], [0], [0], [1], [0, 0, 1, 1], [], []>} : vector<1x128xbf16>, vector<128x128xbf16>, vector<1x128xf32> -> vector<1x128xf32>
    %282 = arith.addf %279, %281 : vector<1x128xf32>
    %cst_91 = arith.constant 0.000000e+00 : f32
    %283 = vector.broadcast %cst_91 : f32 to vector<1x128xf32>
    %284 = arith.maximumf %282, %283 : vector<1x128xf32>
    %285 = arith.truncf %284 : vector<1x128xf32> to vector<1x128xbf16>
    %cst_92 = arith.constant dense<0.000000e+00> : vector<1x384xf32>
    %286 = tpu.matmul %285, %12, %cst_92 {dimension_numbers = #tpu.dot_dimension_numbers<[1], [0], [0], [1], [0, 0, 1, 1], [], []>} : vector<1x128xbf16>, vector<128x384xbf16>, vector<1x384xf32> -> vector<1x384xf32>
    %287 = vector.extract_strided_slice %286 {offsets = [0, 0], sizes = [1, 256], strides = [1, 1]} : vector<1x384xf32> to vector<1x256xf32>
    %288 = vector.extract_strided_slice %263 {offsets = [0, 128], sizes = [1, 256], strides = [1, 1]} : vector<1x512xf32> to vector<1x256xf32>
    %289 = arith.addf %287, %288 : vector<1x256xf32>
    %290 = arith.addf %289, %13 : vector<1x256xf32>
    %291 = arith.negf %290 : vector<1x256xf32>
    %292 = math.exp %291 : vector<1x256xf32>
    %cst_93 = arith.constant 1.000000e+00 : f32
    %293 = vector.broadcast %cst_93 : f32 to vector<1x256xf32>
    %294 = arith.addf %293, %292 : vector<1x256xf32>
    %295 = arith.divf %293, %294 : vector<1x256xf32>
    %296 = vector.extract_strided_slice %295 {offsets = [0, 0], sizes = [1, 128], strides = [1, 1]} : vector<1x256xf32> to vector<1x128xf32>
    %297 = vector.extract_strided_slice %295 {offsets = [0, 128], sizes = [1, 128], strides = [1, 1]} : vector<1x256xf32> to vector<1x128xf32>
    %298 = vector.extract_strided_slice %286 {offsets = [0, 256], sizes = [1, 128], strides = [1, 1]} : vector<1x384xf32> to vector<1x128xf32>
    %299 = arith.addf %298, %14 : vector<1x128xf32>
    %300 = vector.extract_strided_slice %263 {offsets = [0, 384], sizes = [1, 128], strides = [1, 1]} : vector<1x512xf32> to vector<1x128xf32>
    %301 = arith.addf %300, %15 : vector<1x128xf32>
    %302 = arith.mulf %296, %301 : vector<1x128xf32>
    %303 = arith.addf %299, %302 : vector<1x128xf32>
    %304 = math.tanh %303 : vector<1x128xf32>
    %cst_94 = arith.constant 1.000000e+00 : f32
    %305 = vector.broadcast %cst_94 : f32 to vector<1x128xf32>
    %306 = arith.subf %305, %297 : vector<1x128xf32>
    %307 = arith.mulf %306, %304 : vector<1x128xf32>
    %308 = arith.mulf %297, %260 : vector<1x128xf32>
    %309 = arith.addf %307, %308 : vector<1x128xf32>
    %c5_95 = arith.constant 5 : index
    %c0_96 = arith.constant 0 : index
    %310 = vector.load %arg17[%c5_95, %c0_96] : memref<8x128xf32, #tpu.memory_space<vmem>>, vector<1x128xf32>
    tpu.vector_store %arg17[%c5_95, %c0_96], %309 {strides = array<i32>} : memref<8x128xf32, #tpu.memory_space<vmem>>, vector<1x128xf32>,
    %311 = arith.truncf %309 : vector<1x128xf32> to vector<1x128xbf16>
    %cst_97 = arith.constant dense<0.000000e+00> : vector<1x512xf32>
    %312 = tpu.matmul %311, %10, %cst_97 {dimension_numbers = #tpu.dot_dimension_numbers<[1], [0], [0], [1], [0, 0, 1, 1], [], []>} : vector<1x128xbf16>, vector<128x512xbf16>, vector<1x512xf32> -> vector<1x512xf32>
    %313 = vector.extract_strided_slice %8 {offsets = [6, 0], sizes = [1, 128], strides = [1, 1]} : vector<8x256xf32> to vector<1x128xf32>
    %314 = vector.extract_strided_slice %312 {offsets = [0, 0], sizes = [1, 128], strides = [1, 1]} : vector<1x512xf32> to vector<1x128xf32>
    %315 = arith.addf %313, %314 : vector<1x128xf32>
    %cst_98 = arith.constant dense<0xFF800000> : vector<1xf32>
    %316 = vector.multi_reduction <maximumf>, %315, %cst_98 [1] : vector<1x128xf32> to vector<1xf32>
    %317 = vector.shape_cast %316 : vector<1xf32> to vector<1x1xf32>
    %318 = vector.broadcast %317 : vector<1x1xf32> to vector<1x128xf32>
    %319 = arith.subf %315, %318 : vector<1x128xf32>
    %320 = math.exp %319 : vector<1x128xf32>
    %cst_99 = arith.constant dense<0.000000e+00> : vector<1xf32>
    %321 = vector.multi_reduction <add>, %320, %cst_99 [1] : vector<1x128xf32> to vector<1xf32>
    %322 = vector.shape_cast %321 : vector<1xf32> to vector<1x1xf32>
    %323 = vector.broadcast %322 : vector<1x1xf32> to vector<1x128xf32>
    %324 = arith.divf %320, %323 : vector<1x128xf32>
    %c6 = arith.constant 6 : index
    %c0_100 = arith.constant 0 : index
    %325 = vector.load %arg16[%c6, %c0_100] : memref<8x128xf32, #tpu.memory_space<vmem>>, vector<1x128xf32>
    tpu.vector_store %arg16[%c6, %c0_100], %324 {strides = array<i32>} : memref<8x128xf32, #tpu.memory_space<vmem>>, vector<1x128xf32>,
    %326 = arith.truncf %324 : vector<1x128xf32> to vector<1x128xbf16>
    %cst_101 = arith.constant dense<0.000000e+00> : vector<1x128xf32>
    %327 = tpu.matmul %326, %9, %cst_101 {dimension_numbers = #tpu.dot_dimension_numbers<[1], [0], [0], [1], [0, 0, 1, 1], [], []>} : vector<1x128xbf16>, vector<128x128xbf16>, vector<1x128xf32> -> vector<1x128xf32>
    %328 = vector.extract_strided_slice %8 {offsets = [6, 128], sizes = [1, 128], strides = [1, 1]} : vector<8x256xf32> to vector<1x128xf32>
    %329 = arith.truncf %327 : vector<1x128xf32> to vector<1x128xbf16>
    %cst_102 = arith.constant dense<0.000000e+00> : vector<1x128xf32>
    %330 = tpu.matmul %329, %11, %cst_102 {dimension_numbers = #tpu.dot_dimension_numbers<[1], [0], [0], [1], [0, 0, 1, 1], [], []>} : vector<1x128xbf16>, vector<128x128xbf16>, vector<1x128xf32> -> vector<1x128xf32>
    %331 = arith.addf %328, %330 : vector<1x128xf32>
    %cst_103 = arith.constant 0.000000e+00 : f32
    %332 = vector.broadcast %cst_103 : f32 to vector<1x128xf32>
    %333 = arith.maximumf %331, %332 : vector<1x128xf32>
    %334 = arith.truncf %333 : vector<1x128xf32> to vector<1x128xbf16>
    %cst_104 = arith.constant dense<0.000000e+00> : vector<1x384xf32>
    %335 = tpu.matmul %334, %12, %cst_104 {dimension_numbers = #tpu.dot_dimension_numbers<[1], [0], [0], [1], [0, 0, 1, 1], [], []>} : vector<1x128xbf16>, vector<128x384xbf16>, vector<1x384xf32> -> vector<1x384xf32>
    %336 = vector.extract_strided_slice %335 {offsets = [0, 0], sizes = [1, 256], strides = [1, 1]} : vector<1x384xf32> to vector<1x256xf32>
    %337 = vector.extract_strided_slice %312 {offsets = [0, 128], sizes = [1, 256], strides = [1, 1]} : vector<1x512xf32> to vector<1x256xf32>
    %338 = arith.addf %336, %337 : vector<1x256xf32>
    %339 = arith.addf %338, %13 : vector<1x256xf32>
    %340 = arith.negf %339 : vector<1x256xf32>
    %341 = math.exp %340 : vector<1x256xf32>
    %cst_105 = arith.constant 1.000000e+00 : f32
    %342 = vector.broadcast %cst_105 : f32 to vector<1x256xf32>
    %343 = arith.addf %342, %341 : vector<1x256xf32>
    %344 = arith.divf %342, %343 : vector<1x256xf32>
    %345 = vector.extract_strided_slice %344 {offsets = [0, 0], sizes = [1, 128], strides = [1, 1]} : vector<1x256xf32> to vector<1x128xf32>
    %346 = vector.extract_strided_slice %344 {offsets = [0, 128], sizes = [1, 128], strides = [1, 1]} : vector<1x256xf32> to vector<1x128xf32>
    %347 = vector.extract_strided_slice %335 {offsets = [0, 256], sizes = [1, 128], strides = [1, 1]} : vector<1x384xf32> to vector<1x128xf32>
    %348 = arith.addf %347, %14 : vector<1x128xf32>
    %349 = vector.extract_strided_slice %312 {offsets = [0, 384], sizes = [1, 128], strides = [1, 1]} : vector<1x512xf32> to vector<1x128xf32>
    %350 = arith.addf %349, %15 : vector<1x128xf32>
    %351 = arith.mulf %345, %350 : vector<1x128xf32>
    %352 = arith.addf %348, %351 : vector<1x128xf32>
    %353 = math.tanh %352 : vector<1x128xf32>
    %cst_106 = arith.constant 1.000000e+00 : f32
    %354 = vector.broadcast %cst_106 : f32 to vector<1x128xf32>
    %355 = arith.subf %354, %346 : vector<1x128xf32>
    %356 = arith.mulf %355, %353 : vector<1x128xf32>
    %357 = arith.mulf %346, %309 : vector<1x128xf32>
    %358 = arith.addf %356, %357 : vector<1x128xf32>
    %c6_107 = arith.constant 6 : index
    %c0_108 = arith.constant 0 : index
    %359 = vector.load %arg17[%c6_107, %c0_108] : memref<8x128xf32, #tpu.memory_space<vmem>>, vector<1x128xf32>
    tpu.vector_store %arg17[%c6_107, %c0_108], %358 {strides = array<i32>} : memref<8x128xf32, #tpu.memory_space<vmem>>, vector<1x128xf32>,
    %360 = arith.truncf %358 : vector<1x128xf32> to vector<1x128xbf16>
    %cst_109 = arith.constant dense<0.000000e+00> : vector<1x512xf32>
    %361 = tpu.matmul %360, %10, %cst_109 {dimension_numbers = #tpu.dot_dimension_numbers<[1], [0], [0], [1], [0, 0, 1, 1], [], []>} : vector<1x128xbf16>, vector<128x512xbf16>, vector<1x512xf32> -> vector<1x512xf32>
    %362 = vector.extract_strided_slice %8 {offsets = [7, 0], sizes = [1, 128], strides = [1, 1]} : vector<8x256xf32> to vector<1x128xf32>
    %363 = vector.extract_strided_slice %361 {offsets = [0, 0], sizes = [1, 128], strides = [1, 1]} : vector<1x512xf32> to vector<1x128xf32>
    %364 = arith.addf %362, %363 : vector<1x128xf32>
    %cst_110 = arith.constant dense<0xFF800000> : vector<1xf32>
    %365 = vector.multi_reduction <maximumf>, %364, %cst_110 [1] : vector<1x128xf32> to vector<1xf32>
    %366 = vector.shape_cast %365 : vector<1xf32> to vector<1x1xf32>
    %367 = vector.broadcast %366 : vector<1x1xf32> to vector<1x128xf32>
    %368 = arith.subf %364, %367 : vector<1x128xf32>
    %369 = math.exp %368 : vector<1x128xf32>
    %cst_111 = arith.constant dense<0.000000e+00> : vector<1xf32>
    %370 = vector.multi_reduction <add>, %369, %cst_111 [1] : vector<1x128xf32> to vector<1xf32>
    %371 = vector.shape_cast %370 : vector<1xf32> to vector<1x1xf32>
    %372 = vector.broadcast %371 : vector<1x1xf32> to vector<1x128xf32>
    %373 = arith.divf %369, %372 : vector<1x128xf32>
    %c7 = arith.constant 7 : index
    %c0_112 = arith.constant 0 : index
    %374 = vector.load %arg16[%c7, %c0_112] : memref<8x128xf32, #tpu.memory_space<vmem>>, vector<1x128xf32>
    tpu.vector_store %arg16[%c7, %c0_112], %373 {strides = array<i32>} : memref<8x128xf32, #tpu.memory_space<vmem>>, vector<1x128xf32>,
    %375 = arith.truncf %373 : vector<1x128xf32> to vector<1x128xbf16>
    %cst_113 = arith.constant dense<0.000000e+00> : vector<1x128xf32>
    %376 = tpu.matmul %375, %9, %cst_113 {dimension_numbers = #tpu.dot_dimension_numbers<[1], [0], [0], [1], [0, 0, 1, 1], [], []>} : vector<1x128xbf16>, vector<128x128xbf16>, vector<1x128xf32> -> vector<1x128xf32>
    %377 = vector.extract_strided_slice %8 {offsets = [7, 128], sizes = [1, 128], strides = [1, 1]} : vector<8x256xf32> to vector<1x128xf32>
    %378 = arith.truncf %376 : vector<1x128xf32> to vector<1x128xbf16>
    %cst_114 = arith.constant dense<0.000000e+00> : vector<1x128xf32>
    %379 = tpu.matmul %378, %11, %cst_114 {dimension_numbers = #tpu.dot_dimension_numbers<[1], [0], [0], [1], [0, 0, 1, 1], [], []>} : vector<1x128xbf16>, vector<128x128xbf16>, vector<1x128xf32> -> vector<1x128xf32>
    %380 = arith.addf %377, %379 : vector<1x128xf32>
    %cst_115 = arith.constant 0.000000e+00 : f32
    %381 = vector.broadcast %cst_115 : f32 to vector<1x128xf32>
    %382 = arith.maximumf %380, %381 : vector<1x128xf32>
    %383 = arith.truncf %382 : vector<1x128xf32> to vector<1x128xbf16>
    %cst_116 = arith.constant dense<0.000000e+00> : vector<1x384xf32>
    %384 = tpu.matmul %383, %12, %cst_116 {dimension_numbers = #tpu.dot_dimension_numbers<[1], [0], [0], [1], [0, 0, 1, 1], [], []>} : vector<1x128xbf16>, vector<128x384xbf16>, vector<1x384xf32> -> vector<1x384xf32>
    %385 = vector.extract_strided_slice %384 {offsets = [0, 0], sizes = [1, 256], strides = [1, 1]} : vector<1x384xf32> to vector<1x256xf32>
    %386 = vector.extract_strided_slice %361 {offsets = [0, 128], sizes = [1, 256], strides = [1, 1]} : vector<1x512xf32> to vector<1x256xf32>
    %387 = arith.addf %385, %386 : vector<1x256xf32>
    %388 = arith.addf %387, %13 : vector<1x256xf32>
    %389 = arith.negf %388 : vector<1x256xf32>
    %390 = math.exp %389 : vector<1x256xf32>
    %cst_117 = arith.constant 1.000000e+00 : f32
    %391 = vector.broadcast %cst_117 : f32 to vector<1x256xf32>
    %392 = arith.addf %391, %390 : vector<1x256xf32>
    %393 = arith.divf %391, %392 : vector<1x256xf32>
    %394 = vector.extract_strided_slice %393 {offsets = [0, 0], sizes = [1, 128], strides = [1, 1]} : vector<1x256xf32> to vector<1x128xf32>
    %395 = vector.extract_strided_slice %393 {offsets = [0, 128], sizes = [1, 128], strides = [1, 1]} : vector<1x256xf32> to vector<1x128xf32>
    %396 = vector.extract_strided_slice %384 {offsets = [0, 256], sizes = [1, 128], strides = [1, 1]} : vector<1x384xf32> to vector<1x128xf32>
    %397 = arith.addf %396, %14 : vector<1x128xf32>
    %398 = vector.extract_strided_slice %361 {offsets = [0, 384], sizes = [1, 128], strides = [1, 1]} : vector<1x512xf32> to vector<1x128xf32>
    %399 = arith.addf %398, %15 : vector<1x128xf32>
    %400 = arith.mulf %394, %399 : vector<1x128xf32>
    %401 = arith.addf %397, %400 : vector<1x128xf32>
    %402 = math.tanh %401 : vector<1x128xf32>
    %cst_118 = arith.constant 1.000000e+00 : f32
    %403 = vector.broadcast %cst_118 : f32 to vector<1x128xf32>
    %404 = arith.subf %403, %395 : vector<1x128xf32>
    %405 = arith.mulf %404, %402 : vector<1x128xf32>
    %406 = arith.mulf %395, %358 : vector<1x128xf32>
    %407 = arith.addf %405, %406 : vector<1x128xf32>
    %c7_119 = arith.constant 7 : index
    %c0_120 = arith.constant 0 : index
    %408 = vector.load %arg17[%c7_119, %c0_120] : memref<8x128xf32, #tpu.memory_space<vmem>>, vector<1x128xf32>
    tpu.vector_store %arg17[%c7_119, %c0_120], %407 {strides = array<i32>} : memref<8x128xf32, #tpu.memory_space<vmem>>, vector<1x128xf32>,
    %c0_121 = arith.constant 0 : index
    %c0_122 = arith.constant 0 : index
    %409 = vector.load %arg15[%c0_121, %c0_122] : memref<1x128xf32, #tpu.memory_space<vmem>>, vector<1x128xf32>
    tpu.vector_store %arg15[%c0_121, %c0_122], %407 {strides = array<i32>} : memref<1x128xf32, #tpu.memory_space<vmem>>, vector<1x128xf32>,
    %c0_123 = arith.constant 0 : index
    %c0_124 = arith.constant 0 : index
    %410 = vector.load %arg17[%c0_123, %c0_124] : memref<8x128xf32, #tpu.memory_space<vmem>>, vector<8x128xf32>
    %411 = arith.truncf %410 : vector<8x128xf32> to vector<8x128xbf16>
    %c0_125 = arith.constant 0 : index
    %c0_126 = arith.constant 0 : index
    %412 = vector.load %arg12[%c0_125, %c0_126] : memref<128x128xbf16, #tpu.memory_space<vmem>>, vector<128x128xbf16>
    %cst_127 = arith.constant dense<0.000000e+00> : vector<8x128xf32>
    %413 = tpu.matmul %411, %412, %cst_127 {dimension_numbers = #tpu.dot_dimension_numbers<[1], [0], [0], [1], [0, 0, 1, 1], [], []>} : vector<8x128xbf16>, vector<128x128xbf16>, vector<8x128xf32> -> vector<8x128xf32>
    %c0_128 = arith.constant 0 : index
    %c0_129 = arith.constant 0 : index
    %414 = vector.load %arg13[%c0_128, %c0_129] : memref<1x128xf32, #tpu.memory_space<vmem>>, vector<1x128xf32>
    %415 = vector.broadcast %414 : vector<1x128xf32> to vector<8x128xf32>
    %416 = arith.addf %413, %415 : vector<8x128xf32>
    %cst_130 = arith.constant dense<0xFF800000> : vector<8xf32>
    %417 = vector.multi_reduction <maximumf>, %416, %cst_130 [1] : vector<8x128xf32> to vector<8xf32>
    %418 = vector.shape_cast %417 : vector<8xf32> to vector<8x1xf32>
    %419 = vector.broadcast %418 : vector<8x1xf32> to vector<8x128xf32>
    %420 = arith.subf %416, %419 : vector<8x128xf32>
    %421 = math.exp %420 : vector<8x128xf32>
    %cst_131 = arith.constant dense<0.000000e+00> : vector<8xf32>
    %422 = vector.multi_reduction <add>, %421, %cst_131 [1] : vector<8x128xf32> to vector<8xf32>
    %423 = vector.shape_cast %422 : vector<8xf32> to vector<8x1xf32>
    %424 = math.log %423 : vector<8x1xf32>
    %425 = arith.addf %424, %418 : vector<8x1xf32>
    %426 = vector.broadcast %425 : vector<8x1xf32> to vector<8x128xf32>
    %427 = arith.subf %416, %426 : vector<8x128xf32>
    %c0_132 = arith.constant 0 : index
    %c0_133 = arith.constant 0 : index
    %428 = vector.load %arg14[%c0_132, %c0_133] : memref<8x128xf32, #tpu.memory_space<vmem>>, vector<8x128xf32>
    tpu.vector_store %arg14[%c0_132, %c0_133], %427 {strides = array<i32>} : memref<8x128xf32, #tpu.memory_space<vmem>>, vector<8x128xf32>,
    return
  }
}

</mosaic_0001>

<llo_original>
// kernel: tpu_custom_call.1
$region0: #{tpu_custom_call.1}
  #allocation0 [shape = 'u32[]', space=smem, size = 0x4, offset = 0x4, fixed_abs, tag = 'smem constant byte address 0x4 - core index']
  #allocation1 [shape = 'u32[144,128]{1,0:T(1,128)}', space=vmem, size = 0x12000, scoped, tag = 'internal scratch']
  #allocation2 [shape = 'f32[8,128]{1,0:T(8,128)}', space=vmem, size = 0x1000, scoped, tag = 'scratch operand']
  %s0 = inlined_call_operand.hbm [shape: bf16[8,128], index: 0, kind: input, shape index: {}]
  %s1 = inlined_call_operand.hbm [shape: bf16[128,128], index: 1, kind: input, shape index: {}]
  %s2 = inlined_call_operand.vmem [shape: f32[1,128], index: 2, kind: input, shape index: {}]
  %s3 = inlined_call_operand.hbm [shape: bf16[128,128], index: 3, kind: input, shape index: {}]
  %s4 = inlined_call_operand.hbm [shape: bf16[128,256], index: 4, kind: input, shape index: {}]
  %s5 = inlined_call_operand.vmem [shape: f32[1,256], index: 5, kind: input, shape index: {}]
  %s6 = inlined_call_operand.hbm [shape: bf16[128,512], index: 6, kind: input, shape index: {}]
  %s7 = inlined_call_operand.hbm [shape: bf16[128,128], index: 7, kind: input, shape index: {}]
  %s8 = inlined_call_operand.hbm [shape: bf16[128,384], index: 8, kind: input, shape index: {}]
  %s9 = inlined_call_operand.vmem [shape: f32[1,256], index: 9, kind: input, shape index: {}]
  %s10 = inlined_call_operand.vmem [shape: f32[1,128], index: 10, kind: input, shape index: {}]
  %s11 = inlined_call_operand.vmem [shape: f32[1,128], index: 11, kind: input, shape index: {}]
  %s12 = inlined_call_operand.hbm [shape: bf16[128,128], index: 12, kind: input, shape index: {}]
  %s13 = inlined_call_operand.vmem [shape: f32[1,128], index: 13, kind: input, shape index: {}]
  %s14 = inlined_call_operand.hbm [shape: f32[8,128], index: 14, kind: output, shape index: {0}]
  %s15 = inlined_call_operand.hbm [shape: f32[1,128], index: 15, kind: output, shape index: {1}]
  %s16 = inlined_call_operand.hbm [shape: f32[8,128], index: 16, kind: output, shape index: {2}]
  %17 = xla_tuple %s14, %s15, %s16
  %s18 = sld [smem:[#allocation0]]
  $region114: #{tpu_custom_call.1} parent=0
    _
  %s20 = ssub.s32 1, %s18
  %s21 = scalar_select 0, %s20, %s18
  $region1: #{tpu_custom_call.1} parent=0
    #allocation3 [shape = 'u8[2048]{0}', space=vmem, size = 0x800, scoped, tag = 'input window, operand 0, single buffered']
    #allocation4 [shape = 's32[1]{0}', space=sflag, size = 0x4, scoped, tag = 'scoped memory for tpu_custom_call.1']
    #allocation5 [shape = 's32[1]{0}', space=sflag, size = 0x4, scoped, tag = 'scoped memory for tpu_custom_call.1']
    #allocation6 [shape = 'u8[32768]{0}', space=vmem, size = 0x8000, scoped, tag = 'input window, operand 1, single buffered']
    #allocation7 [shape = 's32[1]{0}', space=sflag, size = 0x4, scoped, tag = 'scoped memory for tpu_custom_call.1']
    #allocation8 [shape = 'u8[32768]{0}', space=vmem, size = 0x8000, scoped, tag = 'input window, operand 3, single buffered']
    #allocation9 [shape = 'u8[65536]{0}', space=vmem, size = 0x10000, scoped, tag = 'input window, operand 4, single buffered']
    #allocation10 [shape = 's32[1]{0}', space=sflag, size = 0x4, scoped, tag = 'scoped memory for tpu_custom_call.1']
    #allocation11 [shape = 'u8[131072]{0}', space=vmem, size = 0x20000, scoped, tag = 'input window, operand 6, single buffered']
    #allocation12 [shape = 'u8[32768]{0}', space=vmem, size = 0x8000, scoped, tag = 'input window, operand 7, single buffered']
    #allocation13 [shape = 's32[1]{0}', space=sflag, size = 0x4, scoped, tag = 'scoped memory for tpu_custom_call.1']
    #allocation14 [shape = 'u8[98304]{0}', space=vmem, size = 0x18000, scoped, tag = 'input window, operand 8, single buffered']
    #allocation15 [shape = 'u8[32768]{0}', space=vmem, size = 0x8000, scoped, tag = 'input window, operand 12, single buffered']
    #allocation16 [shape = 's32[1]{0}', space=sflag, size = 0x4, scoped, tag = 'scoped memory for tpu_custom_call.1']
    #allocation17 [shape = 'u8[4096]{0}', space=vmem, size = 0x1000, scoped, tag = 'output window, operand 0, single buffered']
    #allocation18 [shape = 'u8[512]{0}', space=vmem, size = 0x400, scoped, tag = 'output window, operand 1, single buffered']
    #allocation19 [shape = 's32[1]{0}', space=sflag, size = 0x4, scoped, tag = 'scoped memory for tpu_custom_call.1']
    #allocation20 [shape = 'u8[4096]{0}', space=vmem, size = 0x1000, scoped, tag = 'output window, operand 2, single buffered']
    %22 = vsyncpa [#allocation4], 0
    %23 = vsyncpa [#allocation7], 0
    %24 = vsyncpa [#allocation10], 0
    %25 = vsyncpa [#allocation13], 0
    %26 = vsyncpa [#allocation16], 0
    %27 = vsyncpa [#allocation5], 0
    %28 = vsyncpa [#allocation19], 0
    // Predicated region
    $region2: #{tpu_custom_call.1} parent=1 // pred_check
      _
    $region3: #{tpu_custom_call.1} parent=1 // pred_check_branch
      %30 = sbr.rel (0) target = $region5
    $region4: #{tpu_custom_call.1} parent=1 // pred_region
      %s32 = ssub.s32 64, 64
      %33 = vsyncadd [#allocation4], %s32
      %s35 = sshll.u32 [#allocation3], 4
      %s36 = int_to_ptr.vmem [resolvable:$true] %s35
      %38 = dma.hbm_to_vmem [thread:$0]  %s0, 64, %s36, [#allocation4]
    $region5: #{tpu_custom_call.1} parent=1 // pred_fallthru
      _
    // Predicated region
    $region6: #{tpu_custom_call.1} parent=1 // pred_check
      _
    $region7: #{tpu_custom_call.1} parent=1 // pred_check_branch
      %40 = sbr.rel (0) target = $region9
    $region8: #{tpu_custom_call.1} parent=1 // pred_region
      %s42 = ssub.s32 1024, 1024
      %43 = vsyncadd [#allocation7], %s42
      %s44 = sshll.u32 [#allocation6], 4
      %s45 = int_to_ptr.vmem [resolvable:$true] %s44
      %50 = dma.hbm_to_vmem [thread:$0]  %s1, 1024, %s45, [#allocation7], 64, 64, 4
    $region9: #{tpu_custom_call.1} parent=1 // pred_fallthru
      _
    // Predicated region
    $region10: #{tpu_custom_call.1} parent=1 // pred_check
      _
    $region11: #{tpu_custom_call.1} parent=1 // pred_check_branch
      %52 = sbr.rel (0) target = $region13
    $region12: #{tpu_custom_call.1} parent=1 // pred_region
      _
    $region13: #{tpu_custom_call.1} parent=1 // pred_fallthru
      _
    // Predicated region
    $region14: #{tpu_custom_call.1} parent=1 // pred_check
      _
    $region15: #{tpu_custom_call.1} parent=1 // pred_check_branch
      %54 = sbr.rel (0) target = $region17
    $region16: #{tpu_custom_call.1} parent=1 // pred_region
      %s56 = ssub.s32 1024, 1024
      %57 = vsyncadd [#allocation7], %s56
      %s58 = sshll.u32 [#allocation8], 4
      %s59 = int_to_ptr.vmem [resolvable:$true] %s58
      %64 = dma.hbm_to_vmem [thread:$0]  %s3, 1024, %s59, [#allocation7], 64, 64, 4
    $region17: #{tpu_custom_call.1} parent=1 // pred_fallthru
      _
    // Predicated region
    $region18: #{tpu_custom_call.1} parent=1 // pred_check
      _
    $region19: #{tpu_custom_call.1} parent=1 // pred_check_branch
      %66 = sbr.rel (0) target = $region21
    $region20: #{tpu_custom_call.1} parent=1 // pred_region
      %s68 = ssub.s32 2048, 2048
      %69 = vsyncadd [#allocation10], %s68
      %s70 = sshll.u32 [#allocation9], 4
      %s71 = int_to_ptr.vmem [resolvable:$true] %s70
      %76 = dma.hbm_to_vmem [thread:$0]  %s4, 2048, %s71, [#allocation10], 128, 128, 8
    $region21: #{tpu_custom_call.1} parent=1 // pred_fallthru
      _
    // Predicated region
    $region22: #{tpu_custom_call.1} parent=1 // pred_check
      _
    $region23: #{tpu_custom_call.1} parent=1 // pred_check_branch
      %78 = sbr.rel (0) target = $region25
    $region24: #{tpu_custom_call.1} parent=1 // pred_region
      _
    $region25: #{tpu_custom_call.1} parent=1 // pred_fallthru
      _
    // Predicated region
    $region26: #{tpu_custom_call.1} parent=1 // pred_check
      _
    $region27: #{tpu_custom_call.1} parent=1 // pred_check_branch
      %80 = sbr.rel (0) target = $region29
    $region28: #{tpu_custom_call.1} parent=1 // pred_region
      %s82 = ssub.s32 4096, 4096
      %83 = vsyncadd [#allocation10], %s82
      %s84 = sshll.u32 [#allocation11], 4
      %s85 = int_to_ptr.vmem [resolvable:$true] %s84
      %90 = dma.hbm_to_vmem [thread:$0]  %s6, 4096, %s85, [#allocation10], 256, 256, 16
    $region29: #{tpu_custom_call.1} parent=1 // pred_fallthru
      _
    // Predicated region
    $region30: #{tpu_custom_call.1} parent=1 // pred_check
      _
    $region31: #{tpu_custom_call.1} parent=1 // pred_check_branch
      %92 = sbr.rel (0) target = $region33
    $region32: #{tpu_custom_call.1} parent=1 // pred_region
      %s94 = ssub.s32 1024, 1024
      %95 = vsyncadd [#allocation13], %s94
      %s96 = sshll.u32 [#allocation12], 4
      %s97 = int_to_ptr.vmem [resolvable:$true] %s96
      %102 = dma.hbm_to_vmem [thread:$0]  %s7, 1024, %s97, [#allocation13], 64, 64, 4
    $region33: #{tpu_custom_call.1} parent=1 // pred_fallthru
      _
    // Predicated region
    $region34: #{tpu_custom_call.1} parent=1 // pred_check
      _
    $region35: #{tpu_custom_call.1} parent=1 // pred_check_branch
      %104 = sbr.rel (0) target = $region37
    $region36: #{tpu_custom_call.1} parent=1 // pred_region
      %s106 = ssub.s32 3072, 3072
      %107 = vsyncadd [#allocation13], %s106
      %s108 = sshll.u32 [#allocation14], 4
      %s109 = int_to_ptr.vmem [resolvable:$true] %s108
      %114 = dma.hbm_to_vmem [thread:$0]  %s8, 3072, %s109, [#allocation13], 192, 192, 12
    $region37: #{tpu_custom_call.1} parent=1 // pred_fallthru
      _
    // Predicated region
    $region38: #{tpu_custom_call.1} parent=1 // pred_check
      _
    $region39: #{tpu_custom_call.1} parent=1 // pred_check_branch
      %116 = sbr.rel (0) target = $region41
    $region40: #{tpu_custom_call.1} parent=1 // pred_region
      _
    $region41: #{tpu_custom_call.1} parent=1 // pred_fallthru
      _
    // Predicated region
    $region42: #{tpu_custom_call.1} parent=1 // pred_check
      _
    $region43: #{tpu_custom_call.1} parent=1 // pred_check_branch
      %118 = sbr.rel (0) target = $region45
    $region44: #{tpu_custom_call.1} parent=1 // pred_region
      _
    $region45: #{tpu_custom_call.1} parent=1 // pred_fallthru
      _
    // Predicated region
    $region46: #{tpu_custom_call.1} parent=1 // pred_check
      _
    $region47: #{tpu_custom_call.1} parent=1 // pred_check_branch
      %120 = sbr.rel (0) target = $region49
    $region48: #{tpu_custom_call.1} parent=1 // pred_region
      _
    $region49: #{tpu_custom_call.1} parent=1 // pred_fallthru
      _
    // Predicated region
    $region50: #{tpu_custom_call.1} parent=1 // pred_check
      _
    $region51: #{tpu_custom_call.1} parent=1 // pred_check_branch
      %122 = sbr.rel (0) target = $region53
    $region52: #{tpu_custom_call.1} parent=1 // pred_region
      %s124 = ssub.s32 1024, 1024
      %125 = vsyncadd [#allocation16], %s124
      %s126 = sshll.u32 [#allocation15], 4
      %s127 = int_to_ptr.vmem [resolvable:$true] %s126
      %132 = dma.hbm_to_vmem [thread:$0]  %s12, 1024, %s127, [#allocation16], 64, 64, 4
    $region53: #{tpu_custom_call.1} parent=1 // pred_fallthru
      _
    // Predicated region
    $region54: #{tpu_custom_call.1} parent=1 // pred_check
      _
    $region55: #{tpu_custom_call.1} parent=1 // pred_check_branch
      %134 = sbr.rel (0) target = $region57
    $region56: #{tpu_custom_call.1} parent=1 // pred_region
      _
    $region57: #{tpu_custom_call.1} parent=1 // pred_fallthru
      _
    // Predicated region
    $region58: #{tpu_custom_call.1} parent=1 // pred_check
      _
    $region59: #{tpu_custom_call.1} parent=1 // pred_check_branch
      %136 = sbr.rel (0) target = $region61
    $region60: #{tpu_custom_call.1} parent=1 // pred_region
      %137 = dma.done [#allocation4], 64
    $region61: #{tpu_custom_call.1} parent=1 // pred_fallthru
      _
    // Predicated region
    $region62: #{tpu_custom_call.1} parent=1 // pred_check
      _
    $region63: #{tpu_custom_call.1} parent=1 // pred_check_branch
      %139 = sbr.rel (0) target = $region65
    $region64: #{tpu_custom_call.1} parent=1 // pred_region
      %140 = dma.done [#allocation7], 1024
    $region65: #{tpu_custom_call.1} parent=1 // pred_fallthru
      _
    // Predicated region
    $region66: #{tpu_custom_call.1} parent=1 // pred_check
      _
    $region67: #{tpu_custom_call.1} parent=1 // pred_check_branch
      %142 = sbr.rel (0) target = $region69
    $region68: #{tpu_custom_call.1} parent=1 // pred_region
      %143 = dma.done [#allocation7], 1024
    $region69: #{tpu_custom_call.1} parent=1 // pred_fallthru
      _
    // Predicated region
    $region70: #{tpu_custom_call.1} parent=1 // pred_check
      _
    $region71: #{tpu_custom_call.1} parent=1 // pred_check_branch
      %145 = sbr.rel (0) target = $region73
    $region72: #{tpu_custom_call.1} parent=1 // pred_region
      %146 = dma.done [#allocation10], 2048
    $region73: #{tpu_custom_call.1} parent=1 // pred_fallthru
      _
    // Predicated region
    $region74: #{tpu_custom_call.1} parent=1 // pred_check
      _
    $region75: #{tpu_custom_call.1} parent=1 // pred_check_branch
      %148 = sbr.rel (0) target = $region77
    $region76: #{tpu_custom_call.1} parent=1 // pred_region
      %149 = dma.done [#allocation10], 4096
    $region77: #{tpu_custom_call.1} parent=1 // pred_fallthru
      _
    // Predicated region
    $region78: #{tpu_custom_call.1} parent=1 // pred_check
      _
    $region79: #{tpu_custom_call.1} parent=1 // pred_check_branch
      %151 = sbr.rel (0) target = $region81
    $region80: #{tpu_custom_call.1} parent=1 // pred_region
      %152 = dma.done [#allocation13], 1024
    $region81: #{tpu_custom_call.1} parent=1 // pred_fallthru
      _
    // Predicated region
    $region82: #{tpu_custom_call.1} parent=1 // pred_check
      _
    $region83: #{tpu_custom_call.1} parent=1 // pred_check_branch
      %154 = sbr.rel (0) target = $region85
    $region84: #{tpu_custom_call.1} parent=1 // pred_region
      %155 = dma.done [#allocation13], 3072
    $region85: #{tpu_custom_call.1} parent=1 // pred_fallthru
      _
    // Predicated region
    $region86: #{tpu_custom_call.1} parent=1 // pred_check
      _
    $region87: #{tpu_custom_call.1} parent=1 // pred_check_branch
      %157 = sbr.rel (0) target = $region89
    $region88: #{tpu_custom_call.1} parent=1 // pred_region
      %158 = dma.done [#allocation16], 1024
    $region89: #{tpu_custom_call.1} parent=1 // pred_fallthru
      _
    %v160 = vld [vmem:[#allocation3] sm:$0xf]
    %v161 = vld [vmem:[#allocation6] sm:$0xf]
    %v162 = vld [vmem:[#allocation6 + $0x4] sm:$0xf]
    %v163 = vld [vmem:[#allocation6 + $0x8] sm:$0xf]
    %v164 = vld [vmem:[#allocation6 + $0xc] sm:$0xf]
    %v165 = vld [vmem:[#allocation6 + $0x10] sm:$0xf]
    %v166 = vld [vmem:[#allocation6 + $0x14] sm:$0xf]
    %v167 = vld [vmem:[#allocation6 + $0x18] sm:$0xf]
    %v168 = vld [vmem:[#allocation6 + $0x1c] sm:$0xf]
    %v169 = vld [vmem:[#allocation6 + $0x20] sm:$0xf]
    %v170 = vld [vmem:[#allocation6 + $0x24] sm:$0xf]
    %v171 = vld [vmem:[#allocation6 + $0x28] sm:$0xf]
    %v172 = vld [vmem:[#allocation6 + $0x2c] sm:$0xf]
    %v173 = vld [vmem:[#allocation6 + $0x30] sm:$0xf]
    %v174 = vld [vmem:[#allocation6 + $0x34] sm:$0xf]
    %v175 = vld [vmem:[#allocation6 + $0x38] sm:$0xf]
    %v176 = vld [vmem:[#allocation6 + $0x3c] sm:$0xf]
    %v193 = vunpack.c.l.b16 %v161
    %v194 = vunpack.c.l.b16 %v162
    %v195 = vunpack.c.l.b16 %v163
    %v196 = vunpack.c.l.b16 %v164
    %v197 = vunpack.c.l.b16 %v165
    %v198 = vunpack.c.l.b16 %v166
    %v199 = vunpack.c.l.b16 %v167
    %v200 = vunpack.c.l.b16 %v168
    %v201 = vunpack.c.l.b16 %v169
    %v202 = vunpack.c.l.b16 %v170
    %v203 = vunpack.c.l.b16 %v171
    %v204 = vunpack.c.l.b16 %v172
    %v205 = vunpack.c.l.b16 %v173
    %v206 = vunpack.c.l.b16 %v174
    %v207 = vunpack.c.l.b16 %v175
    %v208 = vunpack.c.l.b16 %v176
    %v209 = vpack.c.b16 %v194, %v193
    %v210 = vpack.c.b16 %v196, %v195
    %v211 = vpack.c.b16 %v198, %v197
    %v212 = vpack.c.b16 %v200, %v199
    %v213 = vpack.c.b16 %v202, %v201
    %v214 = vpack.c.b16 %v204, %v203
    %v215 = vpack.c.b16 %v206, %v205
    %v216 = vpack.c.b16 %v208, %v207
    %225 = vmatprep.subr.bf16.mxu0 0
    %226 = vmatpush1.bf16.msra.mxu0 %v209
    %227 = vmatprep.subr.bf16.mxu0 0
    %228 = vmatpush1.bf16.msra.mxu0 %v210
    %229 = vmatprep.subr.bf16.mxu0 0
    %230 = vmatpush1.bf16.msra.mxu0 %v211
    %231 = vmatprep.subr.bf16.mxu0 0
    %232 = vmatpush1.bf16.msra.mxu0 %v212
    %233 = vmatprep.subr.bf16.mxu0 0
    %234 = vmatpush1.bf16.msra.mxu0 %v213
    %235 = vmatprep.subr.bf16.mxu0 0
    %236 = vmatpush1.bf16.msra.mxu0 %v214
    %237 = vmatprep.subr.bf16.mxu0 0
    %238 = vmatpush1.bf16.msra.mxu0 %v215
    %239 = vmatprep.subr.bf16.mxu0 0
    %240 = vmatpush1.bf16.msra.mxu0 %v216
    %241 = vmatprep.subr.bf16.mxu0 0
    %242 = vmatpush1.bf16.msra.mxu0 0
    %243 = vmatprep.subr.bf16.mxu0 0
    %244 = vmatpush1.bf16.msra.mxu0 0
    %245 = vmatprep.subr.bf16.mxu0 0
    %246 = vmatpush1.bf16.msra.mxu0 0
    %247 = vmatprep.subr.bf16.mxu0 0
    %248 = vmatpush1.bf16.msra.mxu0 0
    %249 = vmatprep.subr.bf16.mxu0 0
    %250 = vmatpush1.bf16.msra.mxu0 0
    %251 = vmatprep.subr.bf16.mxu0 0
    %252 = vmatpush1.bf16.msra.mxu0 0
    %253 = vmatprep.subr.bf16.mxu0 0
    %254 = vmatpush1.bf16.msra.mxu0 0
    %255 = vmatprep.subr.bf16.mxu0 0
    %256 = vmatpush1.bf16.msra.mxu0 0
    %257 = vmatprep.mubr.bf16.mxu0 0
    %258 = vmatmul.mubr.bf16.gmra.mrb[0].mxu0 %v160
    %v259 = vpop.f32.mrb[0].mxu0
    %v260 = vadd.f32 0.0, %v259
    %v261 = vpop.f32.mrb[0].mxu0
    %v262 = vpop.f32.mrb[0].mxu0
    %v263 = vpop.f32.mrb[0].mxu0
    %264 = vdwg.mxu0
    %v265 = vpack.c.bf16 %v260, %v260
    %v266 = vld [vmem:[#allocation9] sm:$0xff]
    %v267 = vld [vmem:[#allocation9 + $0x8] sm:$0xff]
    %v268 = vld [vmem:[#allocation9 + $0x10] sm:$0xff]
    %v269 = vld [vmem:[#allocation9 + $0x18] sm:$0xff]
    %v270 = vld [vmem:[#allocation9 + $0x20] sm:$0xff]
    %v271 = vld [vmem:[#allocation9 + $0x28] sm:$0xff]
    %v272 = vld [vmem:[#allocation9 + $0x30] sm:$0xff]
    %v273 = vld [vmem:[#allocation9 + $0x38] sm:$0xff]
    %v274 = vld [vmem:[#allocation9 + $0x40] sm:$0xff]
    %v275 = vld [vmem:[#allocation9 + $0x48] sm:$0xff]
    %v276 = vld [vmem:[#allocation9 + $0x50] sm:$0xff]
    %v277 = vld [vmem:[#allocation9 + $0x58] sm:$0xff]
    %v278 = vld [vmem:[#allocation9 + $0x60] sm:$0xff]
    %v279 = vld [vmem:[#allocation9 + $0x68] sm:$0xff]
    %v280 = vld [vmem:[#allocation9 + $0x70] sm:$0xff]
    %v281 = vld [vmem:[#allocation9 + $0x78] sm:$0xff]
    %v282 = vld [vmem:[%s5] sm:$0x3]
    %v284 = vlaneseq
    %v285 = vshrl.u32 %v284, 7
    %v286 = vsub.s32 0, %v285
    %v287 = vrot.slane %v282, %v286
    %v288 = vlaneseq
    %v289 = vshrl.u32 %v288, 7
    %v290 = vsub.s32 1, %v289
    %v291 = vrot.slane %v282, %v290
    %v310 = vunpack.c.l.b16 %v266
    %v311 = vunpack.c.h.b16 %v266
    %v312 = vunpack.c.l.b16 %v267
    %v313 = vunpack.c.h.b16 %v267
    %v314 = vunpack.c.l.b16 %v268
    %v315 = vunpack.c.h.b16 %v268
    %v316 = vunpack.c.l.b16 %v269
    %v317 = vunpack.c.h.b16 %v269
    %v318 = vunpack.c.l.b16 %v270
    %v319 = vunpack.c.h.b16 %v270
    %v320 = vunpack.c.l.b16 %v271
    %v321 = vunpack.c.h.b16 %v271
    %v322 = vunpack.c.l.b16 %v272
    %v323 = vunpack.c.h.b16 %v272
    %v324 = vunpack.c.l.b16 %v273
    %v325 = vunpack.c.h.b16 %v273
    %v326 = vunpack.c.l.b16 %v274
    %v327 = vunpack.c.h.b16 %v274
    %v328 = vunpack.c.l.b16 %v275
    %v329 = vunpack.c.h.b16 %v275
    %v330 = vunpack.c.l.b16 %v276
    %v331 = vunpack.c.h.b16 %v276
    %v332 = vunpack.c.l.b16 %v277
    %v333 = vunpack.c.h.b16 %v277
    %v334 = vunpack.c.l.b16 %v278
    %v335 = vunpack.c.h.b16 %v278
    %v336 = vunpack.c.l.b16 %v279
    %v337 = vunpack.c.h.b16 %v279
    %v338 = vunpack.c.l.b16 %v280
    %v339 = vunpack.c.h.b16 %v280
    %v340 = vunpack.c.l.b16 %v281
    %v341 = vunpack.c.h.b16 %v281
    %v342 = vpack.c.b16 %v312, %v310
    %v343 = vpack.c.b16 %v313, %v311
    %v344 = vpack.c.b16 %v316, %v314
    %v345 = vpack.c.b16 %v317, %v315
    %v346 = vpack.c.b16 %v320, %v318
    %v347 = vpack.c.b16 %v321, %v319
    %v348 = vpack.c.b16 %v324, %v322
    %v349 = vpack.c.b16 %v325, %v323
    %v350 = vpack.c.b16 %v328, %v326
    %v351 = vpack.c.b16 %v329, %v327
    %v352 = vpack.c.b16 %v332, %v330
    %v353 = vpack.c.b16 %v333, %v331
    %v354 = vpack.c.b16 %v336, %v334
    %v355 = vpack.c.b16 %v337, %v335
    %v356 = vpack.c.b16 %v340, %v338
    %v357 = vpack.c.b16 %v341, %v339
    %374 = vmatprep.subr.bf16.mxu0 %v343
    %375 = vmatpush1.bf16.msra.mxu0 %v342
    %376 = vmatprep.subr.bf16.mxu0 %v345
    %377 = vmatpush1.bf16.msra.mxu0 %v344
    %378 = vmatprep.subr.bf16.mxu0 %v347
    %379 = vmatpush1.bf16.msra.mxu0 %v346
    %380 = vmatprep.subr.bf16.mxu0 %v349
    %381 = vmatpush1.bf16.msra.mxu0 %v348
    %382 = vmatprep.subr.bf16.mxu0 %v351
    %383 = vmatpush1.bf16.msra.mxu0 %v350
    %384 = vmatprep.subr.bf16.mxu0 %v353
    %385 = vmatpush1.bf16.msra.mxu0 %v352
    %386 = vmatprep.subr.bf16.mxu0 %v355
    %387 = vmatpush1.bf16.msra.mxu0 %v354
    %388 = vmatprep.subr.bf16.mxu0 %v357
    %389 = vmatpush1.bf16.msra.mxu0 %v356
    %390 = vmatprep.subr.bf16.mxu0 0
    %391 = vmatpush1.bf16.msra.mxu0 0
    %392 = vmatprep.subr.bf16.mxu0 0
    %393 = vmatpush1.bf16.msra.mxu0 0
    %394 = vmatprep.subr.bf16.mxu0 0
    %395 = vmatpush1.bf16.msra.mxu0 0
    %396 = vmatprep.subr.bf16.mxu0 0
    %397 = vmatpush1.bf16.msra.mxu0 0
    %398 = vmatprep.subr.bf16.mxu0 0
    %399 = vmatpush1.bf16.msra.mxu0 0
    %400 = vmatprep.subr.bf16.mxu0 0
    %401 = vmatpush1.bf16.msra.mxu0 0
    %402 = vmatprep.subr.bf16.mxu0 0
    %403 = vmatpush1.bf16.msra.mxu0 0
    %404 = vmatprep.subr.bf16.mxu0 0
    %405 = vmatpush1.bf16.msra.mxu0 0
    %406 = vmatprep.mubr.bf16.mxu0 0
    %407 = vmatmul.mubr.bf16.gmra.mrb[0].mxu0 %v265
    %v408 = vpop.f32.mrb[0].mxu0
    %v409 = vadd.f32 %v287, %v408
    %v410 = vpop.f32.mrb[0].mxu0
    %v411 = vadd.f32 %v291, %v410
    %v412 = vpop.f32.mrb[0].mxu0
    %v413 = vpop.f32.mrb[0].mxu0
    %414 = vdwg.mxu0
    %v415 = vld [vmem:[#allocation8] sm:$0xf]
    %v416 = vld [vmem:[#allocation8 + $0x4] sm:$0xf]
    %v417 = vld [vmem:[#allocation8 + $0x8] sm:$0xf]
    %v418 = vld [vmem:[#allocation8 + $0xc] sm:$0xf]
    %v419 = vld [vmem:[#allocation8 + $0x10] sm:$0xf]
    %v420 = vld [vmem:[#allocation8 + $0x14] sm:$0xf]
    %v421 = vld [vmem:[#allocation8 + $0x18] sm:$0xf]
    %v422 = vld [vmem:[#allocation8 + $0x1c] sm:$0xf]
    %v423 = vld [vmem:[#allocation8 + $0x20] sm:$0xf]
    %v424 = vld [vmem:[#allocation8 + $0x24] sm:$0xf]
    %v425 = vld [vmem:[#allocation8 + $0x28] sm:$0xf]
    %v426 = vld [vmem:[#allocation8 + $0x2c] sm:$0xf]
    %v427 = vld [vmem:[#allocation8 + $0x30] sm:$0xf]
    %v428 = vld [vmem:[#allocation8 + $0x34] sm:$0xf]
    %v429 = vld [vmem:[#allocation8 + $0x38] sm:$0xf]
    %v430 = vld [vmem:[#allocation8 + $0x3c] sm:$0xf]
    %v431 = vld [vmem:[#allocation11] sm:$0xff]
    %v432 = vld [vmem:[#allocation11 + $0x8] sm:$0xff]
    %v433 = vld [vmem:[#allocation11 + $0x10] sm:$0xff]
    %v434 = vld [vmem:[#allocation11 + $0x18] sm:$0xff]
    %v435 = vld [vmem:[#allocation11 + $0x20] sm:$0xff]
    %v436 = vld [vmem:[#allocation11 + $0x28] sm:$0xff]
    %v437 = vld [vmem:[#allocation11 + $0x30] sm:$0xff]
    %v438 = vld [vmem:[#allocation11 + $0x38] sm:$0xff]
    %v439 = vld [vmem:[#allocation11 + $0x40] sm:$0xff]
    %v440 = vld [vmem:[#allocation11 + $0x48] sm:$0xff]
    %v441 = vld [vmem:[#allocation11 + $0x50] sm:$0xff]
    %v442 = vld [vmem:[#allocation11 + $0x58] sm:$0xff]
    %v443 = vld [vmem:[#allocation11 + $0x60] sm:$0xff]
    %v444 = vld [vmem:[#allocation11 + $0x68] sm:$0xff]
    %v445 = vld [vmem:[#allocation11 + $0x70] sm:$0xff]
    %v446 = vld [vmem:[#allocation11 + $0x78] sm:$0xff]
    %v447 = vld [vmem:[#allocation11 + $0x80] sm:$0xff]
    %v448 = vld [vmem:[#allocation11 + $0x88] sm:$0xff]
    %v449 = vld [vmem:[#allocation11 + $0x90] sm:$0xff]
    %v450 = vld [vmem:[#allocation11 + $0x98] sm:$0xff]
    %v451 = vld [vmem:[#allocation11 + $0xa0] sm:$0xff]
    %v452 = vld [vmem:[#allocation11 + $0xa8] sm:$0xff]
    %v453 = vld [vmem:[#allocation11 + $0xb0] sm:$0xff]
    %v454 = vld [vmem:[#allocation11 + $0xb8] sm:$0xff]
    %v455 = vld [vmem:[#allocation11 + $0xc0] sm:$0xff]
    %v456 = vld [vmem:[#allocation11 + $0xc8] sm:$0xff]
    %v457 = vld [vmem:[#allocation11 + $0xd0] sm:$0xff]
    %v458 = vld [vmem:[#allocation11 + $0xd8] sm:$0xff]
    %v459 = vld [vmem:[#allocation11 + $0xe0] sm:$0xff]
    %v460 = vld [vmem:[#allocation11 + $0xe8] sm:$0xff]
    %v461 = vld [vmem:[#allocation11 + $0xf0] sm:$0xff]
    %v462 = vld [vmem:[#allocation11 + $0xf8] sm:$0xff]
    %v463 = vld [vmem:[#allocation12] sm:$0xf]
    %v464 = vld [vmem:[#allocation12 + $0x4] sm:$0xf]
    %v465 = vld [vmem:[#allocation12 + $0x8] sm:$0xf]
    %v466 = vld [vmem:[#allocation12 + $0xc] sm:$0xf]
    %v467 = vld [vmem:[#allocation12 + $0x10] sm:$0xf]
    %v468 = vld [vmem:[#allocation12 + $0x14] sm:$0xf]
    %v469 = vld [vmem:[#allocation12 + $0x18] sm:$0xf]
    %v470 = vld [vmem:[#allocation12 + $0x1c] sm:$0xf]
    %v471 = vld [vmem:[#allocation12 + $0x20] sm:$0xf]
    %v472 = vld [vmem:[#allocation12 + $0x24] sm:$0xf]
    %v473 = vld [vmem:[#allocation12 + $0x28] sm:$0xf]
    %v474 = vld [vmem:[#allocation12 + $0x2c] sm:$0xf]
    %v475 = vld [vmem:[#allocation12 + $0x30] sm:$0xf]
    %v476 = vld [vmem:[#allocation12 + $0x34] sm:$0xf]
    %v477 = vld [vmem:[#allocation12 + $0x38] sm:$0xf]
    %v478 = vld [vmem:[#allocation12 + $0x3c] sm:$0xf]
    %v479 = vld [vmem:[#allocation14] sm:$0xff]
    %v480 = vld [vmem:[#allocation14 + $0x8] sm:$0xf]
    %v481 = vld [vmem:[#allocation14 + $0xc] sm:$0xff]
    %v482 = vld [vmem:[#allocation14 + $0x14] sm:$0xf]
    %v483 = vld [vmem:[#allocation14 + $0x18] sm:$0xff]
    %v484 = vld [vmem:[#allocation14 + $0x20] sm:$0xf]
    %v485 = vld [vmem:[#allocation14 + $0x24] sm:$0xff]
    %v486 = vld [vmem:[#allocation14 + $0x2c] sm:$0xf]
    %v487 = vld [vmem:[#allocation14 + $0x30] sm:$0xff]
    %v488 = vld [vmem:[#allocation14 + $0x38] sm:$0xf]
    %v489 = vld [vmem:[#allocation14 + $0x3c] sm:$0xff]
    %v490 = vld [vmem:[#allocation14 + $0x44] sm:$0xf]
    %v491 = vld [vmem:[#allocation14 + $0x48] sm:$0xff]
    %v492 = vld [vmem:[#allocation14 + $0x50] sm:$0xf]
    %v493 = vld [vmem:[#allocation14 + $0x54] sm:$0xff]
    %v494 = vld [vmem:[#allocation14 + $0x5c] sm:$0xf]
    %v495 = vld [vmem:[#allocation14 + $0x60] sm:$0xff]
    %v496 = vld [vmem:[#allocation14 + $0x68] sm:$0xf]
    %v497 = vld [vmem:[#allocation14 + $0x6c] sm:$0xff]
    %v498 = vld [vmem:[#allocation14 + $0x74] sm:$0xf]
    %v499 = vld [vmem:[#allocation14 + $0x78] sm:$0xff]
    %v500 = vld [vmem:[#allocation14 + $0x80] sm:$0xf]
    %v501 = vld [vmem:[#allocation14 + $0x84] sm:$0xff]
    %v502 = vld [vmem:[#allocation14 + $0x8c] sm:$0xf]
    %v503 = vld [vmem:[#allocation14 + $0x90] sm:$0xff]
    %v504 = vld [vmem:[#allocation14 + $0x98] sm:$0xf]
    %v505 = vld [vmem:[#allocation14 + $0x9c] sm:$0xff]
    %v506 = vld [vmem:[#allocation14 + $0xa4] sm:$0xf]
    %v507 = vld [vmem:[#allocation14 + $0xa8] sm:$0xff]
    %v508 = vld [vmem:[#allocation14 + $0xb0] sm:$0xf]
    %v509 = vld [vmem:[#allocation14 + $0xb4] sm:$0xff]
    %v510 = vld [vmem:[#allocation14 + $0xbc] sm:$0xf]
    %v511 = vld [vmem:[%s9] sm:$0x3]
    %v512 = vld [vmem:[%s10] sm:$0x1]
    %v513 = vld [vmem:[%s11] sm:$0x1]
    %v514 = vld [vmem:[%s2] sm:$0x1]
    %v515 = vpack.c.bf16 %v514, %v514
    %v548 = vunpack.c.l.b16 %v431
    %v549 = vunpack.c.h.b16 %v431
    %v550 = vunpack.c.l.b16 %v432
    %v551 = vunpack.c.h.b16 %v432
    %v552 = vunpack.c.l.b16 %v433
    %v553 = vunpack.c.h.b16 %v433
    %v554 = vunpack.c.l.b16 %v434
    %v555 = vunpack.c.h.b16 %v434
    %v556 = vunpack.c.l.b16 %v435
    %v557 = vunpack.c.h.b16 %v435
    %v558 = vunpack.c.l.b16 %v436
    %v559 = vunpack.c.h.b16 %v436
    %v560 = vunpack.c.l.b16 %v437
    %v561 = vunpack.c.h.b16 %v437
    %v562 = vunpack.c.l.b16 %v438
    %v563 = vunpack.c.h.b16 %v438
    %v564 = vunpack.c.l.b16 %v439
    %v565 = vunpack.c.h.b16 %v439
    %v566 = vunpack.c.l.b16 %v440
    %v567 = vunpack.c.h.b16 %v440
    %v568 = vunpack.c.l.b16 %v441
    %v569 = vunpack.c.h.b16 %v441
    %v570 = vunpack.c.l.b16 %v442
    %v571 = vunpack.c.h.b16 %v442
    %v572 = vunpack.c.l.b16 %v443
    %v573 = vunpack.c.h.b16 %v443
    %v574 = vunpack.c.l.b16 %v444
    %v575 = vunpack.c.h.b16 %v444
    %v576 = vunpack.c.l.b16 %v445
    %v577 = vunpack.c.h.b16 %v445
    %v578 = vunpack.c.l.b16 %v446
    %v579 = vunpack.c.h.b16 %v446
    %v580 = vunpack.c.l.b16 %v447
    %v581 = vunpack.c.h.b16 %v447
    %v582 = vunpack.c.l.b16 %v448
    %v583 = vunpack.c.h.b16 %v448
    %v584 = vunpack.c.l.b16 %v449
    %v585 = vunpack.c.h.b16 %v449
    %v586 = vunpack.c.l.b16 %v450
    %v587 = vunpack.c.h.b16 %v450
    %v588 = vunpack.c.l.b16 %v451
    %v589 = vunpack.c.h.b16 %v451
    %v590 = vunpack.c.l.b16 %v452
    %v591 = vunpack.c.h.b16 %v452
    %v592 = vunpack.c.l.b16 %v453
    %v593 = vunpack.c.h.b16 %v453
    %v594 = vunpack.c.l.b16 %v454
    %v595 = vunpack.c.h.b16 %v454
    %v596 = vunpack.c.l.b16 %v455
    %v597 = vunpack.c.h.b16 %v455
    %v598 = vunpack.c.l.b16 %v456
    %v599 = vunpack.c.h.b16 %v456
    %v600 = vunpack.c.l.b16 %v457
    %v601 = vunpack.c.h.b16 %v457
    %v602 = vunpack.c.l.b16 %v458
    %v603 = vunpack.c.h.b16 %v458
    %v604 = vunpack.c.l.b16 %v459
    %v605 = vunpack.c.h.b16 %v459
    %v606 = vunpack.c.l.b16 %v460
    %v607 = vunpack.c.h.b16 %v460
    %v608 = vunpack.c.l.b16 %v461
    %v609 = vunpack.c.h.b16 %v461
    %v610 = vunpack.c.l.b16 %v462
    %v611 = vunpack.c.h.b16 %v462
    %v612 = vpack.c.b16 %v552, %v548
    %v613 = vpack.c.b16 %v553, %v549
    %v614 = vpack.c.b16 %v554, %v550
    %v615 = vpack.c.b16 %v555, %v551
    %v616 = vpack.c.b16 %v560, %v556
    %v617 = vpack.c.b16 %v561, %v557
    %v618 = vpack.c.b16 %v562, %v558
    %v619 = vpack.c.b16 %v563, %v559
    %v620 = vpack.c.b16 %v568, %v564
    %v621 = vpack.c.b16 %v569, %v565
    %v622 = vpack.c.b16 %v570, %v566
    %v623 = vpack.c.b16 %v571, %v567
    %v624 = vpack.c.b16 %v576, %v572
    %v625 = vpack.c.b16 %v577, %v573
    %v626 = vpack.c.b16 %v578, %v574
    %v627 = vpack.c.b16 %v579, %v575
    %v628 = vpack.c.b16 %v584, %v580
    %v629 = vpack.c.b16 %v585, %v581
    %v630 = vpack.c.b16 %v586, %v582
    %v631 = vpack.c.b16 %v587, %v583
    %v632 = vpack.c.b16 %v592, %v588
    %v633 = vpack.c.b16 %v593, %v589
    %v634 = vpack.c.b16 %v594, %v590
    %v635 = vpack.c.b16 %v595, %v591
    %v636 = vpack.c.b16 %v600, %v596
    %v637 = vpack.c.b16 %v601, %v597
    %v638 = vpack.c.b16 %v602, %v598
    %v639 = vpack.c.b16 %v603, %v599
    %v640 = vpack.c.b16 %v608, %v604
    %v641 = vpack.c.b16 %v609, %v605
    %v642 = vpack.c.b16 %v610, %v606
    %v643 = vpack.c.b16 %v611, %v607
    %676 = vmatprep.subr.bf16.mxu0 %v613
    %677 = vmatpush1.bf16.msra.mxu0 %v612
    %678 = vmatprep.subr.bf16.mxu0 %v617
    %679 = vmatpush1.bf16.msra.mxu0 %v616
    %680 = vmatprep.subr.bf16.mxu0 %v621
    %681 = vmatpush1.bf16.msra.mxu0 %v620
    %682 = vmatprep.subr.bf16.mxu0 %v625
    %683 = vmatpush1.bf16.msra.mxu0 %v624
    %684 = vmatprep.subr.bf16.mxu0 %v629
    %685 = vmatpush1.bf16.msra.mxu0 %v628
    %686 = vmatprep.subr.bf16.mxu0 %v633
    %687 = vmatpush1.bf16.msra.mxu0 %v632
    %688 = vmatprep.subr.bf16.mxu0 %v637
    %689 = vmatpush1.bf16.msra.mxu0 %v636
    %690 = vmatprep.subr.bf16.mxu0 %v641
    %691 = vmatpush1.bf16.msra.mxu0 %v640
    %692 = vmatprep.subr.bf16.mxu0 0
    %693 = vmatpush1.bf16.msra.mxu0 0
    %694 = vmatprep.subr.bf16.mxu0 0
    %695 = vmatpush1.bf16.msra.mxu0 0
    %696 = vmatprep.subr.bf16.mxu0 0
    %697 = vmatpush1.bf16.msra.mxu0 0
    %698 = vmatprep.subr.bf16.mxu0 0
    %699 = vmatpush1.bf16.msra.mxu0 0
    %700 = vmatprep.subr.bf16.mxu0 0
    %701 = vmatpush1.bf16.msra.mxu0 0
    %702 = vmatprep.subr.bf16.mxu0 0
    %703 = vmatpush1.bf16.msra.mxu0 0
    %704 = vmatprep.subr.bf16.mxu0 0
    %705 = vmatpush1.bf16.msra.mxu0 0
    %706 = vmatprep.subr.bf16.mxu0 0
    %707 = vmatpush1.bf16.msra.mxu0 0
    %708 = vmatprep.mubr.bf16.mxu0 0
    %709 = vmatmul.mubr.bf16.gmra.mrb[0].mxu0 %v515
    %v710 = vpop.f32.mrb[0].mxu0
    %v711 = vadd.f32 0.0, %v710
    %v712 = vpop.f32.mrb[0].mxu0
    %v713 = vadd.f32 0.0, %v712
    %v714 = vpop.f32.mrb[0].mxu0
    %v715 = vpop.f32.mrb[0].mxu0
    %716 = vdwg.mxu0
    %717 = vmatprep.subr.bf16.mxu0 %v615
    %718 = vmatpush1.bf16.msra.mxu0 %v614
    %719 = vmatprep.subr.bf16.mxu0 %v619
    %720 = vmatpush1.bf16.msra.mxu0 %v618
    %721 = vmatprep.subr.bf16.mxu0 %v623
    %722 = vmatpush1.bf16.msra.mxu0 %v622
    %723 = vmatprep.subr.bf16.mxu0 %v627
    %724 = vmatpush1.bf16.msra.mxu0 %v626
    %725 = vmatprep.subr.bf16.mxu0 %v631
    %726 = vmatpush1.bf16.msra.mxu0 %v630
    %727 = vmatprep.subr.bf16.mxu0 %v635
    %728 = vmatpush1.bf16.msra.mxu0 %v634
    %729 = vmatprep.subr.bf16.mxu0 %v639
    %730 = vmatpush1.bf16.msra.mxu0 %v638
    %731 = vmatprep.subr.bf16.mxu0 %v643
    %732 = vmatpush1.bf16.msra.mxu0 %v642
    %733 = vmatprep.subr.bf16.mxu0 0
    %734 = vmatpush1.bf16.msra.mxu0 0
    %735 = vmatprep.subr.bf16.mxu0 0
    %736 = vmatpush1.bf16.msra.mxu0 0
    %737 = vmatprep.subr.bf16.mxu0 0
    %738 = vmatpush1.bf16.msra.mxu0 0
    %739 = vmatprep.subr.bf16.mxu0 0
    %740 = vmatpush1.bf16.msra.mxu0 0
    %741 = vmatprep.subr.bf16.mxu0 0
    %742 = vmatpush1.bf16.msra.mxu0 0
    %743 = vmatprep.subr.bf16.mxu0 0
    %744 = vmatpush1.bf16.msra.mxu0 0
    %745 = vmatprep.subr.bf16.mxu0 0
    %746 = vmatpush1.bf16.msra.mxu0 0
    %747 = vmatprep.subr.bf16.mxu0 0
    %748 = vmatpush1.bf16.msra.mxu0 0
    %749 = vmatprep.mubr.bf16.mxu0 0
    %750 = vmatmul.mubr.bf16.gmra.mrb[0].mxu0 %v515
    %v751 = vpop.f32.mrb[0].mxu0
    %v752 = vadd.f32 0.0, %v751
    %v753 = vpop.f32.mrb[0].mxu0
    %v754 = vadd.f32 0.0, %v753
    %v755 = vpop.f32.mrb[0].mxu0
    %v756 = vpop.f32.mrb[0].mxu0
    %757 = vdwg.mxu0
    %v758 = vadd.f32 %v409, %v711
    %vm759 = vcmask 1040384
    %v760 = vsel %vm759, %v758, -inf
    %761 = vmax.xlane.f32.xlu0 %v760
    %v762 = vpop.xlane.xlu0 %761
    %v763 = vsub.f32 %v758, %v762
    %v764 = vmul.f32 %v763, 1.442695
    %v765 = vpow.pop %v764
    %v766 = vsel %vm759, %v765, 0.0
    %767 = vadd.xlane.f32.xlu0 %v766
    %v768 = vpop.xlane.xlu0 %767
    %v769 = vrcp.pop %v768
    %v770 = vmul.f32 %v765, %v769
    %771 = vst [vmem:[#allocation20] sm:$0x1] %v770
    %v772 = vpack.c.bf16 %v770, %v770
    %v789 = vunpack.c.l.b16 %v415
    %v790 = vunpack.c.l.b16 %v416
    %v791 = vunpack.c.l.b16 %v417
    %v792 = vunpack.c.l.b16 %v418
    %v793 = vunpack.c.l.b16 %v419
    %v794 = vunpack.c.l.b16 %v420
    %v795 = vunpack.c.l.b16 %v421
    %v796 = vunpack.c.l.b16 %v422
    %v797 = vunpack.c.l.b16 %v423
    %v798 = vunpack.c.l.b16 %v424
    %v799 = vunpack.c.l.b16 %v425
    %v800 = vunpack.c.l.b16 %v426
    %v801 = vunpack.c.l.b16 %v427
    %v802 = vunpack.c.l.b16 %v428
    %v803 = vunpack.c.l.b16 %v429
    %v804 = vunpack.c.l.b16 %v430
    %v805 = vpack.c.b16 %v790, %v789
    %v806 = vpack.c.b16 %v792, %v791
    %v807 = vpack.c.b16 %v794, %v793
    %v808 = vpack.c.b16 %v796, %v795
    %v809 = vpack.c.b16 %v798, %v797
    %v810 = vpack.c.b16 %v800, %v799
    %v811 = vpack.c.b16 %v802, %v801
    %v812 = vpack.c.b16 %v804, %v803
    %821 = vmatprep.subr.bf16.mxu0 0
    %822 = vmatpush1.bf16.msra.mxu0 %v805
    %823 = vmatprep.subr.bf16.mxu0 0
    %824 = vmatpush1.bf16.msra.mxu0 %v806
    %825 = vmatprep.subr.bf16.mxu0 0
    %826 = vmatpush1.bf16.msra.mxu0 %v807
    %827 = vmatprep.subr.bf16.mxu0 0
    %828 = vmatpush1.bf16.msra.mxu0 %v808
    %829 = vmatprep.subr.bf16.mxu0 0
    %830 = vmatpush1.bf16.msra.mxu0 %v809
    %831 = vmatprep.subr.bf16.mxu0 0
    %832 = vmatpush1.bf16.msra.mxu0 %v810
    %833 = vmatprep.subr.bf16.mxu0 0
    %834 = vmatpush1.bf16.msra.mxu0 %v811
    %835 = vmatprep.subr.bf16.mxu0 0
    %836 = vmatpush1.bf16.msra.mxu0 %v812
    %837 = vmatprep.subr.bf16.mxu0 0
    %838 = vmatpush1.bf16.msra.mxu0 0
    %839 = vmatprep.subr.bf16.mxu0 0
    %840 = vmatpush1.bf16.msra.mxu0 0
    %841 = vmatprep.subr.bf16.mxu0 0
    %842 = vmatpush1.bf16.msra.mxu0 0
    %843 = vmatprep.subr.bf16.mxu0 0
    %844 = vmatpush1.bf16.msra.mxu0 0
    %845 = vmatprep.subr.bf16.mxu0 0
    %846 = vmatpush1.bf16.msra.mxu0 0
    %847 = vmatprep.subr.bf16.mxu0 0
    %848 = vmatpush1.bf16.msra.mxu0 0
    %849 = vmatprep.subr.bf16.mxu0 0
    %850 = vmatpush1.bf16.msra.mxu0 0
    %851 = vmatprep.subr.bf16.mxu0 0
    %852 = vmatpush1.bf16.msra.mxu0 0
    %853 = vmatprep.mubr.bf16.mxu0 0
    %854 = vmatmul.mubr.bf16.gmra.mrb[0].mxu0 %v772
    %v855 = vpop.f32.mrb[0].mxu0
    %v856 = vadd.f32 0.0, %v855
    %v857 = vpop.f32.mrb[0].mxu0
    %v858 = vpop.f32.mrb[0].mxu0
    %v859 = vpop.f32.mrb[0].mxu0
    %860 = vdwg.mxu0
    %v861 = vpack.c.bf16 %v856, %v856
    %v878 = vunpack.c.l.b16 %v463
    %v879 = vunpack.c.l.b16 %v464
    %v880 = vunpack.c.l.b16 %v465
    %v881 = vunpack.c.l.b16 %v466
    %v882 = vunpack.c.l.b16 %v467
    %v883 = vunpack.c.l.b16 %v468
    %v884 = vunpack.c.l.b16 %v469
    %v885 = vunpack.c.l.b16 %v470
    %v886 = vunpack.c.l.b16 %v471
    %v887 = vunpack.c.l.b16 %v472
    %v888 = vunpack.c.l.b16 %v473
    %v889 = vunpack.c.l.b16 %v474
    %v890 = vunpack.c.l.b16 %v475
    %v891 = vunpack.c.l.b16 %v476
    %v892 = vunpack.c.l.b16 %v477
    %v893 = vunpack.c.l.b16 %v478
    %v894 = vpack.c.b16 %v879, %v878
    %v895 = vpack.c.b16 %v881, %v880
    %v896 = vpack.c.b16 %v883, %v882
    %v897 = vpack.c.b16 %v885, %v884
    %v898 = vpack.c.b16 %v887, %v886
    %v899 = vpack.c.b16 %v889, %v888
    %v900 = vpack.c.b16 %v891, %v890
    %v901 = vpack.c.b16 %v893, %v892
    %910 = vmatprep.subr.bf16.mxu0 0
    %911 = vmatpush1.bf16.msra.mxu0 %v894
    %912 = vmatprep.subr.bf16.mxu0 0
    %913 = vmatpush1.bf16.msra.mxu0 %v895
    %914 = vmatprep.subr.bf16.mxu0 0
    %915 = vmatpush1.bf16.msra.mxu0 %v896
    %916 = vmatprep.subr.bf16.mxu0 0
    %917 = vmatpush1.bf16.msra.mxu0 %v897
    %918 = vmatprep.subr.bf16.mxu0 0
    %919 = vmatpush1.bf16.msra.mxu0 %v898
    %920 = vmatprep.subr.bf16.mxu0 0
    %921 = vmatpush1.bf16.msra.mxu0 %v899
    %922 = vmatprep.subr.bf16.mxu0 0
    %923 = vmatpush1.bf16.msra.mxu0 %v900
    %924 = vmatprep.subr.bf16.mxu0 0
    %925 = vmatpush1.bf16.msra.mxu0 %v901
    %926 = vmatprep.subr.bf16.mxu0 0
    %927 = vmatpush1.bf16.msra.mxu0 0
    %928 = vmatprep.subr.bf16.mxu0 0
    %929 = vmatpush1.bf16.msra.mxu0 0
    %930 = vmatprep.subr.bf16.mxu0 0
    %931 = vmatpush1.bf16.msra.mxu0 0
    %932 = vmatprep.subr.bf16.mxu0 0
    %933 = vmatpush1.bf16.msra.mxu0 0
    %934 = vmatprep.subr.bf16.mxu0 0
    %935 = vmatpush1.bf16.msra.mxu0 0
    %936 = vmatprep.subr.bf16.mxu0 0
    %937 = vmatpush1.bf16.msra.mxu0 0
    %938 = vmatprep.subr.bf16.mxu0 0
    %939 = vmatpush1.bf16.msra.mxu0 0
    %940 = vmatprep.subr.bf16.mxu0 0
    %941 = vmatpush1.bf16.msra.mxu0 0
    %942 = vmatprep.mubr.bf16.mxu0 0
    %943 = vmatmul.mubr.bf16.gmra.mrb[0].mxu0 %v861
    %v944 = vpop.f32.mrb[0].mxu0
    %v945 = vadd.f32 0.0, %v944
    %v946 = vpop.f32.mrb[0].mxu0
    %v947 = vpop.f32.mrb[0].mxu0
    %v948 = vpop.f32.mrb[0].mxu0
    %949 = vdwg.mxu0
    %v950 = vadd.f32 %v411, %v945
    %v951 = vmax.f32 %v950, 0.0
    %v952 = vpack.c.bf16 %v951, %v951
    %v985 = vunpack.c.l.b16 %v479
    %v986 = vunpack.c.h.b16 %v479
    %v987 = vunpack.c.l.b16 %v480
    %v988 = vunpack.c.l.b16 %v481
    %v989 = vunpack.c.h.b16 %v481
    %v990 = vunpack.c.l.b16 %v482
    %v991 = vunpack.c.l.b16 %v483
    %v992 = vunpack.c.h.b16 %v483
    %v993 = vunpack.c.l.b16 %v484
    %v994 = vunpack.c.l.b16 %v485
    %v995 = vunpack.c.h.b16 %v485
    %v996 = vunpack.c.l.b16 %v486
    %v997 = vunpack.c.l.b16 %v487
    %v998 = vunpack.c.h.b16 %v487
    %v999 = vunpack.c.l.b16 %v488
    %v1000 = vunpack.c.l.b16 %v489
    %v1001 = vunpack.c.h.b16 %v489
    %v1002 = vunpack.c.l.b16 %v490
    %v1003 = vunpack.c.l.b16 %v491
    %v1004 = vunpack.c.h.b16 %v491
    %v1005 = vunpack.c.l.b16 %v492
    %v1006 = vunpack.c.l.b16 %v493
    %v1007 = vunpack.c.h.b16 %v493
    %v1008 = vunpack.c.l.b16 %v494
    %v1009 = vunpack.c.l.b16 %v495
    %v1010 = vunpack.c.h.b16 %v495
    %v1011 = vunpack.c.l.b16 %v496
    %v1012 = vunpack.c.l.b16 %v497
    %v1013 = vunpack.c.h.b16 %v497
    %v1014 = vunpack.c.l.b16 %v498
    %v1015 = vunpack.c.l.b16 %v499
    %v1016 = vunpack.c.h.b16 %v499
    %v1017 = vunpack.c.l.b16 %v500
    %v1018 = vunpack.c.l.b16 %v501
    %v1019 = vunpack.c.h.b16 %v501
    %v1020 = vunpack.c.l.b16 %v502
    %v1021 = vunpack.c.l.b16 %v503
    %v1022 = vunpack.c.h.b16 %v503
    %v1023 = vunpack.c.l.b16 %v504
    %v1024 = vunpack.c.l.b16 %v505
    %v1025 = vunpack.c.h.b16 %v505
    %v1026 = vunpack.c.l.b16 %v506
    %v1027 = vunpack.c.l.b16 %v507
    %v1028 = vunpack.c.h.b16 %v507
    %v1029 = vunpack.c.l.b16 %v508
    %v1030 = vunpack.c.l.b16 %v509
    %v1031 = vunpack.c.h.b16 %v509
    %v1032 = vunpack.c.l.b16 %v510
    %v1033 = vpack.c.b16 %v988, %v985
    %v1034 = vpack.c.b16 %v989, %v986
    %v1035 = vpack.c.b16 %v990, %v987
    %v1036 = vpack.c.b16 %v994, %v991
    %v1037 = vpack.c.b16 %v995, %v992
    %v1038 = vpack.c.b16 %v996, %v993
    %v1039 = vpack.c.b16 %v1000, %v997
    %v1040 = vpack.c.b16 %v1001, %v998
    %v1041 = vpack.c.b16 %v1002, %v999
    %v1042 = vpack.c.b16 %v1006, %v1003
    %v1043 = vpack.c.b16 %v1007, %v1004
    %v1044 = vpack.c.b16 %v1008, %v1005
    %v1045 = vpack.c.b16 %v1012, %v1009
    %v1046 = vpack.c.b16 %v1013, %v1010
    %v1047 = vpack.c.b16 %v1014, %v1011
    %v1048 = vpack.c.b16 %v1018, %v1015
    %v1049 = vpack.c.b16 %v1019, %v1016
    %v1050 = vpack.c.b16 %v1020, %v1017
    %v1051 = vpack.c.b16 %v1024, %v1021
    %v1052 = vpack.c.b16 %v1025, %v1022
    %v1053 = vpack.c.b16 %v1026, %v1023
    %v1054 = vpack.c.b16 %v1030, %v1027
    %v1055 = vpack.c.b16 %v1031, %v1028
    %v1056 = vpack.c.b16 %v1032, %v1029
    %1081 = vmatprep.subr.bf16.mxu0 %v1034
    %1082 = vmatpush1.bf16.msra.mxu0 %v1033
    %1083 = vmatprep.subr.bf16.mxu0 %v1037
    %1084 = vmatpush1.bf16.msra.mxu0 %v1036
    %1085 = vmatprep.subr.bf16.mxu0 %v1040
    %1086 = vmatpush1.bf16.msra.mxu0 %v1039
    %1087 = vmatprep.subr.bf16.mxu0 %v1043
    %1088 = vmatpush1.bf16.msra.mxu0 %v1042
    %1089 = vmatprep.subr.bf16.mxu0 %v1046
    %1090 = vmatpush1.bf16.msra.mxu0 %v1045
    %1091 = vmatprep.subr.bf16.mxu0 %v1049
    %1092 = vmatpush1.bf16.msra.mxu0 %v1048
    %1093 = vmatprep.subr.bf16.mxu0 %v1052
    %1094 = vmatpush1.bf16.msra.mxu0 %v1051
    %1095 = vmatprep.subr.bf16.mxu0 %v1055
    %1096 = vmatpush1.bf16.msra.mxu0 %v1054
    %1097 = vmatprep.subr.bf16.mxu0 0
    %1098 = vmatpush1.bf16.msra.mxu0 0
    %1099 = vmatprep.subr.bf16.mxu0 0
    %1100 = vmatpush1.bf16.msra.mxu0 0
    %1101 = vmatprep.subr.bf16.mxu0 0
    %1102 = vmatpush1.bf16.msra.mxu0 0
    %1103 = vmatprep.subr.bf16.mxu0 0
    %1104 = vmatpush1.bf16.msra.mxu0 0
    %1105 = vmatprep.subr.bf16.mxu0 0
    %1106 = vmatpush1.bf16.msra.mxu0 0
    %1107 = vmatprep.subr.bf16.mxu0 0
    %1108 = vmatpush1.bf16.msra.mxu0 0
    %1109 = vmatprep.subr.bf16.mxu0 0
    %1110 = vmatpush1.bf16.msra.mxu0 0
    %1111 = vmatprep.subr.bf16.mxu0 0
    %1112 = vmatpush1.bf16.msra.mxu0 0
    %1113 = vmatprep.mubr.bf16.mxu0 0
    %1114 = vmatmul.mubr.bf16.gmra.mrb[0].mxu0 %v952
    %v1115 = vpop.f32.mrb[0].mxu0
    %v1116 = vadd.f32 0.0, %v1115
    %v1117 = vpop.f32.mrb[0].mxu0
    %v1118 = vadd.f32 0.0, %v1117
    %v1119 = vpop.f32.mrb[0].mxu0
    %v1120 = vpop.f32.mrb[0].mxu0
    %1121 = vdwg.mxu0
    %1122 = vmatprep.subr.bf16.mxu0 0
    %1123 = vmatpush1.bf16.msra.mxu0 %v1035
    %1124 = vmatprep.subr.bf16.mxu0 0
    %1125 = vmatpush1.bf16.msra.mxu0 %v1038
    %1126 = vmatprep.subr.bf16.mxu0 0
    %1127 = vmatpush1.bf16.msra.mxu0 %v1041
    %1128 = vmatprep.subr.bf16.mxu0 0
    %1129 = vmatpush1.bf16.msra.mxu0 %v1044
    %1130 = vmatprep.subr.bf16.mxu0 0
    %1131 = vmatpush1.bf16.msra.mxu0 %v1047
    %1132 = vmatprep.subr.bf16.mxu0 0
    %1133 = vmatpush1.bf16.msra.mxu0 %v1050
    %1134 = vmatprep.subr.bf16.mxu0 0
    %1135 = vmatpush1.bf16.msra.mxu0 %v1053
    %1136 = vmatprep.subr.bf16.mxu0 0
    %1137 = vmatpush1.bf16.msra.mxu0 %v1056
    %1138 = vmatprep.subr.bf16.mxu0 0
    %1139 = vmatpush1.bf16.msra.mxu0 0
    %1140 = vmatprep.subr.bf16.mxu0 0
    %1141 = vmatpush1.bf16.msra.mxu0 0
    %1142 = vmatprep.subr.bf16.mxu0 0
    %1143 = vmatpush1.bf16.msra.mxu0 0
    %1144 = vmatprep.subr.bf16.mxu0 0
    %1145 = vmatpush1.bf16.msra.mxu0 0
    %1146 = vmatprep.subr.bf16.mxu0 0
    %1147 = vmatpush1.bf16.msra.mxu0 0
    %1148 = vmatprep.subr.bf16.mxu0 0
    %1149 = vmatpush1.bf16.msra.mxu0 0
    %1150 = vmatprep.subr.bf16.mxu0 0
    %1151 = vmatpush1.bf16.msra.mxu0 0
    %1152 = vmatprep.subr.bf16.mxu0 0
    %1153 = vmatpush1.bf16.msra.mxu0 0
    %1154 = vmatprep.mubr.bf16.mxu0 0
    %1155 = vmatmul.mubr.bf16.gmra.mrb[0].mxu0 %v952
    %v1156 = vpop.f32.mrb[0].mxu0
    %v1157 = vadd.f32 0.0, %v1156
    %v1158 = vpop.f32.mrb[0].mxu0
    %v1159 = vpop.f32.mrb[0].mxu0
    %v1160 = vpop.f32.mrb[0].mxu0
    %1161 = vdwg.mxu0
    %v1162 = vadd.f32 %v1116, %v713
    %v1163 = vadd.f32 %v1118, %v752
    %v1165 = vlaneseq
    %v1166 = vshrl.u32 %v1165, 7
    %v1167 = vsub.s32 0, %v1166
    %v1168 = vrot.slane %v511, %v1167
    %v1169 = vlaneseq
    %v1170 = vshrl.u32 %v1169, 7
    %v1171 = vsub.s32 1, %v1170
    %v1172 = vrot.slane %v511, %v1171
    %v1175 = vadd.f32 %v1162, %v1168
    %v1176 = vadd.f32 %v1163, %v1172
    %v1177 = vxor.u32 %v1175, 2147483648
    %v1178 = vxor.u32 %v1176, 2147483648
    %v1179 = vmul.f32 %v1177, 1.442695
    %v1180 = vpow.pop %v1179
    %v1181 = vmul.f32 %v1178, 1.442695
    %v1182 = vpow.pop %v1181
    %v1183 = vadd.f32 %v1180, 1.0
    %v1184 = vadd.f32 %v1182, 1.0
    %v1185 = vrcp.pop %v1183
    %v1186 = vmul.f32 1.0, %v1185
    %v1187 = vrcp.pop %v1184
    %v1188 = vmul.f32 1.0, %v1187
    %v1189 = vadd.f32 %v1157, %v512
    %v1190 = vadd.f32 %v754, %v513
    %v1191 = vmul.f32 %v1186, %v1190
    %v1192 = vadd.f32 %v1189, %v1191
    %v1193 = vtanh.pop %v1192
    %v1194 = vsub.f32 1.0, %v1188
    %v1195 = vmul.f32 %v1194, %v1193
    %v1196 = vmul.f32 %v1188, %v514
    %v1197 = vadd.f32 %v1195, %v1196
    %1198 = vst [vmem:[#allocation2] sm:$0x1] %v1197
    %v1199 = vpack.c.bf16 %v1197, %v1197
    %1200 = vmatprep.subr.bf16.mxu0 %v613
    %1201 = vmatpush1.bf16.msra.mxu0 %v612
    %1202 = vmatprep.subr.bf16.mxu0 %v617
    %1203 = vmatpush1.bf16.msra.mxu0 %v616
    %1204 = vmatprep.subr.bf16.mxu0 %v621
    %1205 = vmatpush1.bf16.msra.mxu0 %v620
    %1206 = vmatprep.subr.bf16.mxu0 %v625
    %1207 = vmatpush1.bf16.msra.mxu0 %v624
    %1208 = vmatprep.subr.bf16.mxu0 %v629
    %1209 = vmatpush1.bf16.msra.mxu0 %v628
    %1210 = vmatprep.subr.bf16.mxu0 %v633
    %1211 = vmatpush1.bf16.msra.mxu0 %v632
    %1212 = vmatprep.subr.bf16.mxu0 %v637
    %1213 = vmatpush1.bf16.msra.mxu0 %v636
    %1214 = vmatprep.subr.bf16.mxu0 %v641
    %1215 = vmatpush1.bf16.msra.mxu0 %v640
    %1216 = vmatprep.subr.bf16.mxu0 0
    %1217 = vmatpush1.bf16.msra.mxu0 0
    %1218 = vmatprep.subr.bf16.mxu0 0
    %1219 = vmatpush1.bf16.msra.mxu0 0
    %1220 = vmatprep.subr.bf16.mxu0 0
    %1221 = vmatpush1.bf16.msra.mxu0 0
    %1222 = vmatprep.subr.bf16.mxu0 0
    %1223 = vmatpush1.bf16.msra.mxu0 0
    %1224 = vmatprep.subr.bf16.mxu0 0
    %1225 = vmatpush1.bf16.msra.mxu0 0
    %1226 = vmatprep.subr.bf16.mxu0 0
    %1227 = vmatpush1.bf16.msra.mxu0 0
    %1228 = vmatprep.subr.bf16.mxu0 0
    %1229 = vmatpush1.bf16.msra.mxu0 0
    %1230 = vmatprep.subr.bf16.mxu0 0
    %1231 = vmatpush1.bf16.msra.mxu0 0
    %1232 = vmatprep.mubr.bf16.mxu0 0
    %1233 = vmatmul.mubr.bf16.gmra.mrb[0].mxu0 %v1199
    %v1234 = vpop.f32.mrb[0].mxu0
    %v1235 = vadd.f32 0.0, %v1234
    %v1236 = vpop.f32.mrb[0].mxu0
    %v1237 = vadd.f32 0.0, %v1236
    %v1238 = vpop.f32.mrb[0].mxu0
    %v1239 = vpop.f32.mrb[0].mxu0
    %1240 = vdwg.mxu0
    %1241 = vmatprep.subr.bf16.mxu0 %v615
    %1242 = vmatpush1.bf16.msra.mxu0 %v614
    %1243 = vmatprep.subr.bf16.mxu0 %v619
    %1244 = vmatpush1.bf16.msra.mxu0 %v618
    %1245 = vmatprep.subr.bf16.mxu0 %v623
    %1246 = vmatpush1.bf16.msra.mxu0 %v622
    %1247 = vmatprep.subr.bf16.mxu0 %v627
    %1248 = vmatpush1.bf16.msra.mxu0 %v626
    %1249 = vmatprep.subr.bf16.mxu0 %v631
    %1250 = vmatpush1.bf16.msra.mxu0 %v630
    %1251 = vmatprep.subr.bf16.mxu0 %v635
    %1252 = vmatpush1.bf16.msra.mxu0 %v634
    %1253 = vmatprep.subr.bf16.mxu0 %v639
    %1254 = vmatpush1.bf16.msra.mxu0 %v638
    %1255 = vmatprep.subr.bf16.mxu0 %v643
    %1256 = vmatpush1.bf16.msra.mxu0 %v642
    %1257 = vmatprep.subr.bf16.mxu0 0
    %1258 = vmatpush1.bf16.msra.mxu0 0
    %1259 = vmatprep.subr.bf16.mxu0 0
    %1260 = vmatpush1.bf16.msra.mxu0 0
    %1261 = vmatprep.subr.bf16.mxu0 0
    %1262 = vmatpush1.bf16.msra.mxu0 0
    %1263 = vmatprep.subr.bf16.mxu0 0
    %1264 = vmatpush1.bf16.msra.mxu0 0
    %1265 = vmatprep.subr.bf16.mxu0 0
    %1266 = vmatpush1.bf16.msra.mxu0 0
    %1267 = vmatprep.subr.bf16.mxu0 0
    %1268 = vmatpush1.bf16.msra.mxu0 0
    %1269 = vmatprep.subr.bf16.mxu0 0
    %1270 = vmatpush1.bf16.msra.mxu0 0
    %1271 = vmatprep.subr.bf16.mxu0 0
    %1272 = vmatpush1.bf16.msra.mxu0 0
    %1273 = vmatprep.mubr.bf16.mxu0 0
    %1274 = vmatmul.mubr.bf16.gmra.mrb[0].mxu0 %v1199
    %v1275 = vpop.f32.mrb[0].mxu0
    %v1276 = vadd.f32 0.0, %v1275
    %v1277 = vpop.f32.mrb[0].mxu0
    %v1278 = vadd.f32 0.0, %v1277
    %v1279 = vpop.f32.mrb[0].mxu0
    %v1280 = vpop.f32.mrb[0].mxu0
    %1281 = vdwg.mxu0
    %v1283 = vrot.slane %v1235, 7
    %v1285 = vadd.f32 %v409, %v1283
    %vm1286 = vcmask 1041409
    %v1287 = vsel %vm1286, %v1285, -inf
    %1288 = vmax.xlane.f32.xlu0 %v1287
    %v1289 = vpop.xlane.xlu0 %1288
    %v1290 = vsub.f32 %v1285, %v1289
    %v1291 = vmul.f32 %v1290, 1.442695
    %v1292 = vpow.pop %v1291
    %v1293 = vsel %vm1286, %v1292, 0.0
    %1294 = vadd.xlane.f32.xlu0 %v1293
    %v1295 = vpop.xlane.xlu0 %1294
    %v1296 = vrcp.pop %v1295
    %v1297 = vmul.f32 %v1292, %v1296
    %1298 = vst [vmem:[#allocation20] sm:$0x2] %v1297
    %v1299 = vpack.c.bf16 %v1297, %v1297
    %v1301 = vshrl.u32 %v1299, 16
    %1304 = vmatprep.subr.bf16.mxu0 0
    %1305 = vmatpush1.bf16.msra.mxu0 %v805
    %1306 = vmatprep.subr.bf16.mxu0 0
    %1307 = vmatpush1.bf16.msra.mxu0 %v806
    %1308 = vmatprep.subr.bf16.mxu0 0
    %1309 = vmatpush1.bf16.msra.mxu0 %v807
    %1310 = vmatprep.subr.bf16.mxu0 0
    %1311 = vmatpush1.bf16.msra.mxu0 %v808
    %1312 = vmatprep.subr.bf16.mxu0 0
    %1313 = vmatpush1.bf16.msra.mxu0 %v809
    %1314 = vmatprep.subr.bf16.mxu0 0
    %1315 = vmatpush1.bf16.msra.mxu0 %v810
    %1316 = vmatprep.subr.bf16.mxu0 0
    %1317 = vmatpush1.bf16.msra.mxu0 %v811
    %1318 = vmatprep.subr.bf16.mxu0 0
    %1319 = vmatpush1.bf16.msra.mxu0 %v812
    %1320 = vmatprep.subr.bf16.mxu0 0
    %1321 = vmatpush1.bf16.msra.mxu0 0
    %1322 = vmatprep.subr.bf16.mxu0 0
    %1323 = vmatpush1.bf16.msra.mxu0 0
    %1324 = vmatprep.subr.bf16.mxu0 0
    %1325 = vmatpush1.bf16.msra.mxu0 0
    %1326 = vmatprep.subr.bf16.mxu0 0
    %1327 = vmatpush1.bf16.msra.mxu0 0
    %1328 = vmatprep.subr.bf16.mxu0 0
    %1329 = vmatpush1.bf16.msra.mxu0 0
    %1330 = vmatprep.subr.bf16.mxu0 0
    %1331 = vmatpush1.bf16.msra.mxu0 0
    %1332 = vmatprep.subr.bf16.mxu0 0
    %1333 = vmatpush1.bf16.msra.mxu0 0
    %1334 = vmatprep.subr.bf16.mxu0 0
    %1335 = vmatpush1.bf16.msra.mxu0 0
    %1336 = vmatprep.mubr.bf16.mxu0 0
    %1337 = vmatmul.mubr.bf16.gmra.mrb[0].mxu0 %v1301
    %v1338 = vpop.f32.mrb[0].mxu0
    %v1339 = vadd.f32 0.0, %v1338
    %v1340 = vpop.f32.mrb[0].mxu0
    %v1341 = vpop.f32.mrb[0].mxu0
    %v1342 = vpop.f32.mrb[0].mxu0
    %1343 = vdwg.mxu0
    %v1344 = vpack.c.bf16 %v1339, %v1339
    %1345 = vmatprep.subr.bf16.mxu0 0
    %1346 = vmatpush1.bf16.msra.mxu0 %v894
    %1347 = vmatprep.subr.bf16.mxu0 0
    %1348 = vmatpush1.bf16.msra.mxu0 %v895
    %1349 = vmatprep.subr.bf16.mxu0 0
    %1350 = vmatpush1.bf16.msra.mxu0 %v896
    %1351 = vmatprep.subr.bf16.mxu0 0
    %1352 = vmatpush1.bf16.msra.mxu0 %v897
    %1353 = vmatprep.subr.bf16.mxu0 0
    %1354 = vmatpush1.bf16.msra.mxu0 %v898
    %1355 = vmatprep.subr.bf16.mxu0 0
    %1356 = vmatpush1.bf16.msra.mxu0 %v899
    %1357 = vmatprep.subr.bf16.mxu0 0
    %1358 = vmatpush1.bf16.msra.mxu0 %v900
    %1359 = vmatprep.subr.bf16.mxu0 0
    %1360 = vmatpush1.bf16.msra.mxu0 %v901
    %1361 = vmatprep.subr.bf16.mxu0 0
    %1362 = vmatpush1.bf16.msra.mxu0 0
    %1363 = vmatprep.subr.bf16.mxu0 0
    %1364 = vmatpush1.bf16.msra.mxu0 0
    %1365 = vmatprep.subr.bf16.mxu0 0
    %1366 = vmatpush1.bf16.msra.mxu0 0
    %1367 = vmatprep.subr.bf16.mxu0 0
    %1368 = vmatpush1.bf16.msra.mxu0 0
    %1369 = vmatprep.subr.bf16.mxu0 0
    %1370 = vmatpush1.bf16.msra.mxu0 0
    %1371 = vmatprep.subr.bf16.mxu0 0
    %1372 = vmatpush1.bf16.msra.mxu0 0
    %1373 = vmatprep.subr.bf16.mxu0 0
    %1374 = vmatpush1.bf16.msra.mxu0 0
    %1375 = vmatprep.subr.bf16.mxu0 0
    %1376 = vmatpush1.bf16.msra.mxu0 0
    %1377 = vmatprep.mubr.bf16.mxu0 0
    %1378 = vmatmul.mubr.bf16.gmra.mrb[0].mxu0 %v1344
    %v1379 = vpop.f32.mrb[0].mxu0
    %v1380 = vadd.f32 0.0, %v1379
    %v1381 = vpop.f32.mrb[0].mxu0
    %v1382 = vpop.f32.mrb[0].mxu0
    %v1383 = vpop.f32.mrb[0].mxu0
    %1384 = vdwg.mxu0
    %v1386 = vrot.slane %v1380, 7
    %v1388 = vadd.f32 %v411, %v1386
    %v1389 = vmax.f32 %v1388, 0.0
    %v1390 = vpack.c.bf16 %v1389, %v1389
    %v1392 = vshrl.u32 %v1390, 16
    %1395 = vmatprep.subr.bf16.mxu0 %v1034
    %1396 = vmatpush1.bf16.msra.mxu0 %v1033
    %1397 = vmatprep.subr.bf16.mxu0 %v1037
    %1398 = vmatpush1.bf16.msra.mxu0 %v1036
    %1399 = vmatprep.subr.bf16.mxu0 %v1040
    %1400 = vmatpush1.bf16.msra.mxu0 %v1039
    %1401 = vmatprep.subr.bf16.mxu0 %v1043
    %1402 = vmatpush1.bf16.msra.mxu0 %v1042
    %1403 = vmatprep.subr.bf16.mxu0 %v1046
    %1404 = vmatpush1.bf16.msra.mxu0 %v1045
    %1405 = vmatprep.subr.bf16.mxu0 %v1049
    %1406 = vmatpush1.bf16.msra.mxu0 %v1048
    %1407 = vmatprep.subr.bf16.mxu0 %v1052
    %1408 = vmatpush1.bf16.msra.mxu0 %v1051
    %1409 = vmatprep.subr.bf16.mxu0 %v1055
    %1410 = vmatpush1.bf16.msra.mxu0 %v1054
    %1411 = vmatprep.subr.bf16.mxu0 0
    %1412 = vmatpush1.bf16.msra.mxu0 0
    %1413 = vmatprep.subr.bf16.mxu0 0
    %1414 = vmatpush1.bf16.msra.mxu0 0
    %1415 = vmatprep.subr.bf16.mxu0 0
    %1416 = vmatpush1.bf16.msra.mxu0 0
    %1417 = vmatprep.subr.bf16.mxu0 0
    %1418 = vmatpush1.bf16.msra.mxu0 0
    %1419 = vmatprep.subr.bf16.mxu0 0
    %1420 = vmatpush1.bf16.msra.mxu0 0
    %1421 = vmatprep.subr.bf16.mxu0 0
    %1422 = vmatpush1.bf16.msra.mxu0 0
    %1423 = vmatprep.subr.bf16.mxu0 0
    %1424 = vmatpush1.bf16.msra.mxu0 0
    %1425 = vmatprep.subr.bf16.mxu0 0
    %1426 = vmatpush1.bf16.msra.mxu0 0
    %1427 = vmatprep.mubr.bf16.mxu0 0
    %1428 = vmatmul.mubr.bf16.gmra.mrb[0].mxu0 %v1392
    %v1429 = vpop.f32.mrb[0].mxu0
    %v1430 = vadd.f32 0.0, %v1429
    %v1431 = vpop.f32.mrb[0].mxu0
    %v1432 = vadd.f32 0.0, %v1431
    %v1433 = vpop.f32.mrb[0].mxu0
    %v1434 = vpop.f32.mrb[0].mxu0
    %1435 = vdwg.mxu0
    %1436 = vmatprep.subr.bf16.mxu0 0
    %1437 = vmatpush1.bf16.msra.mxu0 %v1035
    %1438 = vmatprep.subr.bf16.mxu0 0
    %1439 = vmatpush1.bf16.msra.mxu0 %v1038
    %1440 = vmatprep.subr.bf16.mxu0 0
    %1441 = vmatpush1.bf16.msra.mxu0 %v1041
    %1442 = vmatprep.subr.bf16.mxu0 0
    %1443 = vmatpush1.bf16.msra.mxu0 %v1044
    %1444 = vmatprep.subr.bf16.mxu0 0
    %1445 = vmatpush1.bf16.msra.mxu0 %v1047
    %1446 = vmatprep.subr.bf16.mxu0 0
    %1447 = vmatpush1.bf16.msra.mxu0 %v1050
    %1448 = vmatprep.subr.bf16.mxu0 0
    %1449 = vmatpush1.bf16.msra.mxu0 %v1053
    %1450 = vmatprep.subr.bf16.mxu0 0
    %1451 = vmatpush1.bf16.msra.mxu0 %v1056
    %1452 = vmatprep.subr.bf16.mxu0 0
    %1453 = vmatpush1.bf16.msra.mxu0 0
    %1454 = vmatprep.subr.bf16.mxu0 0
    %1455 = vmatpush1.bf16.msra.mxu0 0
    %1456 = vmatprep.subr.bf16.mxu0 0
    %1457 = vmatpush1.bf16.msra.mxu0 0
    %1458 = vmatprep.subr.bf16.mxu0 0
    %1459 = vmatpush1.bf16.msra.mxu0 0
    %1460 = vmatprep.subr.bf16.mxu0 0
    %1461 = vmatpush1.bf16.msra.mxu0 0
    %1462 = vmatprep.subr.bf16.mxu0 0
    %1463 = vmatpush1.bf16.msra.mxu0 0
    %1464 = vmatprep.subr.bf16.mxu0 0
    %1465 = vmatpush1.bf16.msra.mxu0 0
    %1466 = vmatprep.subr.bf16.mxu0 0
    %1467 = vmatpush1.bf16.msra.mxu0 0
    %1468 = vmatprep.mubr.bf16.mxu0 0
    %1469 = vmatmul.mubr.bf16.gmra.mrb[0].mxu0 %v1392
    %v1470 = vpop.f32.mrb[0].mxu0
    %v1471 = vadd.f32 0.0, %v1470
    %v1472 = vpop.f32.mrb[0].mxu0
    %v1473 = vpop.f32.mrb[0].mxu0
    %v1474 = vpop.f32.mrb[0].mxu0
    %1475 = vdwg.mxu0
    %v1476 = vadd.f32 %v1430, %v1237
    %v1477 = vadd.f32 %v1432, %v1276
    %v1478 = vadd.f32 %v1476, %v1168
    %v1479 = vadd.f32 %v1477, %v1172
    %v1480 = vxor.u32 %v1478, 2147483648
    %v1481 = vxor.u32 %v1479, 2147483648
    %v1482 = vmul.f32 %v1480, 1.442695
    %v1483 = vpow.pop %v1482
    %v1484 = vmul.f32 %v1481, 1.442695
    %v1485 = vpow.pop %v1484
    %v1486 = vadd.f32 %v1483, 1.0
    %v1487 = vadd.f32 %v1485, 1.0
    %v1488 = vrcp.pop %v1486
    %v1489 = vmul.f32 1.0, %v1488
    %v1490 = vrcp.pop %v1487
    %v1491 = vmul.f32 1.0, %v1490
    %v1492 = vadd.f32 %v1471, %v512
    %v1493 = vadd.f32 %v1278, %v513
    %v1494 = vmul.f32 %v1489, %v1493
    %v1495 = vadd.f32 %v1492, %v1494
    %v1496 = vtanh.pop %v1495
    %v1497 = vsub.f32 1.0, %v1491
    %v1498 = vmul.f32 %v1497, %v1496
    %v1499 = vmul.f32 %v1491, %v1197
    %v1500 = vadd.f32 %v1498, %v1499
    %1501 = vst [vmem:[#allocation2 + $0x1] sm:$0x1] %v1500
    %v1502 = vpack.c.bf16 %v1500, %v1500
    %1503 = vmatprep.subr.bf16.mxu0 %v613
    %1504 = vmatpush1.bf16.msra.mxu0 %v612
    %1505 = vmatprep.subr.bf16.mxu0 %v617
    %1506 = vmatpush1.bf16.msra.mxu0 %v616
    %1507 = vmatprep.subr.bf16.mxu0 %v621
    %1508 = vmatpush1.bf16.msra.mxu0 %v620
    %1509 = vmatprep.subr.bf16.mxu0 %v625
    %1510 = vmatpush1.bf16.msra.mxu0 %v624
    %1511 = vmatprep.subr.bf16.mxu0 %v629
    %1512 = vmatpush1.bf16.msra.mxu0 %v628
    %1513 = vmatprep.subr.bf16.mxu0 %v633
    %1514 = vmatpush1.bf16.msra.mxu0 %v632
    %1515 = vmatprep.subr.bf16.mxu0 %v637
    %1516 = vmatpush1.bf16.msra.mxu0 %v636
    %1517 = vmatprep.subr.bf16.mxu0 %v641
    %1518 = vmatpush1.bf16.msra.mxu0 %v640
    %1519 = vmatprep.subr.bf16.mxu0 0
    %1520 = vmatpush1.bf16.msra.mxu0 0
    %1521 = vmatprep.subr.bf16.mxu0 0
    %1522 = vmatpush1.bf16.msra.mxu0 0
    %1523 = vmatprep.subr.bf16.mxu0 0
    %1524 = vmatpush1.bf16.msra.mxu0 0
    %1525 = vmatprep.subr.bf16.mxu0 0
    %1526 = vmatpush1.bf16.msra.mxu0 0
    %1527 = vmatprep.subr.bf16.mxu0 0
    %1528 = vmatpush1.bf16.msra.mxu0 0
    %1529 = vmatprep.subr.bf16.mxu0 0
    %1530 = vmatpush1.bf16.msra.mxu0 0
    %1531 = vmatprep.subr.bf16.mxu0 0
    %1532 = vmatpush1.bf16.msra.mxu0 0
    %1533 = vmatprep.subr.bf16.mxu0 0
    %1534 = vmatpush1.bf16.msra.mxu0 0
    %1535 = vmatprep.mubr.bf16.mxu0 0
    %1536 = vmatmul.mubr.bf16.gmra.mrb[0].mxu0 %v1502
    %v1537 = vpop.f32.mrb[0].mxu0
    %v1538 = vadd.f32 0.0, %v1537
    %v1539 = vpop.f32.mrb[0].mxu0
    %v1540 = vadd.f32 0.0, %v1539
    %v1541 = vpop.f32.mrb[0].mxu0
    %v1542 = vpop.f32.mrb[0].mxu0
    %1543 = vdwg.mxu0
    %1544 = vmatprep.subr.bf16.mxu0 %v615
    %1545 = vmatpush1.bf16.msra.mxu0 %v614
    %1546 = vmatprep.subr.bf16.mxu0 %v619
    %1547 = vmatpush1.bf16.msra.mxu0 %v618
    %1548 = vmatprep.subr.bf16.mxu0 %v623
    %1549 = vmatpush1.bf16.msra.mxu0 %v622
    %1550 = vmatprep.subr.bf16.mxu0 %v627
    %1551 = vmatpush1.bf16.msra.mxu0 %v626
    %1552 = vmatprep.subr.bf16.mxu0 %v631
    %1553 = vmatpush1.bf16.msra.mxu0 %v630
    %1554 = vmatprep.subr.bf16.mxu0 %v635
    %1555 = vmatpush1.bf16.msra.mxu0 %v634
    %1556 = vmatprep.subr.bf16.mxu0 %v639
    %1557 = vmatpush1.bf16.msra.mxu0 %v638
    %1558 = vmatprep.subr.bf16.mxu0 %v643
    %1559 = vmatpush1.bf16.msra.mxu0 %v642
    %1560 = vmatprep.subr.bf16.mxu0 0
    %1561 = vmatpush1.bf16.msra.mxu0 0
    %1562 = vmatprep.subr.bf16.mxu0 0
    %1563 = vmatpush1.bf16.msra.mxu0 0
    %1564 = vmatprep.subr.bf16.mxu0 0
    %1565 = vmatpush1.bf16.msra.mxu0 0
    %1566 = vmatprep.subr.bf16.mxu0 0
    %1567 = vmatpush1.bf16.msra.mxu0 0
    %1568 = vmatprep.subr.bf16.mxu0 0
    %1569 = vmatpush1.bf16.msra.mxu0 0
    %1570 = vmatprep.subr.bf16.mxu0 0
    %1571 = vmatpush1.bf16.msra.mxu0 0
    %1572 = vmatprep.subr.bf16.mxu0 0
    %1573 = vmatpush1.bf16.msra.mxu0 0
    %1574 = vmatprep.subr.bf16.mxu0 0
    %1575 = vmatpush1.bf16.msra.mxu0 0
    %1576 = vmatprep.mubr.bf16.mxu0 0
    %1577 = vmatmul.mubr.bf16.gmra.mrb[0].mxu0 %v1502
    %v1578 = vpop.f32.mrb[0].mxu0
    %v1579 = vadd.f32 0.0, %v1578
    %v1580 = vpop.f32.mrb[0].mxu0
    %v1581 = vadd.f32 0.0, %v1580
    %v1582 = vpop.f32.mrb[0].mxu0
    %v1583 = vpop.f32.mrb[0].mxu0
    %1584 = vdwg.mxu0
    %v1586 = vrot.slane %v1538, 6
    %v1588 = vadd.f32 %v409, %v1586
    %vm1589 = vcmask 1042434
    %v1590 = vsel %vm1589, %v1588, -inf
    %1591 = vmax.xlane.f32.xlu0 %v1590
    %v1592 = vpop.xlane.xlu0 %1591
    %v1593 = vsub.f32 %v1588, %v1592
    %v1594 = vmul.f32 %v1593, 1.442695
    %v1595 = vpow.pop %v1594
    %v1596 = vsel %vm1589, %v1595, 0.0
    %1597 = vadd.xlane.f32.xlu0 %v1596
    %v1598 = vpop.xlane.xlu0 %1597
    %v1599 = vrcp.pop %v1598
    %v1600 = vmul.f32 %v1595, %v1599
    %1601 = vst [vmem:[#allocation20] sm:$0x4] %v1600
    %v1602 = vpack.c.bf16 %v1600, %v1600
    %v1604 = vrot.slane %v1602, 1
    %1606 = vmatprep.subr.bf16.mxu0 0
    %1607 = vmatpush1.bf16.msra.mxu0 %v805
    %1608 = vmatprep.subr.bf16.mxu0 0
    %1609 = vmatpush1.bf16.msra.mxu0 %v806
    %1610 = vmatprep.subr.bf16.mxu0 0
    %1611 = vmatpush1.bf16.msra.mxu0 %v807
    %1612 = vmatprep.subr.bf16.mxu0 0
    %1613 = vmatpush1.bf16.msra.mxu0 %v808
    %1614 = vmatprep.subr.bf16.mxu0 0
    %1615 = vmatpush1.bf16.msra.mxu0 %v809
    %1616 = vmatprep.subr.bf16.mxu0 0
    %1617 = vmatpush1.bf16.msra.mxu0 %v810
    %1618 = vmatprep.subr.bf16.mxu0 0
    %1619 = vmatpush1.bf16.msra.mxu0 %v811
    %1620 = vmatprep.subr.bf16.mxu0 0
    %1621 = vmatpush1.bf16.msra.mxu0 %v812
    %1622 = vmatprep.subr.bf16.mxu0 0
    %1623 = vmatpush1.bf16.msra.mxu0 0
    %1624 = vmatprep.subr.bf16.mxu0 0
    %1625 = vmatpush1.bf16.msra.mxu0 0
    %1626 = vmatprep.subr.bf16.mxu0 0
    %1627 = vmatpush1.bf16.msra.mxu0 0
    %1628 = vmatprep.subr.bf16.mxu0 0
    %1629 = vmatpush1.bf16.msra.mxu0 0
    %1630 = vmatprep.subr.bf16.mxu0 0
    %1631 = vmatpush1.bf16.msra.mxu0 0
    %1632 = vmatprep.subr.bf16.mxu0 0
    %1633 = vmatpush1.bf16.msra.mxu0 0
    %1634 = vmatprep.subr.bf16.mxu0 0
    %1635 = vmatpush1.bf16.msra.mxu0 0
    %1636 = vmatprep.subr.bf16.mxu0 0
    %1637 = vmatpush1.bf16.msra.mxu0 0
    %1638 = vmatprep.mubr.bf16.mxu0 0
    %1639 = vmatmul.mubr.bf16.gmra.mrb[0].mxu0 %v1604
    %v1640 = vpop.f32.mrb[0].mxu0
    %v1641 = vadd.f32 0.0, %v1640
    %v1642 = vpop.f32.mrb[0].mxu0
    %v1643 = vpop.f32.mrb[0].mxu0
    %v1644 = vpop.f32.mrb[0].mxu0
    %1645 = vdwg.mxu0
    %v1646 = vpack.c.bf16 %v1641, %v1641
    %1647 = vmatprep.subr.bf16.mxu0 0
    %1648 = vmatpush1.bf16.msra.mxu0 %v894
    %1649 = vmatprep.subr.bf16.mxu0 0
    %1650 = vmatpush1.bf16.msra.mxu0 %v895
    %1651 = vmatprep.subr.bf16.mxu0 0
    %1652 = vmatpush1.bf16.msra.mxu0 %v896
    %1653 = vmatprep.subr.bf16.mxu0 0
    %1654 = vmatpush1.bf16.msra.mxu0 %v897
    %1655 = vmatprep.subr.bf16.mxu0 0
    %1656 = vmatpush1.bf16.msra.mxu0 %v898
    %1657 = vmatprep.subr.bf16.mxu0 0
    %1658 = vmatpush1.bf16.msra.mxu0 %v899
    %1659 = vmatprep.subr.bf16.mxu0 0
    %1660 = vmatpush1.bf16.msra.mxu0 %v900
    %1661 = vmatprep.subr.bf16.mxu0 0
    %1662 = vmatpush1.bf16.msra.mxu0 %v901
    %1663 = vmatprep.subr.bf16.mxu0 0
    %1664 = vmatpush1.bf16.msra.mxu0 0
    %1665 = vmatprep.subr.bf16.mxu0 0
    %1666 = vmatpush1.bf16.msra.mxu0 0
    %1667 = vmatprep.subr.bf16.mxu0 0
    %1668 = vmatpush1.bf16.msra.mxu0 0
    %1669 = vmatprep.subr.bf16.mxu0 0
    %1670 = vmatpush1.bf16.msra.mxu0 0
    %1671 = vmatprep.subr.bf16.mxu0 0
    %1672 = vmatpush1.bf16.msra.mxu0 0
    %1673 = vmatprep.subr.bf16.mxu0 0
    %1674 = vmatpush1.bf16.msra.mxu0 0
    %1675 = vmatprep.subr.bf16.mxu0 0
    %1676 = vmatpush1.bf16.msra.mxu0 0
    %1677 = vmatprep.subr.bf16.mxu0 0
    %1678 = vmatpush1.bf16.msra.mxu0 0
    %1679 = vmatprep.mubr.bf16.mxu0 0
    %1680 = vmatmul.mubr.bf16.gmra.mrb[0].mxu0 %v1646
    %v1681 = vpop.f32.mrb[0].mxu0
    %v1682 = vadd.f32 0.0, %v1681
    %v1683 = vpop.f32.mrb[0].mxu0
    %v1684 = vpop.f32.mrb[0].mxu0
    %v1685 = vpop.f32.mrb[0].mxu0
    %1686 = vdwg.mxu0
    %v1688 = vrot.slane %v1682, 6
    %v1690 = vadd.f32 %v411, %v1688
    %v1691 = vmax.f32 %v1690, 0.0
    %v1692 = vpack.c.bf16 %v1691, %v1691
    %v1694 = vrot.slane %v1692, 1
    %1696 = vmatprep.subr.bf16.mxu0 %v1034
    %1697 = vmatpush1.bf16.msra.mxu0 %v1033
    %1698 = vmatprep.subr.bf16.mxu0 %v1037
    %1699 = vmatpush1.bf16.msra.mxu0 %v1036
    %1700 = vmatprep.subr.bf16.mxu0 %v1040
    %1701 = vmatpush1.bf16.msra.mxu0 %v1039
    %1702 = vmatprep.subr.bf16.mxu0 %v1043
    %1703 = vmatpush1.bf16.msra.mxu0 %v1042
    %1704 = vmatprep.subr.bf16.mxu0 %v1046
    %1705 = vmatpush1.bf16.msra.mxu0 %v1045
    %1706 = vmatprep.subr.bf16.mxu0 %v1049
    %1707 = vmatpush1.bf16.msra.mxu0 %v1048
    %1708 = vmatprep.subr.bf16.mxu0 %v1052
    %1709 = vmatpush1.bf16.msra.mxu0 %v1051
    %1710 = vmatprep.subr.bf16.mxu0 %v1055
    %1711 = vmatpush1.bf16.msra.mxu0 %v1054
    %1712 = vmatprep.subr.bf16.mxu0 0
    %1713 = vmatpush1.bf16.msra.mxu0 0
    %1714 = vmatprep.subr.bf16.mxu0 0
    %1715 = vmatpush1.bf16.msra.mxu0 0
    %1716 = vmatprep.subr.bf16.mxu0 0
    %1717 = vmatpush1.bf16.msra.mxu0 0
    %1718 = vmatprep.subr.bf16.mxu0 0
    %1719 = vmatpush1.bf16.msra.mxu0 0
    %1720 = vmatprep.subr.bf16.mxu0 0
    %1721 = vmatpush1.bf16.msra.mxu0 0
    %1722 = vmatprep.subr.bf16.mxu0 0
    %1723 = vmatpush1.bf16.msra.mxu0 0
    %1724 = vmatprep.subr.bf16.mxu0 0
    %1725 = vmatpush1.bf16.msra.mxu0 0
    %1726 = vmatprep.subr.bf16.mxu0 0
    %1727 = vmatpush1.bf16.msra.mxu0 0
    %1728 = vmatprep.mubr.bf16.mxu0 0
    %1729 = vmatmul.mubr.bf16.gmra.mrb[0].mxu0 %v1694
    %v1730 = vpop.f32.mrb[0].mxu0
    %v1731 = vadd.f32 0.0, %v1730
    %v1732 = vpop.f32.mrb[0].mxu0
    %v1733 = vadd.f32 0.0, %v1732
    %v1734 = vpop.f32.mrb[0].mxu0
    %v1735 = vpop.f32.mrb[0].mxu0
    %1736 = vdwg.mxu0
    %1737 = vmatprep.subr.bf16.mxu0 0
    %1738 = vmatpush1.bf16.msra.mxu0 %v1035
    %1739 = vmatprep.subr.bf16.mxu0 0
    %1740 = vmatpush1.bf16.msra.mxu0 %v1038
    %1741 = vmatprep.subr.bf16.mxu0 0
    %1742 = vmatpush1.bf16.msra.mxu0 %v1041
    %1743 = vmatprep.subr.bf16.mxu0 0
    %1744 = vmatpush1.bf16.msra.mxu0 %v1044
    %1745 = vmatprep.subr.bf16.mxu0 0
    %1746 = vmatpush1.bf16.msra.mxu0 %v1047
    %1747 = vmatprep.subr.bf16.mxu0 0
    %1748 = vmatpush1.bf16.msra.mxu0 %v1050
    %1749 = vmatprep.subr.bf16.mxu0 0
    %1750 = vmatpush1.bf16.msra.mxu0 %v1053
    %1751 = vmatprep.subr.bf16.mxu0 0
    %1752 = vmatpush1.bf16.msra.mxu0 %v1056
    %1753 = vmatprep.subr.bf16.mxu0 0
    %1754 = vmatpush1.bf16.msra.mxu0 0
    %1755 = vmatprep.subr.bf16.mxu0 0
    %1756 = vmatpush1.bf16.msra.mxu0 0
    %1757 = vmatprep.subr.bf16.mxu0 0
    %1758 = vmatpush1.bf16.msra.mxu0 0
    %1759 = vmatprep.subr.bf16.mxu0 0
    %1760 = vmatpush1.bf16.msra.mxu0 0
    %1761 = vmatprep.subr.bf16.mxu0 0
    %1762 = vmatpush1.bf16.msra.mxu0 0
    %1763 = vmatprep.subr.bf16.mxu0 0
    %1764 = vmatpush1.bf16.msra.mxu0 0
    %1765 = vmatprep.subr.bf16.mxu0 0
    %1766 = vmatpush1.bf16.msra.mxu0 0
    %1767 = vmatprep.subr.bf16.mxu0 0
    %1768 = vmatpush1.bf16.msra.mxu0 0
    %1769 = vmatprep.mubr.bf16.mxu0 0
    %1770 = vmatmul.mubr.bf16.gmra.mrb[0].mxu0 %v1694
    %v1771 = vpop.f32.mrb[0].mxu0
    %v1772 = vadd.f32 0.0, %v1771
    %v1773 = vpop.f32.mrb[0].mxu0
    %v1774 = vpop.f32.mrb[0].mxu0
    %v1775 = vpop.f32.mrb[0].mxu0
    %1776 = vdwg.mxu0
    %v1777 = vadd.f32 %v1731, %v1540
    %v1778 = vadd.f32 %v1733, %v1579
    %v1779 = vadd.f32 %v1777, %v1168
    %v1780 = vadd.f32 %v1778, %v1172
    %v1781 = vxor.u32 %v1779, 2147483648
    %v1782 = vxor.u32 %v1780, 2147483648
    %v1783 = vmul.f32 %v1781, 1.442695
    %v1784 = vpow.pop %v1783
    %v1785 = vmul.f32 %v1782, 1.442695
    %v1786 = vpow.pop %v1785
    %v1787 = vadd.f32 %v1784, 1.0
    %v1788 = vadd.f32 %v1786, 1.0
    %v1789 = vrcp.pop %v1787
    %v1790 = vmul.f32 1.0, %v1789
    %v1791 = vrcp.pop %v1788
    %v1792 = vmul.f32 1.0, %v1791
    %v1793 = vadd.f32 %v1772, %v512
    %v1794 = vadd.f32 %v1581, %v513
    %v1795 = vmul.f32 %v1790, %v1794
    %v1796 = vadd.f32 %v1793, %v1795
    %v1797 = vtanh.pop %v1796
    %v1798 = vsub.f32 1.0, %v1792
    %v1799 = vmul.f32 %v1798, %v1797
    %v1800 = vmul.f32 %v1792, %v1500
    %v1801 = vadd.f32 %v1799, %v1800
    %1802 = vst [vmem:[#allocation2 + $0x2] sm:$0x1] %v1801
    %v1803 = vpack.c.bf16 %v1801, %v1801
    %1804 = vmatprep.subr.bf16.mxu0 %v613
    %1805 = vmatpush1.bf16.msra.mxu0 %v612
    %1806 = vmatprep.subr.bf16.mxu0 %v617
    %1807 = vmatpush1.bf16.msra.mxu0 %v616
    %1808 = vmatprep.subr.bf16.mxu0 %v621
    %1809 = vmatpush1.bf16.msra.mxu0 %v620
    %1810 = vmatprep.subr.bf16.mxu0 %v625
    %1811 = vmatpush1.bf16.msra.mxu0 %v624
    %1812 = vmatprep.subr.bf16.mxu0 %v629
    %1813 = vmatpush1.bf16.msra.mxu0 %v628
    %1814 = vmatprep.subr.bf16.mxu0 %v633
    %1815 = vmatpush1.bf16.msra.mxu0 %v632
    %1816 = vmatprep.subr.bf16.mxu0 %v637
    %1817 = vmatpush1.bf16.msra.mxu0 %v636
    %1818 = vmatprep.subr.bf16.mxu0 %v641
    %1819 = vmatpush1.bf16.msra.mxu0 %v640
    %1820 = vmatprep.subr.bf16.mxu0 0
    %1821 = vmatpush1.bf16.msra.mxu0 0
    %1822 = vmatprep.subr.bf16.mxu0 0
    %1823 = vmatpush1.bf16.msra.mxu0 0
    %1824 = vmatprep.subr.bf16.mxu0 0
    %1825 = vmatpush1.bf16.msra.mxu0 0
    %1826 = vmatprep.subr.bf16.mxu0 0
    %1827 = vmatpush1.bf16.msra.mxu0 0
    %1828 = vmatprep.subr.bf16.mxu0 0
    %1829 = vmatpush1.bf16.msra.mxu0 0
    %1830 = vmatprep.subr.bf16.mxu0 0
    %1831 = vmatpush1.bf16.msra.mxu0 0
    %1832 = vmatprep.subr.bf16.mxu0 0
    %1833 = vmatpush1.bf16.msra.mxu0 0
    %1834 = vmatprep.subr.bf16.mxu0 0
    %1835 = vmatpush1.bf16.msra.mxu0 0
    %1836 = vmatprep.mubr.bf16.mxu0 0
    %1837 = vmatmul.mubr.bf16.gmra.mrb[0].mxu0 %v1803
    %v1838 = vpop.f32.mrb[0].mxu0
    %v1839 = vadd.f32 0.0, %v1838
    %v1840 = vpop.f32.mrb[0].mxu0
    %v1841 = vadd.f32 0.0, %v1840
    %v1842 = vpop.f32.mrb[0].mxu0
    %v1843 = vpop.f32.mrb[0].mxu0
    %1844 = vdwg.mxu0
    %1845 = vmatprep.subr.bf16.mxu0 %v615
    %1846 = vmatpush1.bf16.msra.mxu0 %v614
    %1847 = vmatprep.subr.bf16.mxu0 %v619
    %1848 = vmatpush1.bf16.msra.mxu0 %v618
    %1849 = vmatprep.subr.bf16.mxu0 %v623
    %1850 = vmatpush1.bf16.msra.mxu0 %v622
    %1851 = vmatprep.subr.bf16.mxu0 %v627
    %1852 = vmatpush1.bf16.msra.mxu0 %v626
    %1853 = vmatprep.subr.bf16.mxu0 %v631
    %1854 = vmatpush1.bf16.msra.mxu0 %v630
    %1855 = vmatprep.subr.bf16.mxu0 %v635
    %1856 = vmatpush1.bf16.msra.mxu0 %v634
    %1857 = vmatprep.subr.bf16.mxu0 %v639
    %1858 = vmatpush1.bf16.msra.mxu0 %v638
    %1859 = vmatprep.subr.bf16.mxu0 %v643
    %1860 = vmatpush1.bf16.msra.mxu0 %v642
    %1861 = vmatprep.subr.bf16.mxu0 0
    %1862 = vmatpush1.bf16.msra.mxu0 0
    %1863 = vmatprep.subr.bf16.mxu0 0
    %1864 = vmatpush1.bf16.msra.mxu0 0
    %1865 = vmatprep.subr.bf16.mxu0 0
    %1866 = vmatpush1.bf16.msra.mxu0 0
    %1867 = vmatprep.subr.bf16.mxu0 0
    %1868 = vmatpush1.bf16.msra.mxu0 0
    %1869 = vmatprep.subr.bf16.mxu0 0
    %1870 = vmatpush1.bf16.msra.mxu0 0
    %1871 = vmatprep.subr.bf16.mxu0 0
    %1872 = vmatpush1.bf16.msra.mxu0 0
    %1873 = vmatprep.subr.bf16.mxu0 0
    %1874 = vmatpush1.bf16.msra.mxu0 0
    %1875 = vmatprep.subr.bf16.mxu0 0
    %1876 = vmatpush1.bf16.msra.mxu0 0
    %1877 = vmatprep.mubr.bf16.mxu0 0
    %1878 = vmatmul.mubr.bf16.gmra.mrb[0].mxu0 %v1803
    %v1879 = vpop.f32.mrb[0].mxu0
    %v1880 = vadd.f32 0.0, %v1879
    %v1881 = vpop.f32.mrb[0].mxu0
    %v1882 = vadd.f32 0.0, %v1881
    %v1883 = vpop.f32.mrb[0].mxu0
    %v1884 = vpop.f32.mrb[0].mxu0
    %1885 = vdwg.mxu0
    %v1887 = vrot.slane %v1839, 5
    %v1889 = vadd.f32 %v409, %v1887
    %vm1890 = vcmask 1043459
    %v1891 = vsel %vm1890, %v1889, -inf
    %1892 = vmax.xlane.f32.xlu0 %v1891
    %v1893 = vpop.xlane.xlu0 %1892
    %v1894 = vsub.f32 %v1889, %v1893
    %v1895 = vmul.f32 %v1894, 1.442695
    %v1896 = vpow.pop %v1895
    %v1897 = vsel %vm1890, %v1896, 0.0
    %1898 = vadd.xlane.f32.xlu0 %v1897
    %v1899 = vpop.xlane.xlu0 %1898
    %v1900 = vrcp.pop %v1899
    %v1901 = vmul.f32 %v1896, %v1900
    %1902 = vst [vmem:[#allocation20] sm:$0x8] %v1901
    %v1903 = vpack.c.bf16 %v1901, %v1901
    %v1905 = vshrl.u32 %v1903, 16
    %v1907 = vrot.slane %v1905, 1
    %1909 = vmatprep.subr.bf16.mxu0 0
    %1910 = vmatpush1.bf16.msra.mxu0 %v805
    %1911 = vmatprep.subr.bf16.mxu0 0
    %1912 = vmatpush1.bf16.msra.mxu0 %v806
    %1913 = vmatprep.subr.bf16.mxu0 0
    %1914 = vmatpush1.bf16.msra.mxu0 %v807
    %1915 = vmatprep.subr.bf16.mxu0 0
    %1916 = vmatpush1.bf16.msra.mxu0 %v808
    %1917 = vmatprep.subr.bf16.mxu0 0
    %1918 = vmatpush1.bf16.msra.mxu0 %v809
    %1919 = vmatprep.subr.bf16.mxu0 0
    %1920 = vmatpush1.bf16.msra.mxu0 %v810
    %1921 = vmatprep.subr.bf16.mxu0 0
    %1922 = vmatpush1.bf16.msra.mxu0 %v811
    %1923 = vmatprep.subr.bf16.mxu0 0
    %1924 = vmatpush1.bf16.msra.mxu0 %v812
    %1925 = vmatprep.subr.bf16.mxu0 0
    %1926 = vmatpush1.bf16.msra.mxu0 0
    %1927 = vmatprep.subr.bf16.mxu0 0
    %1928 = vmatpush1.bf16.msra.mxu0 0
    %1929 = vmatprep.subr.bf16.mxu0 0
    %1930 = vmatpush1.bf16.msra.mxu0 0
    %1931 = vmatprep.subr.bf16.mxu0 0
    %1932 = vmatpush1.bf16.msra.mxu0 0
    %1933 = vmatprep.subr.bf16.mxu0 0
    %1934 = vmatpush1.bf16.msra.mxu0 0
    %1935 = vmatprep.subr.bf16.mxu0 0
    %1936 = vmatpush1.bf16.msra.mxu0 0
    %1937 = vmatprep.subr.bf16.mxu0 0
    %1938 = vmatpush1.bf16.msra.mxu0 0
    %1939 = vmatprep.subr.bf16.mxu0 0
    %1940 = vmatpush1.bf16.msra.mxu0 0
    %1941 = vmatprep.mubr.bf16.mxu0 0
    %1942 = vmatmul.mubr.bf16.gmra.mrb[0].mxu0 %v1907
    %v1943 = vpop.f32.mrb[0].mxu0
    %v1944 = vadd.f32 0.0, %v1943
    %v1945 = vpop.f32.mrb[0].mxu0
    %v1946 = vpop.f32.mrb[0].mxu0
    %v1947 = vpop.f32.mrb[0].mxu0
    %1948 = vdwg.mxu0
    %v1949 = vpack.c.bf16 %v1944, %v1944
    %1950 = vmatprep.subr.bf16.mxu0 0
    %1951 = vmatpush1.bf16.msra.mxu0 %v894
    %1952 = vmatprep.subr.bf16.mxu0 0
    %1953 = vmatpush1.bf16.msra.mxu0 %v895
    %1954 = vmatprep.subr.bf16.mxu0 0
    %1955 = vmatpush1.bf16.msra.mxu0 %v896
    %1956 = vmatprep.subr.bf16.mxu0 0
    %1957 = vmatpush1.bf16.msra.mxu0 %v897
    %1958 = vmatprep.subr.bf16.mxu0 0
    %1959 = vmatpush1.bf16.msra.mxu0 %v898
    %1960 = vmatprep.subr.bf16.mxu0 0
    %1961 = vmatpush1.bf16.msra.mxu0 %v899
    %1962 = vmatprep.subr.bf16.mxu0 0
    %1963 = vmatpush1.bf16.msra.mxu0 %v900
    %1964 = vmatprep.subr.bf16.mxu0 0
    %1965 = vmatpush1.bf16.msra.mxu0 %v901
    %1966 = vmatprep.subr.bf16.mxu0 0
    %1967 = vmatpush1.bf16.msra.mxu0 0
    %1968 = vmatprep.subr.bf16.mxu0 0
    %1969 = vmatpush1.bf16.msra.mxu0 0
    %1970 = vmatprep.subr.bf16.mxu0 0
    %1971 = vmatpush1.bf16.msra.mxu0 0
    %1972 = vmatprep.subr.bf16.mxu0 0
    %1973 = vmatpush1.bf16.msra.mxu0 0
    %1974 = vmatprep.subr.bf16.mxu0 0
    %1975 = vmatpush1.bf16.msra.mxu0 0
    %1976 = vmatprep.subr.bf16.mxu0 0
    %1977 = vmatpush1.bf16.msra.mxu0 0
    %1978 = vmatprep.subr.bf16.mxu0 0
    %1979 = vmatpush1.bf16.msra.mxu0 0
    %1980 = vmatprep.subr.bf16.mxu0 0
    %1981 = vmatpush1.bf16.msra.mxu0 0
    %1982 = vmatprep.mubr.bf16.mxu0 0
    %1983 = vmatmul.mubr.bf16.gmra.mrb[0].mxu0 %v1949
    %v1984 = vpop.f32.mrb[0].mxu0
    %v1985 = vadd.f32 0.0, %v1984
    %v1986 = vpop.f32.mrb[0].mxu0
    %v1987 = vpop.f32.mrb[0].mxu0
    %v1988 = vpop.f32.mrb[0].mxu0
    %1989 = vdwg.mxu0
    %v1991 = vrot.slane %v1985, 5
    %v1993 = vadd.f32 %v411, %v1991
    %v1994 = vmax.f32 %v1993, 0.0
    %v1995 = vpack.c.bf16 %v1994, %v1994
    %v1997 = vshrl.u32 %v1995, 16
    %v1999 = vrot.slane %v1997, 1
    %2001 = vmatprep.subr.bf16.mxu0 %v1034
    %2002 = vmatpush1.bf16.msra.mxu0 %v1033
    %2003 = vmatprep.subr.bf16.mxu0 %v1037
    %2004 = vmatpush1.bf16.msra.mxu0 %v1036
    %2005 = vmatprep.subr.bf16.mxu0 %v1040
    %2006 = vmatpush1.bf16.msra.mxu0 %v1039
    %2007 = vmatprep.subr.bf16.mxu0 %v1043
    %2008 = vmatpush1.bf16.msra.mxu0 %v1042
    %2009 = vmatprep.subr.bf16.mxu0 %v1046
    %2010 = vmatpush1.bf16.msra.mxu0 %v1045
    %2011 = vmatprep.subr.bf16.mxu0 %v1049
    %2012 = vmatpush1.bf16.msra.mxu0 %v1048
    %2013 = vmatprep.subr.bf16.mxu0 %v1052
    %2014 = vmatpush1.bf16.msra.mxu0 %v1051
    %2015 = vmatprep.subr.bf16.mxu0 %v1055
    %2016 = vmatpush1.bf16.msra.mxu0 %v1054
    %2017 = vmatprep.subr.bf16.mxu0 0
    %2018 = vmatpush1.bf16.msra.mxu0 0
    %2019 = vmatprep.subr.bf16.mxu0 0
    %2020 = vmatpush1.bf16.msra.mxu0 0
    %2021 = vmatprep.subr.bf16.mxu0 0
    %2022 = vmatpush1.bf16.msra.mxu0 0
    %2023 = vmatprep.subr.bf16.mxu0 0
    %2024 = vmatpush1.bf16.msra.mxu0 0
    %2025 = vmatprep.subr.bf16.mxu0 0
    %2026 = vmatpush1.bf16.msra.mxu0 0
    %2027 = vmatprep.subr.bf16.mxu0 0
    %2028 = vmatpush1.bf16.msra.mxu0 0
    %2029 = vmatprep.subr.bf16.mxu0 0
    %2030 = vmatpush1.bf16.msra.mxu0 0
    %2031 = vmatprep.subr.bf16.mxu0 0
    %2032 = vmatpush1.bf16.msra.mxu0 0
    %2033 = vmatprep.mubr.bf16.mxu0 0
    %2034 = vmatmul.mubr.bf16.gmra.mrb[0].mxu0 %v1999
    %v2035 = vpop.f32.mrb[0].mxu0
    %v2036 = vadd.f32 0.0, %v2035
    %v2037 = vpop.f32.mrb[0].mxu0
    %v2038 = vadd.f32 0.0, %v2037
    %v2039 = vpop.f32.mrb[0].mxu0
    %v2040 = vpop.f32.mrb[0].mxu0
    %2041 = vdwg.mxu0
    %2042 = vmatprep.subr.bf16.mxu0 0
    %2043 = vmatpush1.bf16.msra.mxu0 %v1035
    %2044 = vmatprep.subr.bf16.mxu0 0
    %2045 = vmatpush1.bf16.msra.mxu0 %v1038
    %2046 = vmatprep.subr.bf16.mxu0 0
    %2047 = vmatpush1.bf16.msra.mxu0 %v1041
    %2048 = vmatprep.subr.bf16.mxu0 0
    %2049 = vmatpush1.bf16.msra.mxu0 %v1044
    %2050 = vmatprep.subr.bf16.mxu0 0
    %2051 = vmatpush1.bf16.msra.mxu0 %v1047
    %2052 = vmatprep.subr.bf16.mxu0 0
    %2053 = vmatpush1.bf16.msra.mxu0 %v1050
    %2054 = vmatprep.subr.bf16.mxu0 0
    %2055 = vmatpush1.bf16.msra.mxu0 %v1053
    %2056 = vmatprep.subr.bf16.mxu0 0
    %2057 = vmatpush1.bf16.msra.mxu0 %v1056
    %2058 = vmatprep.subr.bf16.mxu0 0
    %2059 = vmatpush1.bf16.msra.mxu0 0
    %2060 = vmatprep.subr.bf16.mxu0 0
    %2061 = vmatpush1.bf16.msra.mxu0 0
    %2062 = vmatprep.subr.bf16.mxu0 0
    %2063 = vmatpush1.bf16.msra.mxu0 0
    %2064 = vmatprep.subr.bf16.mxu0 0
    %2065 = vmatpush1.bf16.msra.mxu0 0
    %2066 = vmatprep.subr.bf16.mxu0 0
    %2067 = vmatpush1.bf16.msra.mxu0 0
    %2068 = vmatprep.subr.bf16.mxu0 0
    %2069 = vmatpush1.bf16.msra.mxu0 0
    %2070 = vmatprep.subr.bf16.mxu0 0
    %2071 = vmatpush1.bf16.msra.mxu0 0
    %2072 = vmatprep.subr.bf16.mxu0 0
    %2073 = vmatpush1.bf16.msra.mxu0 0
    %2074 = vmatprep.mubr.bf16.mxu0 0
    %2075 = vmatmul.mubr.bf16.gmra.mrb[0].mxu0 %v1999
    %v2076 = vpop.f32.mrb[0].mxu0
    %v2077 = vadd.f32 0.0, %v2076
    %v2078 = vpop.f32.mrb[0].mxu0
    %v2079 = vpop.f32.mrb[0].mxu0
    %v2080 = vpop.f32.mrb[0].mxu0
    %2081 = vdwg.mxu0
    %v2082 = vadd.f32 %v2036, %v1841
    %v2083 = vadd.f32 %v2038, %v1880
    %v2084 = vadd.f32 %v2082, %v1168
    %v2085 = vadd.f32 %v2083, %v1172
    %v2086 = vxor.u32 %v2084, 2147483648
    %v2087 = vxor.u32 %v2085, 2147483648
    %v2088 = vmul.f32 %v2086, 1.442695
    %v2089 = vpow.pop %v2088
    %v2090 = vmul.f32 %v2087, 1.442695
    %v2091 = vpow.pop %v2090
    %v2092 = vadd.f32 %v2089, 1.0
    %v2093 = vadd.f32 %v2091, 1.0
    %v2094 = vrcp.pop %v2092
    %v2095 = vmul.f32 1.0, %v2094
    %v2096 = vrcp.pop %v2093
    %v2097 = vmul.f32 1.0, %v2096
    %v2098 = vadd.f32 %v2077, %v512
    %v2099 = vadd.f32 %v1882, %v513
    %v2100 = vmul.f32 %v2095, %v2099
    %v2101 = vadd.f32 %v2098, %v2100
    %v2102 = vtanh.pop %v2101
    %v2103 = vsub.f32 1.0, %v2097
    %v2104 = vmul.f32 %v2103, %v2102
    %v2105 = vmul.f32 %v2097, %v1801
    %v2106 = vadd.f32 %v2104, %v2105
    %2107 = vst [vmem:[#allocation2 + $0x3] sm:$0x1] %v2106
    %v2108 = vpack.c.bf16 %v2106, %v2106
    %2109 = vmatprep.subr.bf16.mxu0 %v613
    %2110 = vmatpush1.bf16.msra.mxu0 %v612
    %2111 = vmatprep.subr.bf16.mxu0 %v617
    %2112 = vmatpush1.bf16.msra.mxu0 %v616
    %2113 = vmatprep.subr.bf16.mxu0 %v621
    %2114 = vmatpush1.bf16.msra.mxu0 %v620
    %2115 = vmatprep.subr.bf16.mxu0 %v625
    %2116 = vmatpush1.bf16.msra.mxu0 %v624
    %2117 = vmatprep.subr.bf16.mxu0 %v629
    %2118 = vmatpush1.bf16.msra.mxu0 %v628
    %2119 = vmatprep.subr.bf16.mxu0 %v633
    %2120 = vmatpush1.bf16.msra.mxu0 %v632
    %2121 = vmatprep.subr.bf16.mxu0 %v637
    %2122 = vmatpush1.bf16.msra.mxu0 %v636
    %2123 = vmatprep.subr.bf16.mxu0 %v641
    %2124 = vmatpush1.bf16.msra.mxu0 %v640
    %2125 = vmatprep.subr.bf16.mxu0 0
    %2126 = vmatpush1.bf16.msra.mxu0 0
    %2127 = vmatprep.subr.bf16.mxu0 0
    %2128 = vmatpush1.bf16.msra.mxu0 0
    %2129 = vmatprep.subr.bf16.mxu0 0
    %2130 = vmatpush1.bf16.msra.mxu0 0
    %2131 = vmatprep.subr.bf16.mxu0 0
    %2132 = vmatpush1.bf16.msra.mxu0 0
    %2133 = vmatprep.subr.bf16.mxu0 0
    %2134 = vmatpush1.bf16.msra.mxu0 0
    %2135 = vmatprep.subr.bf16.mxu0 0
    %2136 = vmatpush1.bf16.msra.mxu0 0
    %2137 = vmatprep.subr.bf16.mxu0 0
    %2138 = vmatpush1.bf16.msra.mxu0 0
    %2139 = vmatprep.subr.bf16.mxu0 0
    %2140 = vmatpush1.bf16.msra.mxu0 0
    %2141 = vmatprep.mubr.bf16.mxu0 0
    %2142 = vmatmul.mubr.bf16.gmra.mrb[0].mxu0 %v2108
    %v2143 = vpop.f32.mrb[0].mxu0
    %v2144 = vadd.f32 0.0, %v2143
    %v2145 = vpop.f32.mrb[0].mxu0
    %v2146 = vadd.f32 0.0, %v2145
    %v2147 = vpop.f32.mrb[0].mxu0
    %v2148 = vpop.f32.mrb[0].mxu0
    %2149 = vdwg.mxu0
    %2150 = vmatprep.subr.bf16.mxu0 %v615
    %2151 = vmatpush1.bf16.msra.mxu0 %v614
    %2152 = vmatprep.subr.bf16.mxu0 %v619
    %2153 = vmatpush1.bf16.msra.mxu0 %v618
    %2154 = vmatprep.subr.bf16.mxu0 %v623
    %2155 = vmatpush1.bf16.msra.mxu0 %v622
    %2156 = vmatprep.subr.bf16.mxu0 %v627
    %2157 = vmatpush1.bf16.msra.mxu0 %v626
    %2158 = vmatprep.subr.bf16.mxu0 %v631
    %2159 = vmatpush1.bf16.msra.mxu0 %v630
    %2160 = vmatprep.subr.bf16.mxu0 %v635
    %2161 = vmatpush1.bf16.msra.mxu0 %v634
    %2162 = vmatprep.subr.bf16.mxu0 %v639
    %2163 = vmatpush1.bf16.msra.mxu0 %v638
    %2164 = vmatprep.subr.bf16.mxu0 %v643
    %2165 = vmatpush1.bf16.msra.mxu0 %v642
    %2166 = vmatprep.subr.bf16.mxu0 0
    %2167 = vmatpush1.bf16.msra.mxu0 0
    %2168 = vmatprep.subr.bf16.mxu0 0
    %2169 = vmatpush1.bf16.msra.mxu0 0
    %2170 = vmatprep.subr.bf16.mxu0 0
    %2171 = vmatpush1.bf16.msra.mxu0 0
    %2172 = vmatprep.subr.bf16.mxu0 0
    %2173 = vmatpush1.bf16.msra.mxu0 0
    %2174 = vmatprep.subr.bf16.mxu0 0
    %2175 = vmatpush1.bf16.msra.mxu0 0
    %2176 = vmatprep.subr.bf16.mxu0 0
    %2177 = vmatpush1.bf16.msra.mxu0 0
    %2178 = vmatprep.subr.bf16.mxu0 0
    %2179 = vmatpush1.bf16.msra.mxu0 0
    %2180 = vmatprep.subr.bf16.mxu0 0
    %2181 = vmatpush1.bf16.msra.mxu0 0
    %2182 = vmatprep.mubr.bf16.mxu0 0
    %2183 = vmatmul.mubr.bf16.gmra.mrb[0].mxu0 %v2108
    %v2184 = vpop.f32.mrb[0].mxu0
    %v2185 = vadd.f32 0.0, %v2184
    %v2186 = vpop.f32.mrb[0].mxu0
    %v2187 = vadd.f32 0.0, %v2186
    %v2188 = vpop.f32.mrb[0].mxu0
    %v2189 = vpop.f32.mrb[0].mxu0
    %2190 = vdwg.mxu0
    %v2192 = vrot.slane %v2144, 4
    %v2194 = vadd.f32 %v409, %v2192
    %vm2195 = vcmask 1044484
    %v2196 = vsel %vm2195, %v2194, -inf
    %2197 = vmax.xlane.f32.xlu0 %v2196
    %v2198 = vpop.xlane.xlu0 %2197
    %v2199 = vsub.f32 %v2194, %v2198
    %v2200 = vmul.f32 %v2199, 1.442695
    %v2201 = vpow.pop %v2200
    %v2202 = vsel %vm2195, %v2201, 0.0
    %2203 = vadd.xlane.f32.xlu0 %v2202
    %v2204 = vpop.xlane.xlu0 %2203
    %v2205 = vrcp.pop %v2204
    %v2206 = vmul.f32 %v2201, %v2205
    %2207 = vst [vmem:[#allocation20] sm:$0x10] %v2206
    %v2208 = vpack.c.bf16 %v2206, %v2206
    %v2210 = vrot.slane %v2208, 2
    %2212 = vmatprep.subr.bf16.mxu0 0
    %2213 = vmatpush1.bf16.msra.mxu0 %v805
    %2214 = vmatprep.subr.bf16.mxu0 0
    %2215 = vmatpush1.bf16.msra.mxu0 %v806
    %2216 = vmatprep.subr.bf16.mxu0 0
    %2217 = vmatpush1.bf16.msra.mxu0 %v807
    %2218 = vmatprep.subr.bf16.mxu0 0
    %2219 = vmatpush1.bf16.msra.mxu0 %v808
    %2220 = vmatprep.subr.bf16.mxu0 0
    %2221 = vmatpush1.bf16.msra.mxu0 %v809
    %2222 = vmatprep.subr.bf16.mxu0 0
    %2223 = vmatpush1.bf16.msra.mxu0 %v810
    %2224 = vmatprep.subr.bf16.mxu0 0
    %2225 = vmatpush1.bf16.msra.mxu0 %v811
    %2226 = vmatprep.subr.bf16.mxu0 0
    %2227 = vmatpush1.bf16.msra.mxu0 %v812
    %2228 = vmatprep.subr.bf16.mxu0 0
    %2229 = vmatpush1.bf16.msra.mxu0 0
    %2230 = vmatprep.subr.bf16.mxu0 0
    %2231 = vmatpush1.bf16.msra.mxu0 0
    %2232 = vmatprep.subr.bf16.mxu0 0
    %2233 = vmatpush1.bf16.msra.mxu0 0
    %2234 = vmatprep.subr.bf16.mxu0 0
    %2235 = vmatpush1.bf16.msra.mxu0 0
    %2236 = vmatprep.subr.bf16.mxu0 0
    %2237 = vmatpush1.bf16.msra.mxu0 0
    %2238 = vmatprep.subr.bf16.mxu0 0
    %2239 = vmatpush1.bf16.msra.mxu0 0
    %2240 = vmatprep.subr.bf16.mxu0 0
    %2241 = vmatpush1.bf16.msra.mxu0 0
    %2242 = vmatprep.subr.bf16.mxu0 0
    %2243 = vmatpush1.bf16.msra.mxu0 0
    %2244 = vmatprep.mubr.bf16.mxu0 0
    %2245 = vmatmul.mubr.bf16.gmra.mrb[0].mxu0 %v2210
    %v2246 = vpop.f32.mrb[0].mxu0
    %v2247 = vadd.f32 0.0, %v2246
    %v2248 = vpop.f32.mrb[0].mxu0
    %v2249 = vpop.f32.mrb[0].mxu0
    %v2250 = vpop.f32.mrb[0].mxu0
    %2251 = vdwg.mxu0
    %v2252 = vpack.c.bf16 %v2247, %v2247
    %2253 = vmatprep.subr.bf16.mxu0 0
    %2254 = vmatpush1.bf16.msra.mxu0 %v894
    %2255 = vmatprep.subr.bf16.mxu0 0
    %2256 = vmatpush1.bf16.msra.mxu0 %v895
    %2257 = vmatprep.subr.bf16.mxu0 0
    %2258 = vmatpush1.bf16.msra.mxu0 %v896
    %2259 = vmatprep.subr.bf16.mxu0 0
    %2260 = vmatpush1.bf16.msra.mxu0 %v897
    %2261 = vmatprep.subr.bf16.mxu0 0
    %2262 = vmatpush1.bf16.msra.mxu0 %v898
    %2263 = vmatprep.subr.bf16.mxu0 0
    %2264 = vmatpush1.bf16.msra.mxu0 %v899
    %2265 = vmatprep.subr.bf16.mxu0 0
    %2266 = vmatpush1.bf16.msra.mxu0 %v900
    %2267 = vmatprep.subr.bf16.mxu0 0
    %2268 = vmatpush1.bf16.msra.mxu0 %v901
    %2269 = vmatprep.subr.bf16.mxu0 0
    %2270 = vmatpush1.bf16.msra.mxu0 0
    %2271 = vmatprep.subr.bf16.mxu0 0
    %2272 = vmatpush1.bf16.msra.mxu0 0
    %2273 = vmatprep.subr.bf16.mxu0 0
    %2274 = vmatpush1.bf16.msra.mxu0 0
    %2275 = vmatprep.subr.bf16.mxu0 0
    %2276 = vmatpush1.bf16.msra.mxu0 0
    %2277 = vmatprep.subr.bf16.mxu0 0
    %2278 = vmatpush1.bf16.msra.mxu0 0
    %2279 = vmatprep.subr.bf16.mxu0 0
    %2280 = vmatpush1.bf16.msra.mxu0 0
    %2281 = vmatprep.subr.bf16.mxu0 0
    %2282 = vmatpush1.bf16.msra.mxu0 0
    %2283 = vmatprep.subr.bf16.mxu0 0
    %2284 = vmatpush1.bf16.msra.mxu0 0
    %2285 = vmatprep.mubr.bf16.mxu0 0
    %2286 = vmatmul.mubr.bf16.gmra.mrb[0].mxu0 %v2252
    %v2287 = vpop.f32.mrb[0].mxu0
    %v2288 = vadd.f32 0.0, %v2287
    %v2289 = vpop.f32.mrb[0].mxu0
    %v2290 = vpop.f32.mrb[0].mxu0
    %v2291 = vpop.f32.mrb[0].mxu0
    %2292 = vdwg.mxu0
    %v2294 = vrot.slane %v2288, 4
    %v2296 = vadd.f32 %v411, %v2294
    %v2297 = vmax.f32 %v2296, 0.0
    %v2298 = vpack.c.bf16 %v2297, %v2297
    %v2300 = vrot.slane %v2298, 2
    %2302 = vmatprep.subr.bf16.mxu0 %v1034
    %2303 = vmatpush1.bf16.msra.mxu0 %v1033
    %2304 = vmatprep.subr.bf16.mxu0 %v1037
    %2305 = vmatpush1.bf16.msra.mxu0 %v1036
    %2306 = vmatprep.subr.bf16.mxu0 %v1040
    %2307 = vmatpush1.bf16.msra.mxu0 %v1039
    %2308 = vmatprep.subr.bf16.mxu0 %v1043
    %2309 = vmatpush1.bf16.msra.mxu0 %v1042
    %2310 = vmatprep.subr.bf16.mxu0 %v1046
    %2311 = vmatpush1.bf16.msra.mxu0 %v1045
    %2312 = vmatprep.subr.bf16.mxu0 %v1049
    %2313 = vmatpush1.bf16.msra.mxu0 %v1048
    %2314 = vmatprep.subr.bf16.mxu0 %v1052
    %2315 = vmatpush1.bf16.msra.mxu0 %v1051
    %2316 = vmatprep.subr.bf16.mxu0 %v1055
    %2317 = vmatpush1.bf16.msra.mxu0 %v1054
    %2318 = vmatprep.subr.bf16.mxu0 0
    %2319 = vmatpush1.bf16.msra.mxu0 0
    %2320 = vmatprep.subr.bf16.mxu0 0
    %2321 = vmatpush1.bf16.msra.mxu0 0
    %2322 = vmatprep.subr.bf16.mxu0 0
    %2323 = vmatpush1.bf16.msra.mxu0 0
    %2324 = vmatprep.subr.bf16.mxu0 0
    %2325 = vmatpush1.bf16.msra.mxu0 0
    %2326 = vmatprep.subr.bf16.mxu0 0
    %2327 = vmatpush1.bf16.msra.mxu0 0
    %2328 = vmatprep.subr.bf16.mxu0 0
    %2329 = vmatpush1.bf16.msra.mxu0 0
    %2330 = vmatprep.subr.bf16.mxu0 0
    %2331 = vmatpush1.bf16.msra.mxu0 0
    %2332 = vmatprep.subr.bf16.mxu0 0
    %2333 = vmatpush1.bf16.msra.mxu0 0
    %2334 = vmatprep.mubr.bf16.mxu0 0
    %2335 = vmatmul.mubr.bf16.gmra.mrb[0].mxu0 %v2300
    %v2336 = vpop.f32.mrb[0].mxu0
    %v2337 = vadd.f32 0.0, %v2336
    %v2338 = vpop.f32.mrb[0].mxu0
    %v2339 = vadd.f32 0.0, %v2338
    %v2340 = vpop.f32.mrb[0].mxu0
    %v2341 = vpop.f32.mrb[0].mxu0
    %2342 = vdwg.mxu0
    %2343 = vmatprep.subr.bf16.mxu0 0
    %2344 = vmatpush1.bf16.msra.mxu0 %v1035
    %2345 = vmatprep.subr.bf16.mxu0 0
    %2346 = vmatpush1.bf16.msra.mxu0 %v1038
    %2347 = vmatprep.subr.bf16.mxu0 0
    %2348 = vmatpush1.bf16.msra.mxu0 %v1041
    %2349 = vmatprep.subr.bf16.mxu0 0
    %2350 = vmatpush1.bf16.msra.mxu0 %v1044
    %2351 = vmatprep.subr.bf16.mxu0 0
    %2352 = vmatpush1.bf16.msra.mxu0 %v1047
    %2353 = vmatprep.subr.bf16.mxu0 0
    %2354 = vmatpush1.bf16.msra.mxu0 %v1050
    %2355 = vmatprep.subr.bf16.mxu0 0
    %2356 = vmatpush1.bf16.msra.mxu0 %v1053
    %2357 = vmatprep.subr.bf16.mxu0 0
    %2358 = vmatpush1.bf16.msra.mxu0 %v1056
    %2359 = vmatprep.subr.bf16.mxu0 0
    %2360 = vmatpush1.bf16.msra.mxu0 0
    %2361 = vmatprep.subr.bf16.mxu0 0
    %2362 = vmatpush1.bf16.msra.mxu0 0
    %2363 = vmatprep.subr.bf16.mxu0 0
    %2364 = vmatpush1.bf16.msra.mxu0 0
    %2365 = vmatprep.subr.bf16.mxu0 0
    %2366 = vmatpush1.bf16.msra.mxu0 0
    %2367 = vmatprep.subr.bf16.mxu0 0
    %2368 = vmatpush1.bf16.msra.mxu0 0
    %2369 = vmatprep.subr.bf16.mxu0 0
    %2370 = vmatpush1.bf16.msra.mxu0 0
    %2371 = vmatprep.subr.bf16.mxu0 0
    %2372 = vmatpush1.bf16.msra.mxu0 0
    %2373 = vmatprep.subr.bf16.mxu0 0
    %2374 = vmatpush1.bf16.msra.mxu0 0
    %2375 = vmatprep.mubr.bf16.mxu0 0
    %2376 = vmatmul.mubr.bf16.gmra.mrb[0].mxu0 %v2300
    %v2377 = vpop.f32.mrb[0].mxu0
    %v2378 = vadd.f32 0.0, %v2377
    %v2379 = vpop.f32.mrb[0].mxu0
    %v2380 = vpop.f32.mrb[0].mxu0
    %v2381 = vpop.f32.mrb[0].mxu0
    %2382 = vdwg.mxu0
    %v2383 = vadd.f32 %v2337, %v2146
    %v2384 = vadd.f32 %v2339, %v2185
    %v2385 = vadd.f32 %v2383, %v1168
    %v2386 = vadd.f32 %v2384, %v1172
    %v2387 = vxor.u32 %v2385, 2147483648
    %v2388 = vxor.u32 %v2386, 2147483648
    %v2389 = vmul.f32 %v2387, 1.442695
    %v2390 = vpow.pop %v2389
    %v2391 = vmul.f32 %v2388, 1.442695
    %v2392 = vpow.pop %v2391
    %v2393 = vadd.f32 %v2390, 1.0
    %v2394 = vadd.f32 %v2392, 1.0
    %v2395 = vrcp.pop %v2393
    %v2396 = vmul.f32 1.0, %v2395
    %v2397 = vrcp.pop %v2394
    %v2398 = vmul.f32 1.0, %v2397
    %v2399 = vadd.f32 %v2378, %v512
    %v2400 = vadd.f32 %v2187, %v513
    %v2401 = vmul.f32 %v2396, %v2400
    %v2402 = vadd.f32 %v2399, %v2401
    %v2403 = vtanh.pop %v2402
    %v2404 = vsub.f32 1.0, %v2398
    %v2405 = vmul.f32 %v2404, %v2403
    %v2406 = vmul.f32 %v2398, %v2106
    %v2407 = vadd.f32 %v2405, %v2406
    %2408 = vst [vmem:[#allocation2 + $0x4] sm:$0x1] %v2407
    %v2409 = vpack.c.bf16 %v2407, %v2407
    %2410 = vmatprep.subr.bf16.mxu0 %v613
    %2411 = vmatpush1.bf16.msra.mxu0 %v612
    %2412 = vmatprep.subr.bf16.mxu0 %v617
    %2413 = vmatpush1.bf16.msra.mxu0 %v616
    %2414 = vmatprep.subr.bf16.mxu0 %v621
    %2415 = vmatpush1.bf16.msra.mxu0 %v620
    %2416 = vmatprep.subr.bf16.mxu0 %v625
    %2417 = vmatpush1.bf16.msra.mxu0 %v624
    %2418 = vmatprep.subr.bf16.mxu0 %v629
    %2419 = vmatpush1.bf16.msra.mxu0 %v628
    %2420 = vmatprep.subr.bf16.mxu0 %v633
    %2421 = vmatpush1.bf16.msra.mxu0 %v632
    %2422 = vmatprep.subr.bf16.mxu0 %v637
    %2423 = vmatpush1.bf16.msra.mxu0 %v636
    %2424 = vmatprep.subr.bf16.mxu0 %v641
    %2425 = vmatpush1.bf16.msra.mxu0 %v640
    %2426 = vmatprep.subr.bf16.mxu0 0
    %2427 = vmatpush1.bf16.msra.mxu0 0
    %2428 = vmatprep.subr.bf16.mxu0 0
    %2429 = vmatpush1.bf16.msra.mxu0 0
    %2430 = vmatprep.subr.bf16.mxu0 0
    %2431 = vmatpush1.bf16.msra.mxu0 0
    %2432 = vmatprep.subr.bf16.mxu0 0
    %2433 = vmatpush1.bf16.msra.mxu0 0
    %2434 = vmatprep.subr.bf16.mxu0 0
    %2435 = vmatpush1.bf16.msra.mxu0 0
    %2436 = vmatprep.subr.bf16.mxu0 0
    %2437 = vmatpush1.bf16.msra.mxu0 0
    %2438 = vmatprep.subr.bf16.mxu0 0
    %2439 = vmatpush1.bf16.msra.mxu0 0
    %2440 = vmatprep.subr.bf16.mxu0 0
    %2441 = vmatpush1.bf16.msra.mxu0 0
    %2442 = vmatprep.mubr.bf16.mxu0 0
    %2443 = vmatmul.mubr.bf16.gmra.mrb[0].mxu0 %v2409
    %v2444 = vpop.f32.mrb[0].mxu0
    %v2445 = vadd.f32 0.0, %v2444
    %v2446 = vpop.f32.mrb[0].mxu0
    %v2447 = vadd.f32 0.0, %v2446
    %v2448 = vpop.f32.mrb[0].mxu0
    %v2449 = vpop.f32.mrb[0].mxu0
    %2450 = vdwg.mxu0
    %2451 = vmatprep.subr.bf16.mxu0 %v615
    %2452 = vmatpush1.bf16.msra.mxu0 %v614
    %2453 = vmatprep.subr.bf16.mxu0 %v619
    %2454 = vmatpush1.bf16.msra.mxu0 %v618
    %2455 = vmatprep.subr.bf16.mxu0 %v623
    %2456 = vmatpush1.bf16.msra.mxu0 %v622
    %2457 = vmatprep.subr.bf16.mxu0 %v627
    %2458 = vmatpush1.bf16.msra.mxu0 %v626
    %2459 = vmatprep.subr.bf16.mxu0 %v631
    %2460 = vmatpush1.bf16.msra.mxu0 %v630
    %2461 = vmatprep.subr.bf16.mxu0 %v635
    %2462 = vmatpush1.bf16.msra.mxu0 %v634
    %2463 = vmatprep.subr.bf16.mxu0 %v639
    %2464 = vmatpush1.bf16.msra.mxu0 %v638
    %2465 = vmatprep.subr.bf16.mxu0 %v643
    %2466 = vmatpush1.bf16.msra.mxu0 %v642
    %2467 = vmatprep.subr.bf16.mxu0 0
    %2468 = vmatpush1.bf16.msra.mxu0 0
    %2469 = vmatprep.subr.bf16.mxu0 0
    %2470 = vmatpush1.bf16.msra.mxu0 0
    %2471 = vmatprep.subr.bf16.mxu0 0
    %2472 = vmatpush1.bf16.msra.mxu0 0
    %2473 = vmatprep.subr.bf16.mxu0 0
    %2474 = vmatpush1.bf16.msra.mxu0 0
    %2475 = vmatprep.subr.bf16.mxu0 0
    %2476 = vmatpush1.bf16.msra.mxu0 0
    %2477 = vmatprep.subr.bf16.mxu0 0
    %2478 = vmatpush1.bf16.msra.mxu0 0
    %2479 = vmatprep.subr.bf16.mxu0 0
    %2480 = vmatpush1.bf16.msra.mxu0 0
    %2481 = vmatprep.subr.bf16.mxu0 0
    %2482 = vmatpush1.bf16.msra.mxu0 0
    %2483 = vmatprep.mubr.bf16.mxu0 0
    %2484 = vmatmul.mubr.bf16.gmra.mrb[0].mxu0 %v2409
    %v2485 = vpop.f32.mrb[0].mxu0
    %v2486 = vadd.f32 0.0, %v2485
    %v2487 = vpop.f32.mrb[0].mxu0
    %v2488 = vadd.f32 0.0, %v2487
    %v2489 = vpop.f32.mrb[0].mxu0
    %v2490 = vpop.f32.mrb[0].mxu0
    %2491 = vdwg.mxu0
    %v2493 = vrot.slane %v2445, 3
    %v2495 = vadd.f32 %v409, %v2493
    %vm2496 = vcmask 1045509
    %v2497 = vsel %vm2496, %v2495, -inf
    %2498 = vmax.xlane.f32.xlu0 %v2497
    %v2499 = vpop.xlane.xlu0 %2498
    %v2500 = vsub.f32 %v2495, %v2499
    %v2501 = vmul.f32 %v2500, 1.442695
    %v2502 = vpow.pop %v2501
    %v2503 = vsel %vm2496, %v2502, 0.0
    %2504 = vadd.xlane.f32.xlu0 %v2503
    %v2505 = vpop.xlane.xlu0 %2504
    %v2506 = vrcp.pop %v2505
    %v2507 = vmul.f32 %v2502, %v2506
    %2508 = vst [vmem:[#allocation20] sm:$0x20] %v2507
    %v2509 = vpack.c.bf16 %v2507, %v2507
    %v2511 = vshrl.u32 %v2509, 16
    %v2513 = vrot.slane %v2511, 2
    %2515 = vmatprep.subr.bf16.mxu0 0
    %2516 = vmatpush1.bf16.msra.mxu0 %v805
    %2517 = vmatprep.subr.bf16.mxu0 0
    %2518 = vmatpush1.bf16.msra.mxu0 %v806
    %2519 = vmatprep.subr.bf16.mxu0 0
    %2520 = vmatpush1.bf16.msra.mxu0 %v807
    %2521 = vmatprep.subr.bf16.mxu0 0
    %2522 = vmatpush1.bf16.msra.mxu0 %v808
    %2523 = vmatprep.subr.bf16.mxu0 0
    %2524 = vmatpush1.bf16.msra.mxu0 %v809
    %2525 = vmatprep.subr.bf16.mxu0 0
    %2526 = vmatpush1.bf16.msra.mxu0 %v810
    %2527 = vmatprep.subr.bf16.mxu0 0
    %2528 = vmatpush1.bf16.msra.mxu0 %v811
    %2529 = vmatprep.subr.bf16.mxu0 0
    %2530 = vmatpush1.bf16.msra.mxu0 %v812
    %2531 = vmatprep.subr.bf16.mxu0 0
    %2532 = vmatpush1.bf16.msra.mxu0 0
    %2533 = vmatprep.subr.bf16.mxu0 0
    %2534 = vmatpush1.bf16.msra.mxu0 0
    %2535 = vmatprep.subr.bf16.mxu0 0
    %2536 = vmatpush1.bf16.msra.mxu0 0
    %2537 = vmatprep.subr.bf16.mxu0 0
    %2538 = vmatpush1.bf16.msra.mxu0 0
    %2539 = vmatprep.subr.bf16.mxu0 0
    %2540 = vmatpush1.bf16.msra.mxu0 0
    %2541 = vmatprep.subr.bf16.mxu0 0
    %2542 = vmatpush1.bf16.msra.mxu0 0
    %2543 = vmatprep.subr.bf16.mxu0 0
    %2544 = vmatpush1.bf16.msra.mxu0 0
    %2545 = vmatprep.subr.bf16.mxu0 0
    %2546 = vmatpush1.bf16.msra.mxu0 0
    %2547 = vmatprep.mubr.bf16.mxu0 0
    %2548 = vmatmul.mubr.bf16.gmra.mrb[0].mxu0 %v2513
    %v2549 = vpop.f32.mrb[0].mxu0
    %v2550 = vadd.f32 0.0, %v2549
    %v2551 = vpop.f32.mrb[0].mxu0
    %v2552 = vpop.f32.mrb[0].mxu0
    %v2553 = vpop.f32.mrb[0].mxu0
    %2554 = vdwg.mxu0
    %v2555 = vpack.c.bf16 %v2550, %v2550
    %2556 = vmatprep.subr.bf16.mxu0 0
    %2557 = vmatpush1.bf16.msra.mxu0 %v894
    %2558 = vmatprep.subr.bf16.mxu0 0
    %2559 = vmatpush1.bf16.msra.mxu0 %v895
    %2560 = vmatprep.subr.bf16.mxu0 0
    %2561 = vmatpush1.bf16.msra.mxu0 %v896
    %2562 = vmatprep.subr.bf16.mxu0 0
    %2563 = vmatpush1.bf16.msra.mxu0 %v897
    %2564 = vmatprep.subr.bf16.mxu0 0
    %2565 = vmatpush1.bf16.msra.mxu0 %v898
    %2566 = vmatprep.subr.bf16.mxu0 0
    %2567 = vmatpush1.bf16.msra.mxu0 %v899
    %2568 = vmatprep.subr.bf16.mxu0 0
    %2569 = vmatpush1.bf16.msra.mxu0 %v900
    %2570 = vmatprep.subr.bf16.mxu0 0
    %2571 = vmatpush1.bf16.msra.mxu0 %v901
    %2572 = vmatprep.subr.bf16.mxu0 0
    %2573 = vmatpush1.bf16.msra.mxu0 0
    %2574 = vmatprep.subr.bf16.mxu0 0
    %2575 = vmatpush1.bf16.msra.mxu0 0
    %2576 = vmatprep.subr.bf16.mxu0 0
    %2577 = vmatpush1.bf16.msra.mxu0 0
    %2578 = vmatprep.subr.bf16.mxu0 0
    %2579 = vmatpush1.bf16.msra.mxu0 0
    %2580 = vmatprep.subr.bf16.mxu0 0
    %2581 = vmatpush1.bf16.msra.mxu0 0
    %2582 = vmatprep.subr.bf16.mxu0 0
    %2583 = vmatpush1.bf16.msra.mxu0 0
    %2584 = vmatprep.subr.bf16.mxu0 0
    %2585 = vmatpush1.bf16.msra.mxu0 0
    %2586 = vmatprep.subr.bf16.mxu0 0
    %2587 = vmatpush1.bf16.msra.mxu0 0
    %2588 = vmatprep.mubr.bf16.mxu0 0
    %2589 = vmatmul.mubr.bf16.gmra.mrb[0].mxu0 %v2555
    %v2590 = vpop.f32.mrb[0].mxu0
    %v2591 = vadd.f32 0.0, %v2590
    %v2592 = vpop.f32.mrb[0].mxu0
    %v2593 = vpop.f32.mrb[0].mxu0
    %v2594 = vpop.f32.mrb[0].mxu0
    %2595 = vdwg.mxu0
    %v2597 = vrot.slane %v2591, 3
    %v2599 = vadd.f32 %v411, %v2597
    %v2600 = vmax.f32 %v2599, 0.0
    %v2601 = vpack.c.bf16 %v2600, %v2600
    %v2603 = vshrl.u32 %v2601, 16
    %v2605 = vrot.slane %v2603, 2
    %2607 = vmatprep.subr.bf16.mxu0 %v1034
    %2608 = vmatpush1.bf16.msra.mxu0 %v1033
    %2609 = vmatprep.subr.bf16.mxu0 %v1037
    %2610 = vmatpush1.bf16.msra.mxu0 %v1036
    %2611 = vmatprep.subr.bf16.mxu0 %v1040
    %2612 = vmatpush1.bf16.msra.mxu0 %v1039
    %2613 = vmatprep.subr.bf16.mxu0 %v1043
    %2614 = vmatpush1.bf16.msra.mxu0 %v1042
    %2615 = vmatprep.subr.bf16.mxu0 %v1046
    %2616 = vmatpush1.bf16.msra.mxu0 %v1045
    %2617 = vmatprep.subr.bf16.mxu0 %v1049
    %2618 = vmatpush1.bf16.msra.mxu0 %v1048
    %2619 = vmatprep.subr.bf16.mxu0 %v1052
    %2620 = vmatpush1.bf16.msra.mxu0 %v1051
    %2621 = vmatprep.subr.bf16.mxu0 %v1055
    %2622 = vmatpush1.bf16.msra.mxu0 %v1054
    %2623 = vmatprep.subr.bf16.mxu0 0
    %2624 = vmatpush1.bf16.msra.mxu0 0
    %2625 = vmatprep.subr.bf16.mxu0 0
    %2626 = vmatpush1.bf16.msra.mxu0 0
    %2627 = vmatprep.subr.bf16.mxu0 0
    %2628 = vmatpush1.bf16.msra.mxu0 0
    %2629 = vmatprep.subr.bf16.mxu0 0
    %2630 = vmatpush1.bf16.msra.mxu0 0
    %2631 = vmatprep.subr.bf16.mxu0 0
    %2632 = vmatpush1.bf16.msra.mxu0 0
    %2633 = vmatprep.subr.bf16.mxu0 0
    %2634 = vmatpush1.bf16.msra.mxu0 0
    %2635 = vmatprep.subr.bf16.mxu0 0
    %2636 = vmatpush1.bf16.msra.mxu0 0
    %2637 = vmatprep.subr.bf16.mxu0 0
    %2638 = vmatpush1.bf16.msra.mxu0 0
    %2639 = vmatprep.mubr.bf16.mxu0 0
    %2640 = vmatmul.mubr.bf16.gmra.mrb[0].mxu0 %v2605
    %v2641 = vpop.f32.mrb[0].mxu0
    %v2642 = vadd.f32 0.0, %v2641
    %v2643 = vpop.f32.mrb[0].mxu0
    %v2644 = vadd.f32 0.0, %v2643
    %v2645 = vpop.f32.mrb[0].mxu0
    %v2646 = vpop.f32.mrb[0].mxu0
    %2647 = vdwg.mxu0
    %2648 = vmatprep.subr.bf16.mxu0 0
    %2649 = vmatpush1.bf16.msra.mxu0 %v1035
    %2650 = vmatprep.subr.bf16.mxu0 0
    %2651 = vmatpush1.bf16.msra.mxu0 %v1038
    %2652 = vmatprep.subr.bf16.mxu0 0
    %2653 = vmatpush1.bf16.msra.mxu0 %v1041
    %2654 = vmatprep.subr.bf16.mxu0 0
    %2655 = vmatpush1.bf16.msra.mxu0 %v1044
    %2656 = vmatprep.subr.bf16.mxu0 0
    %2657 = vmatpush1.bf16.msra.mxu0 %v1047
    %2658 = vmatprep.subr.bf16.mxu0 0
    %2659 = vmatpush1.bf16.msra.mxu0 %v1050
    %2660 = vmatprep.subr.bf16.mxu0 0
    %2661 = vmatpush1.bf16.msra.mxu0 %v1053
    %2662 = vmatprep.subr.bf16.mxu0 0
    %2663 = vmatpush1.bf16.msra.mxu0 %v1056
    %2664 = vmatprep.subr.bf16.mxu0 0
    %2665 = vmatpush1.bf16.msra.mxu0 0
    %2666 = vmatprep.subr.bf16.mxu0 0
    %2667 = vmatpush1.bf16.msra.mxu0 0
    %2668 = vmatprep.subr.bf16.mxu0 0
    %2669 = vmatpush1.bf16.msra.mxu0 0
    %2670 = vmatprep.subr.bf16.mxu0 0
    %2671 = vmatpush1.bf16.msra.mxu0 0
    %2672 = vmatprep.subr.bf16.mxu0 0
    %2673 = vmatpush1.bf16.msra.mxu0 0
    %2674 = vmatprep.subr.bf16.mxu0 0
    %2675 = vmatpush1.bf16.msra.mxu0 0
    %2676 = vmatprep.subr.bf16.mxu0 0
    %2677 = vmatpush1.bf16.msra.mxu0 0
    %2678 = vmatprep.subr.bf16.mxu0 0
    %2679 = vmatpush1.bf16.msra.mxu0 0
    %2680 = vmatprep.mubr.bf16.mxu0 0
    %2681 = vmatmul.mubr.bf16.gmra.mrb[0].mxu0 %v2605
    %v2682 = vpop.f32.mrb[0].mxu0
    %v2683 = vadd.f32 0.0, %v2682
    %v2684 = vpop.f32.mrb[0].mxu0
    %v2685 = vpop.f32.mrb[0].mxu0
    %v2686 = vpop.f32.mrb[0].mxu0
    %2687 = vdwg.mxu0
    %v2688 = vadd.f32 %v2642, %v2447
    %v2689 = vadd.f32 %v2644, %v2486
    %v2690 = vadd.f32 %v2688, %v1168
    %v2691 = vadd.f32 %v2689, %v1172
    %v2692 = vxor.u32 %v2690, 2147483648
    %v2693 = vxor.u32 %v2691, 2147483648
    %v2694 = vmul.f32 %v2692, 1.442695
    %v2695 = vpow.pop %v2694
    %v2696 = vmul.f32 %v2693, 1.442695
    %v2697 = vpow.pop %v2696
    %v2698 = vadd.f32 %v2695, 1.0
    %v2699 = vadd.f32 %v2697, 1.0
    %v2700 = vrcp.pop %v2698
    %v2701 = vmul.f32 1.0, %v2700
    %v2702 = vrcp.pop %v2699
    %v2703 = vmul.f32 1.0, %v2702
    %v2704 = vadd.f32 %v2683, %v512
    %v2705 = vadd.f32 %v2488, %v513
    %v2706 = vmul.f32 %v2701, %v2705
    %v2707 = vadd.f32 %v2704, %v2706
    %v2708 = vtanh.pop %v2707
    %v2709 = vsub.f32 1.0, %v2703
    %v2710 = vmul.f32 %v2709, %v2708
    %v2711 = vmul.f32 %v2703, %v2407
    %v2712 = vadd.f32 %v2710, %v2711
    %2713 = vst [vmem:[#allocation2 + $0x5] sm:$0x1] %v2712
    %v2714 = vpack.c.bf16 %v2712, %v2712
    %2715 = vmatprep.subr.bf16.mxu0 %v613
    %2716 = vmatpush1.bf16.msra.mxu0 %v612
    %2717 = vmatprep.subr.bf16.mxu0 %v617
    %2718 = vmatpush1.bf16.msra.mxu0 %v616
    %2719 = vmatprep.subr.bf16.mxu0 %v621
    %2720 = vmatpush1.bf16.msra.mxu0 %v620
    %2721 = vmatprep.subr.bf16.mxu0 %v625
    %2722 = vmatpush1.bf16.msra.mxu0 %v624
    %2723 = vmatprep.subr.bf16.mxu0 %v629
    %2724 = vmatpush1.bf16.msra.mxu0 %v628
    %2725 = vmatprep.subr.bf16.mxu0 %v633
    %2726 = vmatpush1.bf16.msra.mxu0 %v632
    %2727 = vmatprep.subr.bf16.mxu0 %v637
    %2728 = vmatpush1.bf16.msra.mxu0 %v636
    %2729 = vmatprep.subr.bf16.mxu0 %v641
    %2730 = vmatpush1.bf16.msra.mxu0 %v640
    %2731 = vmatprep.subr.bf16.mxu0 0
    %2732 = vmatpush1.bf16.msra.mxu0 0
    %2733 = vmatprep.subr.bf16.mxu0 0
    %2734 = vmatpush1.bf16.msra.mxu0 0
    %2735 = vmatprep.subr.bf16.mxu0 0
    %2736 = vmatpush1.bf16.msra.mxu0 0
    %2737 = vmatprep.subr.bf16.mxu0 0
    %2738 = vmatpush1.bf16.msra.mxu0 0
    %2739 = vmatprep.subr.bf16.mxu0 0
    %2740 = vmatpush1.bf16.msra.mxu0 0
    %2741 = vmatprep.subr.bf16.mxu0 0
    %2742 = vmatpush1.bf16.msra.mxu0 0
    %2743 = vmatprep.subr.bf16.mxu0 0
    %2744 = vmatpush1.bf16.msra.mxu0 0
    %2745 = vmatprep.subr.bf16.mxu0 0
    %2746 = vmatpush1.bf16.msra.mxu0 0
    %2747 = vmatprep.mubr.bf16.mxu0 0
    %2748 = vmatmul.mubr.bf16.gmra.mrb[0].mxu0 %v2714
    %v2749 = vpop.f32.mrb[0].mxu0
    %v2750 = vadd.f32 0.0, %v2749
    %v2751 = vpop.f32.mrb[0].mxu0
    %v2752 = vadd.f32 0.0, %v2751
    %v2753 = vpop.f32.mrb[0].mxu0
    %v2754 = vpop.f32.mrb[0].mxu0
    %2755 = vdwg.mxu0
    %2756 = vmatprep.subr.bf16.mxu0 %v615
    %2757 = vmatpush1.bf16.msra.mxu0 %v614
    %2758 = vmatprep.subr.bf16.mxu0 %v619
    %2759 = vmatpush1.bf16.msra.mxu0 %v618
    %2760 = vmatprep.subr.bf16.mxu0 %v623
    %2761 = vmatpush1.bf16.msra.mxu0 %v622
    %2762 = vmatprep.subr.bf16.mxu0 %v627
    %2763 = vmatpush1.bf16.msra.mxu0 %v626
    %2764 = vmatprep.subr.bf16.mxu0 %v631
    %2765 = vmatpush1.bf16.msra.mxu0 %v630
    %2766 = vmatprep.subr.bf16.mxu0 %v635
    %2767 = vmatpush1.bf16.msra.mxu0 %v634
    %2768 = vmatprep.subr.bf16.mxu0 %v639
    %2769 = vmatpush1.bf16.msra.mxu0 %v638
    %2770 = vmatprep.subr.bf16.mxu0 %v643
    %2771 = vmatpush1.bf16.msra.mxu0 %v642
    %2772 = vmatprep.subr.bf16.mxu0 0
    %2773 = vmatpush1.bf16.msra.mxu0 0
    %2774 = vmatprep.subr.bf16.mxu0 0
    %2775 = vmatpush1.bf16.msra.mxu0 0
    %2776 = vmatprep.subr.bf16.mxu0 0
    %2777 = vmatpush1.bf16.msra.mxu0 0
    %2778 = vmatprep.subr.bf16.mxu0 0
    %2779 = vmatpush1.bf16.msra.mxu0 0
    %2780 = vmatprep.subr.bf16.mxu0 0
    %2781 = vmatpush1.bf16.msra.mxu0 0
    %2782 = vmatprep.subr.bf16.mxu0 0
    %2783 = vmatpush1.bf16.msra.mxu0 0
    %2784 = vmatprep.subr.bf16.mxu0 0
    %2785 = vmatpush1.bf16.msra.mxu0 0
    %2786 = vmatprep.subr.bf16.mxu0 0
    %2787 = vmatpush1.bf16.msra.mxu0 0
    %2788 = vmatprep.mubr.bf16.mxu0 0
    %2789 = vmatmul.mubr.bf16.gmra.mrb[0].mxu0 %v2714
    %v2790 = vpop.f32.mrb[0].mxu0
    %v2791 = vadd.f32 0.0, %v2790
    %v2792 = vpop.f32.mrb[0].mxu0
    %v2793 = vadd.f32 0.0, %v2792
    %v2794 = vpop.f32.mrb[0].mxu0
    %v2795 = vpop.f32.mrb[0].mxu0
    %2796 = vdwg.mxu0
    %v2798 = vrot.slane %v2750, 2
    %v2800 = vadd.f32 %v409, %v2798
    %vm2801 = vcmask 1046534
    %v2802 = vsel %vm2801, %v2800, -inf
    %2803 = vmax.xlane.f32.xlu0 %v2802
    %v2804 = vpop.xlane.xlu0 %2803
    %v2805 = vsub.f32 %v2800, %v2804
    %v2806 = vmul.f32 %v2805, 1.442695
    %v2807 = vpow.pop %v2806
    %v2808 = vsel %vm2801, %v2807, 0.0
    %2809 = vadd.xlane.f32.xlu0 %v2808
    %v2810 = vpop.xlane.xlu0 %2809
    %v2811 = vrcp.pop %v2810
    %v2812 = vmul.f32 %v2807, %v2811
    %2813 = vst [vmem:[#allocation20] sm:$0x40] %v2812
    %v2814 = vpack.c.bf16 %v2812, %v2812
    %v2816 = vrot.slane %v2814, 3
    %2818 = vmatprep.subr.bf16.mxu0 0
    %2819 = vmatpush1.bf16.msra.mxu0 %v805
    %2820 = vmatprep.subr.bf16.mxu0 0
    %2821 = vmatpush1.bf16.msra.mxu0 %v806
    %2822 = vmatprep.subr.bf16.mxu0 0
    %2823 = vmatpush1.bf16.msra.mxu0 %v807
    %2824 = vmatprep.subr.bf16.mxu0 0
    %2825 = vmatpush1.bf16.msra.mxu0 %v808
    %2826 = vmatprep.subr.bf16.mxu0 0
    %2827 = vmatpush1.bf16.msra.mxu0 %v809
    %2828 = vmatprep.subr.bf16.mxu0 0
    %2829 = vmatpush1.bf16.msra.mxu0 %v810
    %2830 = vmatprep.subr.bf16.mxu0 0
    %2831 = vmatpush1.bf16.msra.mxu0 %v811
    %2832 = vmatprep.subr.bf16.mxu0 0
    %2833 = vmatpush1.bf16.msra.mxu0 %v812
    %2834 = vmatprep.subr.bf16.mxu0 0
    %2835 = vmatpush1.bf16.msra.mxu0 0
    %2836 = vmatprep.subr.bf16.mxu0 0
    %2837 = vmatpush1.bf16.msra.mxu0 0
    %2838 = vmatprep.subr.bf16.mxu0 0
    %2839 = vmatpush1.bf16.msra.mxu0 0
    %2840 = vmatprep.subr.bf16.mxu0 0
    %2841 = vmatpush1.bf16.msra.mxu0 0
    %2842 = vmatprep.subr.bf16.mxu0 0
    %2843 = vmatpush1.bf16.msra.mxu0 0
    %2844 = vmatprep.subr.bf16.mxu0 0
    %2845 = vmatpush1.bf16.msra.mxu0 0
    %2846 = vmatprep.subr.bf16.mxu0 0
    %2847 = vmatpush1.bf16.msra.mxu0 0
    %2848 = vmatprep.subr.bf16.mxu0 0
    %2849 = vmatpush1.bf16.msra.mxu0 0
    %2850 = vmatprep.mubr.bf16.mxu0 0
    %2851 = vmatmul.mubr.bf16.gmra.mrb[0].mxu0 %v2816
    %v2852 = vpop.f32.mrb[0].mxu0
    %v2853 = vadd.f32 0.0, %v2852
    %v2854 = vpop.f32.mrb[0].mxu0
    %v2855 = vpop.f32.mrb[0].mxu0
    %v2856 = vpop.f32.mrb[0].mxu0
    %2857 = vdwg.mxu0
    %v2858 = vpack.c.bf16 %v2853, %v2853
    %2859 = vmatprep.subr.bf16.mxu0 0
    %2860 = vmatpush1.bf16.msra.mxu0 %v894
    %2861 = vmatprep.subr.bf16.mxu0 0
    %2862 = vmatpush1.bf16.msra.mxu0 %v895
    %2863 = vmatprep.subr.bf16.mxu0 0
    %2864 = vmatpush1.bf16.msra.mxu0 %v896
    %2865 = vmatprep.subr.bf16.mxu0 0
    %2866 = vmatpush1.bf16.msra.mxu0 %v897
    %2867 = vmatprep.subr.bf16.mxu0 0
    %2868 = vmatpush1.bf16.msra.mxu0 %v898
    %2869 = vmatprep.subr.bf16.mxu0 0
    %2870 = vmatpush1.bf16.msra.mxu0 %v899
    %2871 = vmatprep.subr.bf16.mxu0 0
    %2872 = vmatpush1.bf16.msra.mxu0 %v900
    %2873 = vmatprep.subr.bf16.mxu0 0
    %2874 = vmatpush1.bf16.msra.mxu0 %v901
    %2875 = vmatprep.subr.bf16.mxu0 0
    %2876 = vmatpush1.bf16.msra.mxu0 0
    %2877 = vmatprep.subr.bf16.mxu0 0
    %2878 = vmatpush1.bf16.msra.mxu0 0
    %2879 = vmatprep.subr.bf16.mxu0 0
    %2880 = vmatpush1.bf16.msra.mxu0 0
    %2881 = vmatprep.subr.bf16.mxu0 0
    %2882 = vmatpush1.bf16.msra.mxu0 0
    %2883 = vmatprep.subr.bf16.mxu0 0
    %2884 = vmatpush1.bf16.msra.mxu0 0
    %2885 = vmatprep.subr.bf16.mxu0 0
    %2886 = vmatpush1.bf16.msra.mxu0 0
    %2887 = vmatprep.subr.bf16.mxu0 0
    %2888 = vmatpush1.bf16.msra.mxu0 0
    %2889 = vmatprep.subr.bf16.mxu0 0
    %2890 = vmatpush1.bf16.msra.mxu0 0
    %2891 = vmatprep.mubr.bf16.mxu0 0
    %2892 = vmatmul.mubr.bf16.gmra.mrb[0].mxu0 %v2858
    %v2893 = vpop.f32.mrb[0].mxu0
    %v2894 = vadd.f32 0.0, %v2893
    %v2895 = vpop.f32.mrb[0].mxu0
    %v2896 = vpop.f32.mrb[0].mxu0
    %v2897 = vpop.f32.mrb[0].mxu0
    %2898 = vdwg.mxu0
    %v2900 = vrot.slane %v2894, 2
    %v2902 = vadd.f32 %v411, %v2900
    %v2903 = vmax.f32 %v2902, 0.0
    %v2904 = vpack.c.bf16 %v2903, %v2903
    %v2906 = vrot.slane %v2904, 3
    %2908 = vmatprep.subr.bf16.mxu0 %v1034
    %2909 = vmatpush1.bf16.msra.mxu0 %v1033
    %2910 = vmatprep.subr.bf16.mxu0 %v1037
    %2911 = vmatpush1.bf16.msra.mxu0 %v1036
    %2912 = vmatprep.subr.bf16.mxu0 %v1040
    %2913 = vmatpush1.bf16.msra.mxu0 %v1039
    %2914 = vmatprep.subr.bf16.mxu0 %v1043
    %2915 = vmatpush1.bf16.msra.mxu0 %v1042
    %2916 = vmatprep.subr.bf16.mxu0 %v1046
    %2917 = vmatpush1.bf16.msra.mxu0 %v1045
    %2918 = vmatprep.subr.bf16.mxu0 %v1049
    %2919 = vmatpush1.bf16.msra.mxu0 %v1048
    %2920 = vmatprep.subr.bf16.mxu0 %v1052
    %2921 = vmatpush1.bf16.msra.mxu0 %v1051
    %2922 = vmatprep.subr.bf16.mxu0 %v1055
    %2923 = vmatpush1.bf16.msra.mxu0 %v1054
    %2924 = vmatprep.subr.bf16.mxu0 0
    %2925 = vmatpush1.bf16.msra.mxu0 0
    %2926 = vmatprep.subr.bf16.mxu0 0
    %2927 = vmatpush1.bf16.msra.mxu0 0
    %2928 = vmatprep.subr.bf16.mxu0 0
    %2929 = vmatpush1.bf16.msra.mxu0 0
    %2930 = vmatprep.subr.bf16.mxu0 0
    %2931 = vmatpush1.bf16.msra.mxu0 0
    %2932 = vmatprep.subr.bf16.mxu0 0
    %2933 = vmatpush1.bf16.msra.mxu0 0
    %2934 = vmatprep.subr.bf16.mxu0 0
    %2935 = vmatpush1.bf16.msra.mxu0 0
    %2936 = vmatprep.subr.bf16.mxu0 0
    %2937 = vmatpush1.bf16.msra.mxu0 0
    %2938 = vmatprep.subr.bf16.mxu0 0
    %2939 = vmatpush1.bf16.msra.mxu0 0
    %2940 = vmatprep.mubr.bf16.mxu0 0
    %2941 = vmatmul.mubr.bf16.gmra.mrb[0].mxu0 %v2906
    %v2942 = vpop.f32.mrb[0].mxu0
    %v2943 = vadd.f32 0.0, %v2942
    %v2944 = vpop.f32.mrb[0].mxu0
    %v2945 = vadd.f32 0.0, %v2944
    %v2946 = vpop.f32.mrb[0].mxu0
    %v2947 = vpop.f32.mrb[0].mxu0
    %2948 = vdwg.mxu0
    %2949 = vmatprep.subr.bf16.mxu0 0
    %2950 = vmatpush1.bf16.msra.mxu0 %v1035
    %2951 = vmatprep.subr.bf16.mxu0 0
    %2952 = vmatpush1.bf16.msra.mxu0 %v1038
    %2953 = vmatprep.subr.bf16.mxu0 0
    %2954 = vmatpush1.bf16.msra.mxu0 %v1041
    %2955 = vmatprep.subr.bf16.mxu0 0
    %2956 = vmatpush1.bf16.msra.mxu0 %v1044
    %2957 = vmatprep.subr.bf16.mxu0 0
    %2958 = vmatpush1.bf16.msra.mxu0 %v1047
    %2959 = vmatprep.subr.bf16.mxu0 0
    %2960 = vmatpush1.bf16.msra.mxu0 %v1050
    %2961 = vmatprep.subr.bf16.mxu0 0
    %2962 = vmatpush1.bf16.msra.mxu0 %v1053
    %2963 = vmatprep.subr.bf16.mxu0 0
    %2964 = vmatpush1.bf16.msra.mxu0 %v1056
    %2965 = vmatprep.subr.bf16.mxu0 0
    %2966 = vmatpush1.bf16.msra.mxu0 0
    %2967 = vmatprep.subr.bf16.mxu0 0
    %2968 = vmatpush1.bf16.msra.mxu0 0
    %2969 = vmatprep.subr.bf16.mxu0 0
    %2970 = vmatpush1.bf16.msra.mxu0 0
    %2971 = vmatprep.subr.bf16.mxu0 0
    %2972 = vmatpush1.bf16.msra.mxu0 0
    %2973 = vmatprep.subr.bf16.mxu0 0
    %2974 = vmatpush1.bf16.msra.mxu0 0
    %2975 = vmatprep.subr.bf16.mxu0 0
    %2976 = vmatpush1.bf16.msra.mxu0 0
    %2977 = vmatprep.subr.bf16.mxu0 0
    %2978 = vmatpush1.bf16.msra.mxu0 0
    %2979 = vmatprep.subr.bf16.mxu0 0
    %2980 = vmatpush1.bf16.msra.mxu0 0
    %2981 = vmatprep.mubr.bf16.mxu0 0
    %2982 = vmatmul.mubr.bf16.gmra.mrb[0].mxu0 %v2906
    %v2983 = vpop.f32.mrb[0].mxu0
    %v2984 = vadd.f32 0.0, %v2983
    %v2985 = vpop.f32.mrb[0].mxu0
    %v2986 = vpop.f32.mrb[0].mxu0
    %v2987 = vpop.f32.mrb[0].mxu0
    %2988 = vdwg.mxu0
    %v2989 = vadd.f32 %v2943, %v2752
    %v2990 = vadd.f32 %v2945, %v2791
    %v2991 = vadd.f32 %v2989, %v1168
    %v2992 = vadd.f32 %v2990, %v1172
    %v2993 = vxor.u32 %v2991, 2147483648
    %v2994 = vxor.u32 %v2992, 2147483648
    %v2995 = vmul.f32 %v2993, 1.442695
    %v2996 = vpow.pop %v2995
    %v2997 = vmul.f32 %v2994, 1.442695
    %v2998 = vpow.pop %v2997
    %v2999 = vadd.f32 %v2996, 1.0
    %v3000 = vadd.f32 %v2998, 1.0
    %v3001 = vrcp.pop %v2999
    %v3002 = vmul.f32 1.0, %v3001
    %v3003 = vrcp.pop %v3000
    %v3004 = vmul.f32 1.0, %v3003
    %v3005 = vadd.f32 %v2984, %v512
    %v3006 = vadd.f32 %v2793, %v513
    %v3007 = vmul.f32 %v3002, %v3006
    %v3008 = vadd.f32 %v3005, %v3007
    %v3009 = vtanh.pop %v3008
    %v3010 = vsub.f32 1.0, %v3004
    %v3011 = vmul.f32 %v3010, %v3009
    %v3012 = vmul.f32 %v3004, %v2712
    %v3013 = vadd.f32 %v3011, %v3012
    %3014 = vst [vmem:[#allocation2 + $0x6] sm:$0x1] %v3013
    %v3015 = vpack.c.bf16 %v3013, %v3013
    %3016 = vmatprep.subr.bf16.mxu0 %v613
    %3017 = vmatpush1.bf16.msra.mxu0 %v612
    %3018 = vmatprep.subr.bf16.mxu0 %v617
    %3019 = vmatpush1.bf16.msra.mxu0 %v616
    %3020 = vmatprep.subr.bf16.mxu0 %v621
    %3021 = vmatpush1.bf16.msra.mxu0 %v620
    %3022 = vmatprep.subr.bf16.mxu0 %v625
    %3023 = vmatpush1.bf16.msra.mxu0 %v624
    %3024 = vmatprep.subr.bf16.mxu0 %v629
    %3025 = vmatpush1.bf16.msra.mxu0 %v628
    %3026 = vmatprep.subr.bf16.mxu0 %v633
    %3027 = vmatpush1.bf16.msra.mxu0 %v632
    %3028 = vmatprep.subr.bf16.mxu0 %v637
    %3029 = vmatpush1.bf16.msra.mxu0 %v636
    %3030 = vmatprep.subr.bf16.mxu0 %v641
    %3031 = vmatpush1.bf16.msra.mxu0 %v640
    %3032 = vmatprep.subr.bf16.mxu0 0
    %3033 = vmatpush1.bf16.msra.mxu0 0
    %3034 = vmatprep.subr.bf16.mxu0 0
    %3035 = vmatpush1.bf16.msra.mxu0 0
    %3036 = vmatprep.subr.bf16.mxu0 0
    %3037 = vmatpush1.bf16.msra.mxu0 0
    %3038 = vmatprep.subr.bf16.mxu0 0
    %3039 = vmatpush1.bf16.msra.mxu0 0
    %3040 = vmatprep.subr.bf16.mxu0 0
    %3041 = vmatpush1.bf16.msra.mxu0 0
    %3042 = vmatprep.subr.bf16.mxu0 0
    %3043 = vmatpush1.bf16.msra.mxu0 0
    %3044 = vmatprep.subr.bf16.mxu0 0
    %3045 = vmatpush1.bf16.msra.mxu0 0
    %3046 = vmatprep.subr.bf16.mxu0 0
    %3047 = vmatpush1.bf16.msra.mxu0 0
    %3048 = vmatprep.mubr.bf16.mxu0 0
    %3049 = vmatmul.mubr.bf16.gmra.mrb[0].mxu0 %v3015
    %v3050 = vpop.f32.mrb[0].mxu0
    %v3051 = vadd.f32 0.0, %v3050
    %v3052 = vpop.f32.mrb[0].mxu0
    %v3053 = vadd.f32 0.0, %v3052
    %v3054 = vpop.f32.mrb[0].mxu0
    %v3055 = vpop.f32.mrb[0].mxu0
    %3056 = vdwg.mxu0
    %3057 = vmatprep.subr.bf16.mxu0 %v615
    %3058 = vmatpush1.bf16.msra.mxu0 %v614
    %3059 = vmatprep.subr.bf16.mxu0 %v619
    %3060 = vmatpush1.bf16.msra.mxu0 %v618
    %3061 = vmatprep.subr.bf16.mxu0 %v623
    %3062 = vmatpush1.bf16.msra.mxu0 %v622
    %3063 = vmatprep.subr.bf16.mxu0 %v627
    %3064 = vmatpush1.bf16.msra.mxu0 %v626
    %3065 = vmatprep.subr.bf16.mxu0 %v631
    %3066 = vmatpush1.bf16.msra.mxu0 %v630
    %3067 = vmatprep.subr.bf16.mxu0 %v635
    %3068 = vmatpush1.bf16.msra.mxu0 %v634
    %3069 = vmatprep.subr.bf16.mxu0 %v639
    %3070 = vmatpush1.bf16.msra.mxu0 %v638
    %3071 = vmatprep.subr.bf16.mxu0 %v643
    %3072 = vmatpush1.bf16.msra.mxu0 %v642
    %3073 = vmatprep.subr.bf16.mxu0 0
    %3074 = vmatpush1.bf16.msra.mxu0 0
    %3075 = vmatprep.subr.bf16.mxu0 0
    %3076 = vmatpush1.bf16.msra.mxu0 0
    %3077 = vmatprep.subr.bf16.mxu0 0
    %3078 = vmatpush1.bf16.msra.mxu0 0
    %3079 = vmatprep.subr.bf16.mxu0 0
    %3080 = vmatpush1.bf16.msra.mxu0 0
    %3081 = vmatprep.subr.bf16.mxu0 0
    %3082 = vmatpush1.bf16.msra.mxu0 0
    %3083 = vmatprep.subr.bf16.mxu0 0
    %3084 = vmatpush1.bf16.msra.mxu0 0
    %3085 = vmatprep.subr.bf16.mxu0 0
    %3086 = vmatpush1.bf16.msra.mxu0 0
    %3087 = vmatprep.subr.bf16.mxu0 0
    %3088 = vmatpush1.bf16.msra.mxu0 0
    %3089 = vmatprep.mubr.bf16.mxu0 0
    %3090 = vmatmul.mubr.bf16.gmra.mrb[0].mxu0 %v3015
    %v3091 = vpop.f32.mrb[0].mxu0
    %v3092 = vadd.f32 0.0, %v3091
    %v3093 = vpop.f32.mrb[0].mxu0
    %v3094 = vadd.f32 0.0, %v3093
    %v3095 = vpop.f32.mrb[0].mxu0
    %v3096 = vpop.f32.mrb[0].mxu0
    %3097 = vdwg.mxu0
    %v3099 = vrot.slane %v3051, 1
    %v3101 = vadd.f32 %v409, %v3099
    %vm3102 = vcmask 1047559
    %v3103 = vsel %vm3102, %v3101, -inf
    %3104 = vmax.xlane.f32.xlu0 %v3103
    %v3105 = vpop.xlane.xlu0 %3104
    %v3106 = vsub.f32 %v3101, %v3105
    %v3107 = vmul.f32 %v3106, 1.442695
    %v3108 = vpow.pop %v3107
    %v3109 = vsel %vm3102, %v3108, 0.0
    %3110 = vadd.xlane.f32.xlu0 %v3109
    %v3111 = vpop.xlane.xlu0 %3110
    %v3112 = vrcp.pop %v3111
    %v3113 = vmul.f32 %v3108, %v3112
    %3114 = vst [vmem:[#allocation20] sm:$0x80] %v3113
    %v3115 = vpack.c.bf16 %v3113, %v3113
    %v3117 = vshrl.u32 %v3115, 16
    %v3119 = vrot.slane %v3117, 3
    %3121 = vmatprep.subr.bf16.mxu0 0
    %3122 = vmatpush1.bf16.msra.mxu0 %v805
    %3123 = vmatprep.subr.bf16.mxu0 0
    %3124 = vmatpush1.bf16.msra.mxu0 %v806
    %3125 = vmatprep.subr.bf16.mxu0 0
    %3126 = vmatpush1.bf16.msra.mxu0 %v807
    %3127 = vmatprep.subr.bf16.mxu0 0
    %3128 = vmatpush1.bf16.msra.mxu0 %v808
    %3129 = vmatprep.subr.bf16.mxu0 0
    %3130 = vmatpush1.bf16.msra.mxu0 %v809
    %3131 = vmatprep.subr.bf16.mxu0 0
    %3132 = vmatpush1.bf16.msra.mxu0 %v810
    %3133 = vmatprep.subr.bf16.mxu0 0
    %3134 = vmatpush1.bf16.msra.mxu0 %v811
    %3135 = vmatprep.subr.bf16.mxu0 0
    %3136 = vmatpush1.bf16.msra.mxu0 %v812
    %3137 = vmatprep.subr.bf16.mxu0 0
    %3138 = vmatpush1.bf16.msra.mxu0 0
    %3139 = vmatprep.subr.bf16.mxu0 0
    %3140 = vmatpush1.bf16.msra.mxu0 0
    %3141 = vmatprep.subr.bf16.mxu0 0
    %3142 = vmatpush1.bf16.msra.mxu0 0
    %3143 = vmatprep.subr.bf16.mxu0 0
    %3144 = vmatpush1.bf16.msra.mxu0 0
    %3145 = vmatprep.subr.bf16.mxu0 0
    %3146 = vmatpush1.bf16.msra.mxu0 0
    %3147 = vmatprep.subr.bf16.mxu0 0
    %3148 = vmatpush1.bf16.msra.mxu0 0
    %3149 = vmatprep.subr.bf16.mxu0 0
    %3150 = vmatpush1.bf16.msra.mxu0 0
    %3151 = vmatprep.subr.bf16.mxu0 0
    %3152 = vmatpush1.bf16.msra.mxu0 0
    %3153 = vmatprep.mubr.bf16.mxu0 0
    %3154 = vmatmul.mubr.bf16.gmra.mrb[0].mxu0 %v3119
    %v3155 = vpop.f32.mrb[0].mxu0
    %v3156 = vadd.f32 0.0, %v3155
    %v3157 = vpop.f32.mrb[0].mxu0
    %v3158 = vpop.f32.mrb[0].mxu0
    %v3159 = vpop.f32.mrb[0].mxu0
    %3160 = vdwg.mxu0
    %v3161 = vpack.c.bf16 %v3156, %v3156
    %3162 = vmatprep.subr.bf16.mxu0 0
    %3163 = vmatpush1.bf16.msra.mxu0 %v894
    %3164 = vmatprep.subr.bf16.mxu0 0
    %3165 = vmatpush1.bf16.msra.mxu0 %v895
    %3166 = vmatprep.subr.bf16.mxu0 0
    %3167 = vmatpush1.bf16.msra.mxu0 %v896
    %3168 = vmatprep.subr.bf16.mxu0 0
    %3169 = vmatpush1.bf16.msra.mxu0 %v897
    %3170 = vmatprep.subr.bf16.mxu0 0
    %3171 = vmatpush1.bf16.msra.mxu0 %v898
    %3172 = vmatprep.subr.bf16.mxu0 0
    %3173 = vmatpush1.bf16.msra.mxu0 %v899
    %3174 = vmatprep.subr.bf16.mxu0 0
    %3175 = vmatpush1.bf16.msra.mxu0 %v900
    %3176 = vmatprep.subr.bf16.mxu0 0
    %3177 = vmatpush1.bf16.msra.mxu0 %v901
    %3178 = vmatprep.subr.bf16.mxu0 0
    %3179 = vmatpush1.bf16.msra.mxu0 0
    %3180 = vmatprep.subr.bf16.mxu0 0
    %3181 = vmatpush1.bf16.msra.mxu0 0
    %3182 = vmatprep.subr.bf16.mxu0 0
    %3183 = vmatpush1.bf16.msra.mxu0 0
    %3184 = vmatprep.subr.bf16.mxu0 0
    %3185 = vmatpush1.bf16.msra.mxu0 0
    %3186 = vmatprep.subr.bf16.mxu0 0
    %3187 = vmatpush1.bf16.msra.mxu0 0
    %3188 = vmatprep.subr.bf16.mxu0 0
    %3189 = vmatpush1.bf16.msra.mxu0 0
    %3190 = vmatprep.subr.bf16.mxu0 0
    %3191 = vmatpush1.bf16.msra.mxu0 0
    %3192 = vmatprep.subr.bf16.mxu0 0
    %3193 = vmatpush1.bf16.msra.mxu0 0
    %3194 = vmatprep.mubr.bf16.mxu0 0
    %3195 = vmatmul.mubr.bf16.gmra.mrb[0].mxu0 %v3161
    %v3196 = vpop.f32.mrb[0].mxu0
    %v3197 = vadd.f32 0.0, %v3196
    %v3198 = vpop.f32.mrb[0].mxu0
    %v3199 = vpop.f32.mrb[0].mxu0
    %v3200 = vpop.f32.mrb[0].mxu0
    %3201 = vdwg.mxu0
    %v3203 = vrot.slane %v3197, 1
    %v3205 = vadd.f32 %v411, %v3203
    %v3206 = vmax.f32 %v3205, 0.0
    %v3207 = vpack.c.bf16 %v3206, %v3206
    %v3209 = vshrl.u32 %v3207, 16
    %v3211 = vrot.slane %v3209, 3
    %3213 = vmatprep.subr.bf16.mxu0 %v1034
    %3214 = vmatpush1.bf16.msra.mxu0 %v1033
    %3215 = vmatprep.subr.bf16.mxu0 %v1037
    %3216 = vmatpush1.bf16.msra.mxu0 %v1036
    %3217 = vmatprep.subr.bf16.mxu0 %v1040
    %3218 = vmatpush1.bf16.msra.mxu0 %v1039
    %3219 = vmatprep.subr.bf16.mxu0 %v1043
    %3220 = vmatpush1.bf16.msra.mxu0 %v1042
    %3221 = vmatprep.subr.bf16.mxu0 %v1046
    %3222 = vmatpush1.bf16.msra.mxu0 %v1045
    %3223 = vmatprep.subr.bf16.mxu0 %v1049
    %3224 = vmatpush1.bf16.msra.mxu0 %v1048
    %3225 = vmatprep.subr.bf16.mxu0 %v1052
    %3226 = vmatpush1.bf16.msra.mxu0 %v1051
    %3227 = vmatprep.subr.bf16.mxu0 %v1055
    %3228 = vmatpush1.bf16.msra.mxu0 %v1054
    %3229 = vmatprep.subr.bf16.mxu0 0
    %3230 = vmatpush1.bf16.msra.mxu0 0
    %3231 = vmatprep.subr.bf16.mxu0 0
    %3232 = vmatpush1.bf16.msra.mxu0 0
    %3233 = vmatprep.subr.bf16.mxu0 0
    %3234 = vmatpush1.bf16.msra.mxu0 0
    %3235 = vmatprep.subr.bf16.mxu0 0
    %3236 = vmatpush1.bf16.msra.mxu0 0
    %3237 = vmatprep.subr.bf16.mxu0 0
    %3238 = vmatpush1.bf16.msra.mxu0 0
    %3239 = vmatprep.subr.bf16.mxu0 0
    %3240 = vmatpush1.bf16.msra.mxu0 0
    %3241 = vmatprep.subr.bf16.mxu0 0
    %3242 = vmatpush1.bf16.msra.mxu0 0
    %3243 = vmatprep.subr.bf16.mxu0 0
    %3244 = vmatpush1.bf16.msra.mxu0 0
    %3245 = vmatprep.mubr.bf16.mxu0 0
    %3246 = vmatmul.mubr.bf16.gmra.mrb[0].mxu0 %v3211
    %v3247 = vpop.f32.mrb[0].mxu0
    %v3248 = vadd.f32 0.0, %v3247
    %v3249 = vpop.f32.mrb[0].mxu0
    %v3250 = vadd.f32 0.0, %v3249
    %v3251 = vpop.f32.mrb[0].mxu0
    %v3252 = vpop.f32.mrb[0].mxu0
    %3253 = vdwg.mxu0
    %3254 = vmatprep.subr.bf16.mxu0 0
    %3255 = vmatpush1.bf16.msra.mxu0 %v1035
    %3256 = vmatprep.subr.bf16.mxu0 0
    %3257 = vmatpush1.bf16.msra.mxu0 %v1038
    %3258 = vmatprep.subr.bf16.mxu0 0
    %3259 = vmatpush1.bf16.msra.mxu0 %v1041
    %3260 = vmatprep.subr.bf16.mxu0 0
    %3261 = vmatpush1.bf16.msra.mxu0 %v1044
    %3262 = vmatprep.subr.bf16.mxu0 0
    %3263 = vmatpush1.bf16.msra.mxu0 %v1047
    %3264 = vmatprep.subr.bf16.mxu0 0
    %3265 = vmatpush1.bf16.msra.mxu0 %v1050
    %3266 = vmatprep.subr.bf16.mxu0 0
    %3267 = vmatpush1.bf16.msra.mxu0 %v1053
    %3268 = vmatprep.subr.bf16.mxu0 0
    %3269 = vmatpush1.bf16.msra.mxu0 %v1056
    %3270 = vmatprep.subr.bf16.mxu0 0
    %3271 = vmatpush1.bf16.msra.mxu0 0
    %3272 = vmatprep.subr.bf16.mxu0 0
    %3273 = vmatpush1.bf16.msra.mxu0 0
    %3274 = vmatprep.subr.bf16.mxu0 0
    %3275 = vmatpush1.bf16.msra.mxu0 0
    %3276 = vmatprep.subr.bf16.mxu0 0
    %3277 = vmatpush1.bf16.msra.mxu0 0
    %3278 = vmatprep.subr.bf16.mxu0 0
    %3279 = vmatpush1.bf16.msra.mxu0 0
    %3280 = vmatprep.subr.bf16.mxu0 0
    %3281 = vmatpush1.bf16.msra.mxu0 0
    %3282 = vmatprep.subr.bf16.mxu0 0
    %3283 = vmatpush1.bf16.msra.mxu0 0
    %3284 = vmatprep.subr.bf16.mxu0 0
    %3285 = vmatpush1.bf16.msra.mxu0 0
    %3286 = vmatprep.mubr.bf16.mxu0 0
    %3287 = vmatmul.mubr.bf16.gmra.mrb[0].mxu0 %v3211
    %v3288 = vpop.f32.mrb[0].mxu0
    %v3289 = vadd.f32 0.0, %v3288
    %v3290 = vpop.f32.mrb[0].mxu0
    %v3291 = vpop.f32.mrb[0].mxu0
    %v3292 = vpop.f32.mrb[0].mxu0
    %3293 = vdwg.mxu0
    %v3294 = vadd.f32 %v3248, %v3053
    %v3295 = vadd.f32 %v3250, %v3092
    %v3296 = vadd.f32 %v3294, %v1168
    %v3297 = vadd.f32 %v3295, %v1172
    %v3298 = vxor.u32 %v3296, 2147483648
    %v3299 = vxor.u32 %v3297, 2147483648
    %v3300 = vmul.f32 %v3298, 1.442695
    %v3301 = vpow.pop %v3300
    %v3302 = vmul.f32 %v3299, 1.442695
    %v3303 = vpow.pop %v3302
    %v3304 = vadd.f32 %v3301, 1.0
    %v3305 = vadd.f32 %v3303, 1.0
    %v3306 = vrcp.pop %v3304
    %v3307 = vmul.f32 1.0, %v3306
    %v3308 = vrcp.pop %v3305
    %v3309 = vmul.f32 1.0, %v3308
    %v3310 = vadd.f32 %v3289, %v512
    %v3311 = vadd.f32 %v3094, %v513
    %v3312 = vmul.f32 %v3307, %v3311
    %v3313 = vadd.f32 %v3310, %v3312
    %v3314 = vtanh.pop %v3313
    %v3315 = vsub.f32 1.0, %v3309
    %v3316 = vmul.f32 %v3315, %v3314
    %v3317 = vmul.f32 %v3309, %v3013
    %v3318 = vadd.f32 %v3316, %v3317
    %3319 = vst [vmem:[#allocation2 + $0x7] sm:$0x1] %v3318
    %3320 = vst [vmem:[#allocation18] sm:$0x1] %v3318
    %v3321 = vld [vmem:[#allocation2] sm:$0xff]
    %v3322 = vpack.c.bf16 %v3321, %v3321
    %v3323 = vld [vmem:[#allocation15] sm:$0xf]
    %v3324 = vld [vmem:[#allocation15 + $0x4] sm:$0xf]
    %v3325 = vld [vmem:[#allocation15 + $0x8] sm:$0xf]
    %v3326 = vld [vmem:[#allocation15 + $0xc] sm:$0xf]
    %v3327 = vld [vmem:[#allocation15 + $0x10] sm:$0xf]
    %v3328 = vld [vmem:[#allocation15 + $0x14] sm:$0xf]
    %v3329 = vld [vmem:[#allocation15 + $0x18] sm:$0xf]
    %v3330 = vld [vmem:[#allocation15 + $0x1c] sm:$0xf]
    %v3331 = vld [vmem:[#allocation15 + $0x20] sm:$0xf]
    %v3332 = vld [vmem:[#allocation15 + $0x24] sm:$0xf]
    %v3333 = vld [vmem:[#allocation15 + $0x28] sm:$0xf]
    %v3334 = vld [vmem:[#allocation15 + $0x2c] sm:$0xf]
    %v3335 = vld [vmem:[#allocation15 + $0x30] sm:$0xf]
    %v3336 = vld [vmem:[#allocation15 + $0x34] sm:$0xf]
    %v3337 = vld [vmem:[#allocation15 + $0x38] sm:$0xf]
    %v3338 = vld [vmem:[#allocation15 + $0x3c] sm:$0xf]
    %v3339 = vld [vmem:[%s13] sm:$0x1]
    %v3341 = vlaneseq
    %v3342 = vshrl.u32 %v3341, 7
    %v3343 = vsub.s32 0, %v3342
    %v3344 = vrot.slane %v3339, %v3343
    %v3362 = vunpack.c.l.b16 %v3323
    %v3363 = vunpack.c.l.b16 %v3324
    %v3364 = vunpack.c.l.b16 %v3325
    %v3365 = vunpack.c.l.b16 %v3326
    %v3366 = vunpack.c.l.b16 %v3327
    %v3367 = vunpack.c.l.b16 %v3328
    %v3368 = vunpack.c.l.b16 %v3329
    %v3369 = vunpack.c.l.b16 %v3330
    %v3370 = vunpack.c.l.b16 %v3331
    %v3371 = vunpack.c.l.b16 %v3332
    %v3372 = vunpack.c.l.b16 %v3333
    %v3373 = vunpack.c.l.b16 %v3334
    %v3374 = vunpack.c.l.b16 %v3335
    %v3375 = vunpack.c.l.b16 %v3336
    %v3376 = vunpack.c.l.b16 %v3337
    %v3377 = vunpack.c.l.b16 %v3338
    %v3378 = vpack.c.b16 %v3363, %v3362
    %v3379 = vpack.c.b16 %v3365, %v3364
    %v3380 = vpack.c.b16 %v3367, %v3366
    %v3381 = vpack.c.b16 %v3369, %v3368
    %v3382 = vpack.c.b16 %v3371, %v3370
    %v3383 = vpack.c.b16 %v3373, %v3372
    %v3384 = vpack.c.b16 %v3375, %v3374
    %v3385 = vpack.c.b16 %v3377, %v3376
    %3394 = vmatprep.subr.bf16.mxu0 0
    %3395 = vmatpush1.bf16.msra.mxu0 %v3378
    %3396 = vmatprep.subr.bf16.mxu0 0
    %3397 = vmatpush1.bf16.msra.mxu0 %v3379
    %3398 = vmatprep.subr.bf16.mxu0 0
    %3399 = vmatpush1.bf16.msra.mxu0 %v3380
    %3400 = vmatprep.subr.bf16.mxu0 0
    %3401 = vmatpush1.bf16.msra.mxu0 %v3381
    %3402 = vmatprep.subr.bf16.mxu0 0
    %3403 = vmatpush1.bf16.msra.mxu0 %v3382
    %3404 = vmatprep.subr.bf16.mxu0 0
    %3405 = vmatpush1.bf16.msra.mxu0 %v3383
    %3406 = vmatprep.subr.bf16.mxu0 0
    %3407 = vmatpush1.bf16.msra.mxu0 %v3384
    %3408 = vmatprep.subr.bf16.mxu0 0
    %3409 = vmatpush1.bf16.msra.mxu0 %v3385
    %3410 = vmatprep.subr.bf16.mxu0 0
    %3411 = vmatpush1.bf16.msra.mxu0 0
    %3412 = vmatprep.subr.bf16.mxu0 0
    %3413 = vmatpush1.bf16.msra.mxu0 0
    %3414 = vmatprep.subr.bf16.mxu0 0
    %3415 = vmatpush1.bf16.msra.mxu0 0
    %3416 = vmatprep.subr.bf16.mxu0 0
    %3417 = vmatpush1.bf16.msra.mxu0 0
    %3418 = vmatprep.subr.bf16.mxu0 0
    %3419 = vmatpush1.bf16.msra.mxu0 0
    %3420 = vmatprep.subr.bf16.mxu0 0
    %3421 = vmatpush1.bf16.msra.mxu0 0
    %3422 = vmatprep.subr.bf16.mxu0 0
    %3423 = vmatpush1.bf16.msra.mxu0 0
    %3424 = vmatprep.subr.bf16.mxu0 0
    %3425 = vmatpush1.bf16.msra.mxu0 0
    %3426 = vmatprep.mubr.bf16.mxu0 0
    %3427 = vmatmul.mubr.bf16.gmra.mrb[0].mxu0 %v3322
    %v3428 = vpop.f32.mrb[0].mxu0
    %v3429 = vadd.f32 %v3344, %v3428
    %v3430 = vpop.f32.mrb[0].mxu0
    %v3431 = vpop.f32.mrb[0].mxu0
    %v3432 = vpop.f32.mrb[0].mxu0
    %3433 = vdwg.mxu0
    %3434 = vmax.xlane.f32.xlu0 %v3429
    %v3435 = vpop.xlane.xlu0 %3434
    %v3436 = vsub.f32 %v3429, %v3435
    %v3437 = vmul.f32 %v3436, 1.442695
    %v3438 = vpow.pop %v3437
    %3439 = vadd.xlane.f32.xlu0 %v3438
    %v3440 = vpop.xlane.xlu0 %3439
    %v3441 = vlog2.pop %v3440
    %v3442 = vmul.f32 %v3441, 0.6931472
    %v3443 = vadd.f32 %v3442, %v3435
    %v3444 = vsub.f32 %v3429, %v3443
    %3445 = vst [vmem:[#allocation17] sm:$0xff] %v3444
    // Predicated region
    $region90: #{tpu_custom_call.1} parent=1 // pred_check
      _
    $region91: #{tpu_custom_call.1} parent=1 // pred_check_branch
      %3447 = sbr.rel (0) target = $region93
    $region92: #{tpu_custom_call.1} parent=1 // pred_region
      %s3449 = ssub.s32 128, 128
      %3450 = vsyncadd [#allocation5], %s3449
      %s3452 = sshll.u32 [#allocation17], 4
      %s3453 = int_to_ptr.vmem [resolvable:$true] %s3452
      %3455 = dma.vmem_to_hbm [thread:$0]  %s3453, 128, %s14, [#allocation5]
    $region93: #{tpu_custom_call.1} parent=1 // pred_fallthru
      _
    // Predicated region
    $region94: #{tpu_custom_call.1} parent=1 // pred_check
      _
    $region95: #{tpu_custom_call.1} parent=1 // pred_check_branch
      %3457 = sbr.rel (0) target = $region97
    $region96: #{tpu_custom_call.1} parent=1 // pred_region
      %s3459 = ssub.s32 16, 16
      %3460 = vsyncadd [#allocation19], %s3459
      %s3462 = sshll.u32 [#allocation18], 4
      %s3463 = int_to_ptr.vmem [resolvable:$true] %s3462
      %3465 = dma.vmem_to_hbm [thread:$0]  %s3463, 16, %s15, [#allocation19]
    $region97: #{tpu_custom_call.1} parent=1 // pred_fallthru
      _
    // Predicated region
    $region98: #{tpu_custom_call.1} parent=1 // pred_check
      _
    $region99: #{tpu_custom_call.1} parent=1 // pred_check_branch
      %3467 = sbr.rel (0) target = $region101
    $region100: #{tpu_custom_call.1} parent=1 // pred_region
      %s3469 = ssub.s32 128, 128
      %3470 = vsyncadd [#allocation19], %s3469
      %s3472 = sshll.u32 [#allocation20], 4
      %s3473 = int_to_ptr.vmem [resolvable:$true] %s3472
      %3475 = dma.vmem_to_hbm [thread:$0]  %s3473, 128, %s16, [#allocation19]
    $region101: #{tpu_custom_call.1} parent=1 // pred_fallthru
      _
    // Predicated region
    $region102: #{tpu_custom_call.1} parent=1 // pred_check
      _
    $region103: #{tpu_custom_call.1} parent=1 // pred_check_branch
      %3477 = sbr.rel (0) target = $region105
    $region104: #{tpu_custom_call.1} parent=1 // pred_region
      %3478 = dma.done [#allocation5], 128
    $region105: #{tpu_custom_call.1} parent=1 // pred_fallthru
      _
    // Predicated region
    $region106: #{tpu_custom_call.1} parent=1 // pred_check
      _
    $region107: #{tpu_custom_call.1} parent=1 // pred_check_branch
      %3480 = sbr.rel (0) target = $region109
    $region108: #{tpu_custom_call.1} parent=1 // pred_region
      %3481 = dma.done [#allocation19], 16
    $region109: #{tpu_custom_call.1} parent=1 // pred_fallthru
      _
    // Predicated region
    $region110: #{tpu_custom_call.1} parent=1 // pred_check
      _
    $region111: #{tpu_custom_call.1} parent=1 // pred_check_branch
      %3483 = sbr.rel (0) target = $region113
    $region112: #{tpu_custom_call.1} parent=1 // pred_region
      %3484 = dma.done [#allocation19], 128
    $region113: #{tpu_custom_call.1} parent=1 // pred_fallthru
      _
    %3485 = vsyncpa [#allocation4], 1
    %3486 = vsyncpa [#allocation7], 1
    %3487 = vsyncpa [#allocation10], 1
    %3488 = vsyncpa [#allocation13], 1
    %3489 = vsyncpa [#allocation16], 1
    %3490 = vsyncpa [#allocation5], 1
    %3491 = vsyncpa [#allocation19], 1

</llo_original>
